<compile_context>
chip_gen: v5e
topology: v5e:2x2
jax: 0.10.0
libtpu: 0.0.40
codegen_flags: <defaults>
</compile_context>

<pallas_src>
import functools

import jax
import jax.numpy as jnp
import numpy as np
from jax import lax
from jax.experimental import pallas as pl
from jax.experimental.pallas import tpu as pltpu

EPS_BN = 1e-5   # nn.BatchNorm2d eps
EPS_PC = 1e-8   # NVIDIA PartialConv2d eps


def _round_up(x, m):
    return (x + m - 1) // m * m


def _tile_bytes(shape, dtype):
    isz = jnp.dtype(dtype).itemsize
    if len(shape) == 0:
        return isz
    if len(shape) == 1:
        return _round_up(shape[0] * isz, 512)
    sub = _round_up(shape[-2], max(8, 32 // isz))
    lane = _round_up(shape[-1], 128)
    lead = 1
    for d in shape[:-2]:
        lead *= int(d)
    return lead * sub * lane * isz


def _vmem_limit_bytes(tiles):
    """tiles: iterable of (shape, dtype, n_copies). Generation-aware VMEM clamp."""
    total = sum(_tile_bytes(s, d) * c for s, d, c in tiles)
    try:
        cap = int(pltpu.get_tpu_info().vmem_capacity_bytes)
    except Exception:
        cap = 128 * 2 ** 20
    ceiling = (cap * 3) // 4                 # leave >=25% headroom for Mosaic scratch
    want = (total * 5) // 4 + (1 << 20)      # modest slack; buffer copies already counted
    return int(min(ceiling, max(32 * 2 ** 20, want)))


# ---------------------------------------------------------------------------
# Fused kernel: one image per grid step.
#   normalize*mask (f32 VPU)  ->  in-VMEM zero-padded, dw-pre-shifted planes
#   ->  per Q-chunk: assemble (k*k*Cin, CH) patch from 128-aligned slices,
#       one MXU dot, partial-conv renormalization (EUP reciprocal), ReLU,
#       lane-dense stores.
# Flat plane layout: row stride Wpad (multiple of 128); output position
# q = h*Wpad + w; tap (dh, dw) of q lives at flat index q + dh*Wpad in the
# dw-pre-shifted plane slot -> always a 128-aligned slice.
# ---------------------------------------------------------------------------
def _pconv_kernel(scale_ref, shift_ref, w_ref, b_ref, x_ref, m_ref,
                  out_ref, um_ref,
                  xpad_scr, mpad_scr, patch_scr,
                  *, k, H, W, p, Wpad, CH, n_chunks, slide_winsize, unroll):
    Cin = x_ref.shape[1]

    # ---- BatchNorm apply + partial-conv input masking (f32 elementwise) ----
    x = x_ref[0].astype(jnp.float32)                       # (Cin, H, W)
    m = m_ref[0].astype(jnp.float32)                       # (Cin, H, W), 0/1
    xm = ((x * scale_ref[...] + shift_ref[...]) * m).astype(xpad_scr.dtype)
    mrow = jnp.sum(m, axis=0, keepdims=True)               # (1, H, W) channel-summed mask

    # ---- build the k dw-pre-shifted, zero-padded flat planes in VMEM -------
    # Slot dw holds plane[i] == padded_plane[i + dw] for every index read by a
    # valid output pixel, so all tap reads below are 128-aligned plain loads.
    for dw in range(k):
        xpad_scr[dw] = jnp.zeros(xpad_scr.shape[1:], xpad_scr.dtype)
        mpad_scr[dw] = jnp.zeros(mpad_scr.shape[1:], mpad_scr.dtype)

    for dw in range(k):
        w_lo = max(0, dw - p)              # first data column that stays in-row
        col0 = p + w_lo - dw               # its destination column (>= 0)
        wcnt = W - w_lo
        for hh in range(H):
            off = (p + hh) * Wpad + col0
            xpad_scr[dw, :, off:off + wcnt] = xm[:, hh, w_lo:w_lo + wcnt]
            mpad_scr[dw, :, off:off + wcnt] = mrow[:, hh, w_lo:w_lo + wcnt]

    wmat = w_ref[...]                                      # (Cout, k*k*Cin)
    bvec = b_ref[...]                                      # (Cout, 1)

    # ---- main loop: 512-lane output chunks (bounded accumulator live range) -
    def chunk_body(ci, carry):
        c0 = pl.multiple_of(ci * CH, 128)
        msum = jnp.zeros((1, CH), jnp.float32)
        for dh in range(k):
            row_off = dh * Wpad                            # multiple of 128
            for dw in range(k):
                t = dh * k + dw
                start = pl.multiple_of(c0 + row_off, 128)
                patch_scr[t * Cin:(t + 1) * Cin, :] = xpad_scr[dw, :, pl.ds(start, CH)]
                msum = msum + mpad_scr[dw, :, pl.ds(start, CH)]

        # single fused-K MXU dot: (Cout, k*k*Cin) @ (k*k*Cin, CH) -> f32
        acc = jnp.dot(wmat, patch_scr[...], preferred_element_type=jnp.float32)

        # partial-conv renormalization (EUP reciprocal + one Newton step)
        denom = msum + EPS_PC
        inv = pl.reciprocal(denom, approx=True)
        inv = inv * (2.0 - denom * inv)
        um = jnp.clip(msum, 0.0, 1.0)
        ratio = (slide_winsize * inv) * um
        out = ((acc - bvec) * ratio + bvec) * um
        out = jnp.maximum(out, 0.0)                        # activation = F.relu

        out_ref[0, :, pl.ds(c0, CH)] = out.astype(out_ref.dtype)
        um_ref[0, :, pl.ds(c0, CH)] = um.astype(um_ref.dtype)
        return carry

    lax.fori_loop(0, n_chunks, chunk_body, 0, unroll=unroll)


# ---------------------------------------------------------------------------
# Wrapper
# ---------------------------------------------------------------------------
def partial_conv_layer(x, weight, bias, gamma, beta, kernel_size=3,
                       compute_dtype=jnp.bfloat16):
    """Forward of PartialConvLayer(f_in, f_out, kernel_size, dim=2, norm='batch').

    x: NCHW array with 2*f_in channels (first half data, second half mask),
       or an (inp, mask) tuple, mirroring the PyTorch forward.
    Returns (out, update_mask), both NCHW with f_out channels.
    """
    if isinstance(x, (list, tuple)):
        inp, mask = x
    else:
        mid = x.shape[1] // 2
        inp, mask = x[:, :mid], x[:, mid:]

    N, Cin, H, W = inp.shape
    Cout = weight.shape[0]
    k = kernel_size
    assert k % 2 == 1, "only odd kernel sizes (stride 1) are supported"
    p = (k - 1) // 2
    Hp, Wp = H + 2 * p, W + 2 * p
    Wpad = _round_up(Wp, 128)          # lane-aligned row stride
    Q = H * Wpad                       # flat output positions (incl. pad columns)
    P = Hp * Wpad                      # flat padded plane length
    KK = k * k * Cin

    # Q-chunk size: largest of {512, 256, 128} that divides Q (Q % 128 == 0 always).
    CH = 128
    for cand in (512, 256):
        if Q % cand == 0:
            CH = cand
            break
    n_chunks = Q // CH
    unroll_chunks = n_chunks <= 8

    # ---- BatchNorm2d batch statistics (training mode, biased variance) ------
    # Tiny two-pass XLA reduction on the raw, unpadded input (per review: no
    # padded-layout re-read, no single-TC serial grid, no E[x^2]-mean^2 cancel).
    inp_f32 = inp.astype(jnp.float32)
    mean = jnp.mean(inp_f32, axis=(0, 2, 3))
    var = jnp.var(inp_f32, axis=(0, 2, 3))
    scale = gamma.astype(jnp.float32) * lax.rsqrt(var + EPS_BN)
    shift = beta.astype(jnp.float32) - mean * scale
    scale3 = scale.reshape(Cin, 1, 1)
    shift3 = shift.reshape(Cin, 1, 1)

    # ---- streamed kernel inputs (bf16 by default to halve HBM traffic) ------
    x_c = inp.astype(compute_dtype)
    m_c = mask.astype(compute_dtype)           # 0/1 mask is exact in bf16

    # Fused-K weight matrix: w_fused[o, (dh*k+dw)*Cin + c] = weight[o, c, dh, dw]
    w_fused = jnp.transpose(weight, (0, 2, 3, 1)).reshape(Cout, KK).astype(compute_dtype)
    bias2 = bias.reshape(Cout, 1).astype(jnp.float32)

    vmem_b = _vmem_limit_bytes([
        ((1, Cin, H, W), compute_dtype, 2),    # x block (double-buffered)
        ((1, Cin, H, W), compute_dtype, 2),    # mask block
        ((Cin, 1, 1), jnp.float32, 4),         # scale + shift
        ((Cout, KK), compute_dtype, 2),        # weights
        ((Cout, 1), jnp.float32, 2),           # bias
        ((1, Cout, Q), jnp.float32, 2),        # out block
        ((1, 1, Q), jnp.float32, 2),           # update-mask block
        ((k, Cin, P), compute_dtype, 1),       # padded-plane scratch
        ((k, 1, P), jnp.float32, 1),           # padded mask-row scratch
        ((KK, CH), compute_dtype, 1),          # patch scratch
    ])

    kern = functools.partial(
        _pconv_kernel, k=k, H=H, W=W, p=p, Wpad=Wpad, CH=CH,
        n_chunks=n_chunks, slide_winsize=float(Cin * k * k),
        unroll=unroll_chunks)

    out_flat, um_flat = pl.pallas_call(
        kern,
        grid=(N,),
        in_specs=[pl.BlockSpec((Cin, 1, 1), lambda n: (0, 0, 0)),
                  pl.BlockSpec((Cin, 1, 1), lambda n: (0, 0, 0)),
                  pl.BlockSpec((Cout, KK), lambda n: (0, 0)),
                  pl.BlockSpec((Cout, 1), lambda n: (0, 0)),
                  pl.BlockSpec((1, Cin, H, W), lambda n: (n, 0, 0, 0)),
                  pl.BlockSpec((1, Cin, H, W), lambda n: (n, 0, 0, 0))],
        out_specs=(pl.BlockSpec((1, Cout, Q), lambda n: (n, 0, 0)),
                   pl.BlockSpec((1, 1, Q), lambda n: (n, 0, 0))),
        out_shape=(jax.ShapeDtypeStruct((N, Cout, Q), jnp.float32),
                   jax.ShapeDtypeStruct((N, 1, Q), jnp.float32)),
        scratch_shapes=[pltpu.VMEM((k, Cin, P), compute_dtype),
                        pltpu.VMEM((k, 1, P), jnp.float32),
                        pltpu.VMEM((KK, CH), compute_dtype)],
        compiler_params=pltpu.CompilerParams(
            dimension_semantics=("parallel",),
            vmem_limit_bytes=vmem_b),
    )(scale3, shift3, w_fused, bias2, x_c, m_c)

    # Channel-major output: (N, Cout, H*Wpad) -> drop pad columns -> NCHW.
    out = out_flat.reshape(N, Cout, H, Wpad)[:, :, :, :W]
    um = um_flat.reshape(N, 1, H, Wpad)[:, :, :, :W]
    um = jnp.broadcast_to(um, (N, Cout, H, W))
    return out, um


# ---------------------------------------------------------------------------
# Pure-JAX reference (independent of the kernel math) for validation
# ---------------------------------------------------------------------------
def _reference(x, weight, bias, gamma, beta, k):
    mid = x.shape[1] // 2
    inp, mask = x[:, :mid], x[:, mid:]
    N, Cin, H, W = inp.shape
    Cout = weight.shape[0]
    p = (k - 1) // 2

    mean = jnp.mean(inp, axis=(0, 2, 3), keepdims=True)
    var = jnp.mean((inp - mean) ** 2, axis=(0, 2, 3), keepdims=True)
    normed = (inp - mean) * lax.rsqrt(var + EPS_BN)
    normed = normed * gamma.reshape(1, Cin, 1, 1) + beta.reshape(1, Cin, 1, 1)
    masked = normed * mask

    dn = ("NCHW", "OIHW", "NCHW")
    raw = lax.conv_general_dilated(masked, weight, (1, 1), ((p, p), (p, p)),
                                   dimension_numbers=dn, precision=lax.Precision.HIGHEST)
    ones_w = jnp.ones_like(weight)
    um = lax.conv_general_dilated(mask, ones_w, (1, 1), ((p, p), (p, p)),
                                  dimension_numbers=dn, precision=lax.Precision.HIGHEST)
    slide = float(Cin * k * k)
    ratio = slide / (um + EPS_PC)
    umc = jnp.clip(um, 0.0, 1.0)
    ratio = ratio * umc
    b = bias.reshape(1, Cout, 1, 1)
    out = (raw - b) * ratio + b
    out = out * umc
    out = jnp.maximum(out, 0.0)
    return out, umc


if __name__ == "__main__":
    # PartialConvLayer(f_in=4, f_out=8, kernel_size=3, dim=2, norm='batch')
    N, f_in, f_out, H, W, ksz = 2, 4, 8, 16, 16, 3

    key = jax.random.PRNGKey(0)
    k_inp, k_mask, k_w, k_b, k_g, k_be = jax.random.split(key, 6)
    inp = jax.random.normal(k_inp, (N, f_in, H, W), jnp.float32)
    mask = (jax.random.uniform(k_mask, (N, f_in, H, W)) > 0.3).astype(jnp.float32)
    x = jnp.concatenate([inp, mask], axis=1)                       # (2, 8, 16, 16)

    weight = jax.random.normal(k_w, (f_out, f_in, ksz, ksz), jnp.float32) / np.sqrt(f_in * ksz * ksz)
    bias = jax.random.normal(k_b, (f_out,), jnp.float32) * 0.1
    gamma = 1.0 + 0.1 * jax.random.normal(k_g, (f_in,), jnp.float32)
    beta = 0.05 * jax.random.normal(k_be, (f_in,), jnp.float32)

    ref_out, ref_mask = _reference(x, weight, bias, gamma, beta, ksz)

    # Exactness check with f32 streamed inputs / matmul operands.
    fwd_f32 = jax.jit(functools.partial(partial_conv_layer, kernel_size=ksz,
                                        compute_dtype=jnp.float32))
    out32, mask32 = fwd_f32(x, weight, bias, gamma, beta)
    jax.block_until_ready((out32, mask32))
    np.testing.assert_allclose(np.asarray(out32), np.asarray(ref_out), rtol=1e-4, atol=1e-4)
    np.testing.assert_allclose(np.asarray(mask32), np.asarray(ref_mask), rtol=1e-5, atol=1e-5)

    # Fast path (default): bf16 streamed inputs + bf16 MXU operands, f32 accumulation.
    fwd = jax.jit(functools.partial(partial_conv_layer, kernel_size=ksz))
    out, out_mask = fwd(x, weight, bias, gamma, beta)
    jax.block_until_ready((out, out_mask))
    np.testing.assert_allclose(np.asarray(out), np.asarray(ref_out), rtol=5e-2, atol=5e-2)
    np.testing.assert_allclose(np.asarray(out_mask), np.asarray(ref_mask), rtol=1e-5, atol=1e-5)

    print("KERNEL_OK")
</pallas_src>

<mosaic_0001>
module attributes {stable_mosaic.version = 11 : i64} {
  func.func @_pconv_kernel(%arg0: i32, %arg1: memref<4x1x1xf32, #tpu.memory_space<vmem>>, %arg2: memref<4x1x1xf32, #tpu.memory_space<vmem>>, %arg3: memref<8x36xf32, #tpu.memory_space<vmem>>, %arg4: memref<8x1xf32, #tpu.memory_space<vmem>>, %arg5: memref<1x4x16x16xf32, #tpu.memory_space<vmem>>, %arg6: memref<1x4x16x16xf32, #tpu.memory_space<vmem>>, %arg7: memref<1x8x2048xf32, #tpu.memory_space<vmem>>, %arg8: memref<1x1x2048xf32, #tpu.memory_space<vmem>>, %arg9: memref<3x4x2304xf32, #tpu.memory_space<vmem>>, %arg10: memref<3x1x2304xf32, #tpu.memory_space<vmem>>, %arg11: memref<36x512xf32, #tpu.memory_space<vmem>>) attributes {dimension_semantics = [#tpu.dimension_semantics<parallel>], iteration_bounds = array<i64: 2>, scalar_prefetch = 0 : i64, scratch_operands = 3 : i64, tpu.core_type = #tpu.core_type<tc>, window_params = [{pipeline_mode = #tpu.pipeline_mode<synchronous>, transform_indices = @transform_0, window_bounds = array<i64: 4, 1, 1>}, {pipeline_mode = #tpu.pipeline_mode<synchronous>, transform_indices = @transform_1, window_bounds = array<i64: 4, 1, 1>}, {pipeline_mode = #tpu.pipeline_mode<synchronous>, transform_indices = @transform_2, window_bounds = array<i64: 8, 36>}, {pipeline_mode = #tpu.pipeline_mode<synchronous>, transform_indices = @transform_3, window_bounds = array<i64: 8, 1>}, {transform_indices = @transform_4, window_bounds = array<i64: 1, 4, 16, 16>}, {transform_indices = @transform_5, window_bounds = array<i64: 1, 4, 16, 16>}, {transform_indices = @transform_6, window_bounds = array<i64: 1, 8, 2048>}, {transform_indices = @transform_7, window_bounds = array<i64: 1, 1, 2048>}]} {
    %c0 = arith.constant 0 : index
    %c0_0 = arith.constant 0 : index
    %c0_1 = arith.constant 0 : index
    %c0_2 = arith.constant 0 : index
    %0 = vector.load %arg5[%c0, %c0_0, %c0_1, %c0_2] : memref<1x4x16x16xf32, #tpu.memory_space<vmem>>, vector<1x4x16x16xf32>
    %1 = vector.shape_cast %0 : vector<1x4x16x16xf32> to vector<4x16x16xf32>
    %c0_3 = arith.constant 0 : index
    %c0_4 = arith.constant 0 : index
    %c0_5 = arith.constant 0 : index
    %c0_6 = arith.constant 0 : index
    %2 = vector.load %arg6[%c0_3, %c0_4, %c0_5, %c0_6] : memref<1x4x16x16xf32, #tpu.memory_space<vmem>>, vector<1x4x16x16xf32>
    %3 = vector.shape_cast %2 : vector<1x4x16x16xf32> to vector<4x16x16xf32>
    %c0_7 = arith.constant 0 : index
    %c0_8 = arith.constant 0 : index
    %c0_9 = arith.constant 0 : index
    %4 = vector.load %arg1[%c0_7, %c0_8, %c0_9] : memref<4x1x1xf32, #tpu.memory_space<vmem>>, vector<4x1x1xf32>
    %5 = vector.broadcast %4 : vector<4x1x1xf32> to vector<4x16x16xf32>
    %6 = arith.mulf %1, %5 : vector<4x16x16xf32>
    %c0_10 = arith.constant 0 : index
    %c0_11 = arith.constant 0 : index
    %c0_12 = arith.constant 0 : index
    %7 = vector.load %arg2[%c0_10, %c0_11, %c0_12] : memref<4x1x1xf32, #tpu.memory_space<vmem>>, vector<4x1x1xf32>
    %8 = vector.broadcast %7 : vector<4x1x1xf32> to vector<4x16x16xf32>
    %9 = arith.addf %6, %8 : vector<4x16x16xf32>
    %10 = arith.mulf %9, %3 : vector<4x16x16xf32>
    %cst = arith.constant dense<0.000000e+00> : vector<16x16xf32>
    %11 = vector.multi_reduction <add>, %3, %cst [0] : vector<4x16x16xf32> to vector<16x16xf32>
    %12 = vector.shape_cast %11 : vector<16x16xf32> to vector<1x16x16xf32>
    %cst_13 = arith.constant 0.000000e+00 : f32
    %13 = vector.broadcast %cst_13 : f32 to vector<4x2304xf32>
    %c0_14 = arith.constant 0 : index
    %c0_15 = arith.constant 0 : index
    %c0_16 = arith.constant 0 : index
    %14 = vector.load %arg9[%c0_14, %c0_15, %c0_16] : memref<3x4x2304xf32, #tpu.memory_space<vmem>>, vector<1x4x2304xf32>
    %15 = vector.shape_cast %14 : vector<1x4x2304xf32> to vector<4x2304xf32>
    %16 = vector.shape_cast %13 : vector<4x2304xf32> to vector<1x4x2304xf32>
    tpu.vector_store %arg9[%c0_14, %c0_15, %c0_16], %16 {strides = array<i32>} : memref<3x4x2304xf32, #tpu.memory_space<vmem>>, vector<1x4x2304xf32>,
    %cst_17 = arith.constant 0.000000e+00 : f32
    %17 = vector.broadcast %cst_17 : f32 to vector<1x2304xf32>
    %c0_18 = arith.constant 0 : index
    %c0_19 = arith.constant 0 : index
    %c0_20 = arith.constant 0 : index
    %18 = vector.load %arg10[%c0_18, %c0_19, %c0_20] : memref<3x1x2304xf32, #tpu.memory_space<vmem>>, vector<1x1x2304xf32>
    %19 = vector.shape_cast %18 : vector<1x1x2304xf32> to vector<1x2304xf32>
    %20 = vector.shape_cast %17 : vector<1x2304xf32> to vector<1x1x2304xf32>
    tpu.vector_store %arg10[%c0_18, %c0_19, %c0_20], %20 {strides = array<i32>} : memref<3x1x2304xf32, #tpu.memory_space<vmem>>, vector<1x1x2304xf32>,
    %cst_21 = arith.constant 0.000000e+00 : f32
    %21 = vector.broadcast %cst_21 : f32 to vector<4x2304xf32>
    %c1 = arith.constant 1 : index
    %c0_22 = arith.constant 0 : index
    %c0_23 = arith.constant 0 : index
    %22 = vector.load %arg9[%c1, %c0_22, %c0_23] : memref<3x4x2304xf32, #tpu.memory_space<vmem>>, vector<1x4x2304xf32>
    %23 = vector.shape_cast %22 : vector<1x4x2304xf32> to vector<4x2304xf32>
    %24 = vector.shape_cast %21 : vector<4x2304xf32> to vector<1x4x2304xf32>
    tpu.vector_store %arg9[%c1, %c0_22, %c0_23], %24 {strides = array<i32>} : memref<3x4x2304xf32, #tpu.memory_space<vmem>>, vector<1x4x2304xf32>,
    %cst_24 = arith.constant 0.000000e+00 : f32
    %25 = vector.broadcast %cst_24 : f32 to vector<1x2304xf32>
    %c1_25 = arith.constant 1 : index
    %c0_26 = arith.constant 0 : index
    %c0_27 = arith.constant 0 : index
    %26 = vector.load %arg10[%c1_25, %c0_26, %c0_27] : memref<3x1x2304xf32, #tpu.memory_space<vmem>>, vector<1x1x2304xf32>
    %27 = vector.shape_cast %26 : vector<1x1x2304xf32> to vector<1x2304xf32>
    %28 = vector.shape_cast %25 : vector<1x2304xf32> to vector<1x1x2304xf32>
    tpu.vector_store %arg10[%c1_25, %c0_26, %c0_27], %28 {strides = array<i32>} : memref<3x1x2304xf32, #tpu.memory_space<vmem>>, vector<1x1x2304xf32>,
    %cst_28 = arith.constant 0.000000e+00 : f32
    %29 = vector.broadcast %cst_28 : f32 to vector<4x2304xf32>
    %c2 = arith.constant 2 : index
    %c0_29 = arith.constant 0 : index
    %c0_30 = arith.constant 0 : index
    %30 = vector.load %arg9[%c2, %c0_29, %c0_30] : memref<3x4x2304xf32, #tpu.memory_space<vmem>>, vector<1x4x2304xf32>
    %31 = vector.shape_cast %30 : vector<1x4x2304xf32> to vector<4x2304xf32>
    %32 = vector.shape_cast %29 : vector<4x2304xf32> to vector<1x4x2304xf32>
    tpu.vector_store %arg9[%c2, %c0_29, %c0_30], %32 {strides = array<i32>} : memref<3x4x2304xf32, #tpu.memory_space<vmem>>, vector<1x4x2304xf32>,
    %cst_31 = arith.constant 0.000000e+00 : f32
    %33 = vector.broadcast %cst_31 : f32 to vector<1x2304xf32>
    %c2_32 = arith.constant 2 : index
    %c0_33 = arith.constant 0 : index
    %c0_34 = arith.constant 0 : index
    %34 = vector.load %arg10[%c2_32, %c0_33, %c0_34] : memref<3x1x2304xf32, #tpu.memory_space<vmem>>, vector<1x1x2304xf32>
    %35 = vector.shape_cast %34 : vector<1x1x2304xf32> to vector<1x2304xf32>
    %36 = vector.shape_cast %33 : vector<1x2304xf32> to vector<1x1x2304xf32>
    tpu.vector_store %arg10[%c2_32, %c0_33, %c0_34], %36 {strides = array<i32>} : memref<3x1x2304xf32, #tpu.memory_space<vmem>>, vector<1x1x2304xf32>,
    %37 = vector.extract_strided_slice %10 {offsets = [0, 0, 0], sizes = [4, 1, 16], strides = [1, 1, 1]} : vector<4x16x16xf32> to vector<4x1x16xf32>
    %38 = vector.shape_cast %37 : vector<4x1x16xf32> to vector<4x16xf32>
    %c0_35 = arith.constant 0 : index
    %c0_36 = arith.constant 0 : index
    %c129 = arith.constant 129 : index
    %39 = vector.load %arg9[%c0_35, %c0_36, %c129] : memref<3x4x2304xf32, #tpu.memory_space<vmem>>, vector<1x4x16xf32>
    %40 = vector.shape_cast %39 : vector<1x4x16xf32> to vector<4x16xf32>
    %41 = vector.shape_cast %38 : vector<4x16xf32> to vector<1x4x16xf32>
    tpu.vector_store %arg9[%c0_35, %c0_36, %c129], %41 {strides = array<i32>} : memref<3x4x2304xf32, #tpu.memory_space<vmem>>, vector<1x4x16xf32>,
    %42 = vector.extract_strided_slice %12 {offsets = [0, 0, 0], sizes = [1, 1, 16], strides = [1, 1, 1]} : vector<1x16x16xf32> to vector<1x1x16xf32>
    %43 = vector.shape_cast %42 : vector<1x1x16xf32> to vector<1x16xf32>
    %c0_37 = arith.constant 0 : index
    %c0_38 = arith.constant 0 : index
    %c129_39 = arith.constant 129 : index
    %44 = vector.load %arg10[%c0_37, %c0_38, %c129_39] : memref<3x1x2304xf32, #tpu.memory_space<vmem>>, vector<1x1x16xf32>
    %45 = vector.shape_cast %44 : vector<1x1x16xf32> to vector<1x16xf32>
    %46 = vector.shape_cast %43 : vector<1x16xf32> to vector<1x1x16xf32>
    tpu.vector_store %arg10[%c0_37, %c0_38, %c129_39], %46 {strides = array<i32>} : memref<3x1x2304xf32, #tpu.memory_space<vmem>>, vector<1x1x16xf32>,
    %47 = vector.extract_strided_slice %10 {offsets = [0, 1, 0], sizes = [4, 1, 16], strides = [1, 1, 1]} : vector<4x16x16xf32> to vector<4x1x16xf32>
    %48 = vector.shape_cast %47 : vector<4x1x16xf32> to vector<4x16xf32>
    %c0_40 = arith.constant 0 : index
    %c0_41 = arith.constant 0 : index
    %c257 = arith.constant 257 : index
    %49 = vector.load %arg9[%c0_40, %c0_41, %c257] : memref<3x4x2304xf32, #tpu.memory_space<vmem>>, vector<1x4x16xf32>
    %50 = vector.shape_cast %49 : vector<1x4x16xf32> to vector<4x16xf32>
    %51 = vector.shape_cast %48 : vector<4x16xf32> to vector<1x4x16xf32>
    tpu.vector_store %arg9[%c0_40, %c0_41, %c257], %51 {strides = array<i32>} : memref<3x4x2304xf32, #tpu.memory_space<vmem>>, vector<1x4x16xf32>,
    %52 = vector.extract_strided_slice %12 {offsets = [0, 1, 0], sizes = [1, 1, 16], strides = [1, 1, 1]} : vector<1x16x16xf32> to vector<1x1x16xf32>
    %53 = vector.shape_cast %52 : vector<1x1x16xf32> to vector<1x16xf32>
    %c0_42 = arith.constant 0 : index
    %c0_43 = arith.constant 0 : index
    %c257_44 = arith.constant 257 : index
    %54 = vector.load %arg10[%c0_42, %c0_43, %c257_44] : memref<3x1x2304xf32, #tpu.memory_space<vmem>>, vector<1x1x16xf32>
    %55 = vector.shape_cast %54 : vector<1x1x16xf32> to vector<1x16xf32>
    %56 = vector.shape_cast %53 : vector<1x16xf32> to vector<1x1x16xf32>
    tpu.vector_store %arg10[%c0_42, %c0_43, %c257_44], %56 {strides = array<i32>} : memref<3x1x2304xf32, #tpu.memory_space<vmem>>, vector<1x1x16xf32>,
    %57 = vector.extract_strided_slice %10 {offsets = [0, 2, 0], sizes = [4, 1, 16], strides = [1, 1, 1]} : vector<4x16x16xf32> to vector<4x1x16xf32>
    %58 = vector.shape_cast %57 : vector<4x1x16xf32> to vector<4x16xf32>
    %c0_45 = arith.constant 0 : index
    %c0_46 = arith.constant 0 : index
    %c385 = arith.constant 385 : index
    %59 = vector.load %arg9[%c0_45, %c0_46, %c385] : memref<3x4x2304xf32, #tpu.memory_space<vmem>>, vector<1x4x16xf32>
    %60 = vector.shape_cast %59 : vector<1x4x16xf32> to vector<4x16xf32>
    %61 = vector.shape_cast %58 : vector<4x16xf32> to vector<1x4x16xf32>
    tpu.vector_store %arg9[%c0_45, %c0_46, %c385], %61 {strides = array<i32>} : memref<3x4x2304xf32, #tpu.memory_space<vmem>>, vector<1x4x16xf32>,
    %62 = vector.extract_strided_slice %12 {offsets = [0, 2, 0], sizes = [1, 1, 16], strides = [1, 1, 1]} : vector<1x16x16xf32> to vector<1x1x16xf32>
    %63 = vector.shape_cast %62 : vector<1x1x16xf32> to vector<1x16xf32>
    %c0_47 = arith.constant 0 : index
    %c0_48 = arith.constant 0 : index
    %c385_49 = arith.constant 385 : index
    %64 = vector.load %arg10[%c0_47, %c0_48, %c385_49] : memref<3x1x2304xf32, #tpu.memory_space<vmem>>, vector<1x1x16xf32>
    %65 = vector.shape_cast %64 : vector<1x1x16xf32> to vector<1x16xf32>
    %66 = vector.shape_cast %63 : vector<1x16xf32> to vector<1x1x16xf32>
    tpu.vector_store %arg10[%c0_47, %c0_48, %c385_49], %66 {strides = array<i32>} : memref<3x1x2304xf32, #tpu.memory_space<vmem>>, vector<1x1x16xf32>,
    %67 = vector.extract_strided_slice %10 {offsets = [0, 3, 0], sizes = [4, 1, 16], strides = [1, 1, 1]} : vector<4x16x16xf32> to vector<4x1x16xf32>
    %68 = vector.shape_cast %67 : vector<4x1x16xf32> to vector<4x16xf32>
    %c0_50 = arith.constant 0 : index
    %c0_51 = arith.constant 0 : index
    %c513 = arith.constant 513 : index
    %69 = vector.load %arg9[%c0_50, %c0_51, %c513] : memref<3x4x2304xf32, #tpu.memory_space<vmem>>, vector<1x4x16xf32>
    %70 = vector.shape_cast %69 : vector<1x4x16xf32> to vector<4x16xf32>
    %71 = vector.shape_cast %68 : vector<4x16xf32> to vector<1x4x16xf32>
    tpu.vector_store %arg9[%c0_50, %c0_51, %c513], %71 {strides = array<i32>} : memref<3x4x2304xf32, #tpu.memory_space<vmem>>, vector<1x4x16xf32>,
    %72 = vector.extract_strided_slice %12 {offsets = [0, 3, 0], sizes = [1, 1, 16], strides = [1, 1, 1]} : vector<1x16x16xf32> to vector<1x1x16xf32>
    %73 = vector.shape_cast %72 : vector<1x1x16xf32> to vector<1x16xf32>
    %c0_52 = arith.constant 0 : index
    %c0_53 = arith.constant 0 : index
    %c513_54 = arith.constant 513 : index
    %74 = vector.load %arg10[%c0_52, %c0_53, %c513_54] : memref<3x1x2304xf32, #tpu.memory_space<vmem>>, vector<1x1x16xf32>
    %75 = vector.shape_cast %74 : vector<1x1x16xf32> to vector<1x16xf32>
    %76 = vector.shape_cast %73 : vector<1x16xf32> to vector<1x1x16xf32>
    tpu.vector_store %arg10[%c0_52, %c0_53, %c513_54], %76 {strides = array<i32>} : memref<3x1x2304xf32, #tpu.memory_space<vmem>>, vector<1x1x16xf32>,
    %77 = vector.extract_strided_slice %10 {offsets = [0, 4, 0], sizes = [4, 1, 16], strides = [1, 1, 1]} : vector<4x16x16xf32> to vector<4x1x16xf32>
    %78 = vector.shape_cast %77 : vector<4x1x16xf32> to vector<4x16xf32>
    %c0_55 = arith.constant 0 : index
    %c0_56 = arith.constant 0 : index
    %c641 = arith.constant 641 : index
    %79 = vector.load %arg9[%c0_55, %c0_56, %c641] : memref<3x4x2304xf32, #tpu.memory_space<vmem>>, vector<1x4x16xf32>
    %80 = vector.shape_cast %79 : vector<1x4x16xf32> to vector<4x16xf32>
    %81 = vector.shape_cast %78 : vector<4x16xf32> to vector<1x4x16xf32>
    tpu.vector_store %arg9[%c0_55, %c0_56, %c641], %81 {strides = array<i32>} : memref<3x4x2304xf32, #tpu.memory_space<vmem>>, vector<1x4x16xf32>,
    %82 = vector.extract_strided_slice %12 {offsets = [0, 4, 0], sizes = [1, 1, 16], strides = [1, 1, 1]} : vector<1x16x16xf32> to vector<1x1x16xf32>
    %83 = vector.shape_cast %82 : vector<1x1x16xf32> to vector<1x16xf32>
    %c0_57 = arith.constant 0 : index
    %c0_58 = arith.constant 0 : index
    %c641_59 = arith.constant 641 : index
    %84 = vector.load %arg10[%c0_57, %c0_58, %c641_59] : memref<3x1x2304xf32, #tpu.memory_space<vmem>>, vector<1x1x16xf32>
    %85 = vector.shape_cast %84 : vector<1x1x16xf32> to vector<1x16xf32>
    %86 = vector.shape_cast %83 : vector<1x16xf32> to vector<1x1x16xf32>
    tpu.vector_store %arg10[%c0_57, %c0_58, %c641_59], %86 {strides = array<i32>} : memref<3x1x2304xf32, #tpu.memory_space<vmem>>, vector<1x1x16xf32>,
    %87 = vector.extract_strided_slice %10 {offsets = [0, 5, 0], sizes = [4, 1, 16], strides = [1, 1, 1]} : vector<4x16x16xf32> to vector<4x1x16xf32>
    %88 = vector.shape_cast %87 : vector<4x1x16xf32> to vector<4x16xf32>
    %c0_60 = arith.constant 0 : index
    %c0_61 = arith.constant 0 : index
    %c769 = arith.constant 769 : index
    %89 = vector.load %arg9[%c0_60, %c0_61, %c769] : memref<3x4x2304xf32, #tpu.memory_space<vmem>>, vector<1x4x16xf32>
    %90 = vector.shape_cast %89 : vector<1x4x16xf32> to vector<4x16xf32>
    %91 = vector.shape_cast %88 : vector<4x16xf32> to vector<1x4x16xf32>
    tpu.vector_store %arg9[%c0_60, %c0_61, %c769], %91 {strides = array<i32>} : memref<3x4x2304xf32, #tpu.memory_space<vmem>>, vector<1x4x16xf32>,
    %92 = vector.extract_strided_slice %12 {offsets = [0, 5, 0], sizes = [1, 1, 16], strides = [1, 1, 1]} : vector<1x16x16xf32> to vector<1x1x16xf32>
    %93 = vector.shape_cast %92 : vector<1x1x16xf32> to vector<1x16xf32>
    %c0_62 = arith.constant 0 : index
    %c0_63 = arith.constant 0 : index
    %c769_64 = arith.constant 769 : index
    %94 = vector.load %arg10[%c0_62, %c0_63, %c769_64] : memref<3x1x2304xf32, #tpu.memory_space<vmem>>, vector<1x1x16xf32>
    %95 = vector.shape_cast %94 : vector<1x1x16xf32> to vector<1x16xf32>
    %96 = vector.shape_cast %93 : vector<1x16xf32> to vector<1x1x16xf32>
    tpu.vector_store %arg10[%c0_62, %c0_63, %c769_64], %96 {strides = array<i32>} : memref<3x1x2304xf32, #tpu.memory_space<vmem>>, vector<1x1x16xf32>,
    %97 = vector.extract_strided_slice %10 {offsets = [0, 6, 0], sizes = [4, 1, 16], strides = [1, 1, 1]} : vector<4x16x16xf32> to vector<4x1x16xf32>
    %98 = vector.shape_cast %97 : vector<4x1x16xf32> to vector<4x16xf32>
    %c0_65 = arith.constant 0 : index
    %c0_66 = arith.constant 0 : index
    %c897 = arith.constant 897 : index
    %99 = vector.load %arg9[%c0_65, %c0_66, %c897] : memref<3x4x2304xf32, #tpu.memory_space<vmem>>, vector<1x4x16xf32>
    %100 = vector.shape_cast %99 : vector<1x4x16xf32> to vector<4x16xf32>
    %101 = vector.shape_cast %98 : vector<4x16xf32> to vector<1x4x16xf32>
    tpu.vector_store %arg9[%c0_65, %c0_66, %c897], %101 {strides = array<i32>} : memref<3x4x2304xf32, #tpu.memory_space<vmem>>, vector<1x4x16xf32>,
    %102 = vector.extract_strided_slice %12 {offsets = [0, 6, 0], sizes = [1, 1, 16], strides = [1, 1, 1]} : vector<1x16x16xf32> to vector<1x1x16xf32>
    %103 = vector.shape_cast %102 : vector<1x1x16xf32> to vector<1x16xf32>
    %c0_67 = arith.constant 0 : index
    %c0_68 = arith.constant 0 : index
    %c897_69 = arith.constant 897 : index
    %104 = vector.load %arg10[%c0_67, %c0_68, %c897_69] : memref<3x1x2304xf32, #tpu.memory_space<vmem>>, vector<1x1x16xf32>
    %105 = vector.shape_cast %104 : vector<1x1x16xf32> to vector<1x16xf32>
    %106 = vector.shape_cast %103 : vector<1x16xf32> to vector<1x1x16xf32>
    tpu.vector_store %arg10[%c0_67, %c0_68, %c897_69], %106 {strides = array<i32>} : memref<3x1x2304xf32, #tpu.memory_space<vmem>>, vector<1x1x16xf32>,
    %107 = vector.extract_strided_slice %10 {offsets = [0, 7, 0], sizes = [4, 1, 16], strides = [1, 1, 1]} : vector<4x16x16xf32> to vector<4x1x16xf32>
    %108 = vector.shape_cast %107 : vector<4x1x16xf32> to vector<4x16xf32>
    %c0_70 = arith.constant 0 : index
    %c0_71 = arith.constant 0 : index
    %c1025 = arith.constant 1025 : index
    %109 = vector.load %arg9[%c0_70, %c0_71, %c1025] : memref<3x4x2304xf32, #tpu.memory_space<vmem>>, vector<1x4x16xf32>
    %110 = vector.shape_cast %109 : vector<1x4x16xf32> to vector<4x16xf32>
    %111 = vector.shape_cast %108 : vector<4x16xf32> to vector<1x4x16xf32>
    tpu.vector_store %arg9[%c0_70, %c0_71, %c1025], %111 {strides = array<i32>} : memref<3x4x2304xf32, #tpu.memory_space<vmem>>, vector<1x4x16xf32>,
    %112 = vector.extract_strided_slice %12 {offsets = [0, 7, 0], sizes = [1, 1, 16], strides = [1, 1, 1]} : vector<1x16x16xf32> to vector<1x1x16xf32>
    %113 = vector.shape_cast %112 : vector<1x1x16xf32> to vector<1x16xf32>
    %c0_72 = arith.constant 0 : index
    %c0_73 = arith.constant 0 : index
    %c1025_74 = arith.constant 1025 : index
    %114 = vector.load %arg10[%c0_72, %c0_73, %c1025_74] : memref<3x1x2304xf32, #tpu.memory_space<vmem>>, vector<1x1x16xf32>
    %115 = vector.shape_cast %114 : vector<1x1x16xf32> to vector<1x16xf32>
    %116 = vector.shape_cast %113 : vector<1x16xf32> to vector<1x1x16xf32>
    tpu.vector_store %arg10[%c0_72, %c0_73, %c1025_74], %116 {strides = array<i32>} : memref<3x1x2304xf32, #tpu.memory_space<vmem>>, vector<1x1x16xf32>,
    %117 = vector.extract_strided_slice %10 {offsets = [0, 8, 0], sizes = [4, 1, 16], strides = [1, 1, 1]} : vector<4x16x16xf32> to vector<4x1x16xf32>
    %118 = vector.shape_cast %117 : vector<4x1x16xf32> to vector<4x16xf32>
    %c0_75 = arith.constant 0 : index
    %c0_76 = arith.constant 0 : index
    %c1153 = arith.constant 1153 : index
    %119 = vector.load %arg9[%c0_75, %c0_76, %c1153] : memref<3x4x2304xf32, #tpu.memory_space<vmem>>, vector<1x4x16xf32>
    %120 = vector.shape_cast %119 : vector<1x4x16xf32> to vector<4x16xf32>
    %121 = vector.shape_cast %118 : vector<4x16xf32> to vector<1x4x16xf32>
    tpu.vector_store %arg9[%c0_75, %c0_76, %c1153], %121 {strides = array<i32>} : memref<3x4x2304xf32, #tpu.memory_space<vmem>>, vector<1x4x16xf32>,
    %122 = vector.extract_strided_slice %12 {offsets = [0, 8, 0], sizes = [1, 1, 16], strides = [1, 1, 1]} : vector<1x16x16xf32> to vector<1x1x16xf32>
    %123 = vector.shape_cast %122 : vector<1x1x16xf32> to vector<1x16xf32>
    %c0_77 = arith.constant 0 : index
    %c0_78 = arith.constant 0 : index
    %c1153_79 = arith.constant 1153 : index
    %124 = vector.load %arg10[%c0_77, %c0_78, %c1153_79] : memref<3x1x2304xf32, #tpu.memory_space<vmem>>, vector<1x1x16xf32>
    %125 = vector.shape_cast %124 : vector<1x1x16xf32> to vector<1x16xf32>
    %126 = vector.shape_cast %123 : vector<1x16xf32> to vector<1x1x16xf32>
    tpu.vector_store %arg10[%c0_77, %c0_78, %c1153_79], %126 {strides = array<i32>} : memref<3x1x2304xf32, #tpu.memory_space<vmem>>, vector<1x1x16xf32>,
    %127 = vector.extract_strided_slice %10 {offsets = [0, 9, 0], sizes = [4, 1, 16], strides = [1, 1, 1]} : vector<4x16x16xf32> to vector<4x1x16xf32>
    %128 = vector.shape_cast %127 : vector<4x1x16xf32> to vector<4x16xf32>
    %c0_80 = arith.constant 0 : index
    %c0_81 = arith.constant 0 : index
    %c1281 = arith.constant 1281 : index
    %129 = vector.load %arg9[%c0_80, %c0_81, %c1281] : memref<3x4x2304xf32, #tpu.memory_space<vmem>>, vector<1x4x16xf32>
    %130 = vector.shape_cast %129 : vector<1x4x16xf32> to vector<4x16xf32>
    %131 = vector.shape_cast %128 : vector<4x16xf32> to vector<1x4x16xf32>
    tpu.vector_store %arg9[%c0_80, %c0_81, %c1281], %131 {strides = array<i32>} : memref<3x4x2304xf32, #tpu.memory_space<vmem>>, vector<1x4x16xf32>,
    %132 = vector.extract_strided_slice %12 {offsets = [0, 9, 0], sizes = [1, 1, 16], strides = [1, 1, 1]} : vector<1x16x16xf32> to vector<1x1x16xf32>
    %133 = vector.shape_cast %132 : vector<1x1x16xf32> to vector<1x16xf32>
    %c0_82 = arith.constant 0 : index
    %c0_83 = arith.constant 0 : index
    %c1281_84 = arith.constant 1281 : index
    %134 = vector.load %arg10[%c0_82, %c0_83, %c1281_84] : memref<3x1x2304xf32, #tpu.memory_space<vmem>>, vector<1x1x16xf32>
    %135 = vector.shape_cast %134 : vector<1x1x16xf32> to vector<1x16xf32>
    %136 = vector.shape_cast %133 : vector<1x16xf32> to vector<1x1x16xf32>
    tpu.vector_store %arg10[%c0_82, %c0_83, %c1281_84], %136 {strides = array<i32>} : memref<3x1x2304xf32, #tpu.memory_space<vmem>>, vector<1x1x16xf32>,
    %137 = vector.extract_strided_slice %10 {offsets = [0, 10, 0], sizes = [4, 1, 16], strides = [1, 1, 1]} : vector<4x16x16xf32> to vector<4x1x16xf32>
    %138 = vector.shape_cast %137 : vector<4x1x16xf32> to vector<4x16xf32>
    %c0_85 = arith.constant 0 : index
    %c0_86 = arith.constant 0 : index
    %c1409 = arith.constant 1409 : index
    %139 = vector.load %arg9[%c0_85, %c0_86, %c1409] : memref<3x4x2304xf32, #tpu.memory_space<vmem>>, vector<1x4x16xf32>
    %140 = vector.shape_cast %139 : vector<1x4x16xf32> to vector<4x16xf32>
    %141 = vector.shape_cast %138 : vector<4x16xf32> to vector<1x4x16xf32>
    tpu.vector_store %arg9[%c0_85, %c0_86, %c1409], %141 {strides = array<i32>} : memref<3x4x2304xf32, #tpu.memory_space<vmem>>, vector<1x4x16xf32>,
    %142 = vector.extract_strided_slice %12 {offsets = [0, 10, 0], sizes = [1, 1, 16], strides = [1, 1, 1]} : vector<1x16x16xf32> to vector<1x1x16xf32>
    %143 = vector.shape_cast %142 : vector<1x1x16xf32> to vector<1x16xf32>
    %c0_87 = arith.constant 0 : index
    %c0_88 = arith.constant 0 : index
    %c1409_89 = arith.constant 1409 : index
    %144 = vector.load %arg10[%c0_87, %c0_88, %c1409_89] : memref<3x1x2304xf32, #tpu.memory_space<vmem>>, vector<1x1x16xf32>
    %145 = vector.shape_cast %144 : vector<1x1x16xf32> to vector<1x16xf32>
    %146 = vector.shape_cast %143 : vector<1x16xf32> to vector<1x1x16xf32>
    tpu.vector_store %arg10[%c0_87, %c0_88, %c1409_89], %146 {strides = array<i32>} : memref<3x1x2304xf32, #tpu.memory_space<vmem>>, vector<1x1x16xf32>,
    %147 = vector.extract_strided_slice %10 {offsets = [0, 11, 0], sizes = [4, 1, 16], strides = [1, 1, 1]} : vector<4x16x16xf32> to vector<4x1x16xf32>
    %148 = vector.shape_cast %147 : vector<4x1x16xf32> to vector<4x16xf32>
    %c0_90 = arith.constant 0 : index
    %c0_91 = arith.constant 0 : index
    %c1537 = arith.constant 1537 : index
    %149 = vector.load %arg9[%c0_90, %c0_91, %c1537] : memref<3x4x2304xf32, #tpu.memory_space<vmem>>, vector<1x4x16xf32>
    %150 = vector.shape_cast %149 : vector<1x4x16xf32> to vector<4x16xf32>
    %151 = vector.shape_cast %148 : vector<4x16xf32> to vector<1x4x16xf32>
    tpu.vector_store %arg9[%c0_90, %c0_91, %c1537], %151 {strides = array<i32>} : memref<3x4x2304xf32, #tpu.memory_space<vmem>>, vector<1x4x16xf32>,
    %152 = vector.extract_strided_slice %12 {offsets = [0, 11, 0], sizes = [1, 1, 16], strides = [1, 1, 1]} : vector<1x16x16xf32> to vector<1x1x16xf32>
    %153 = vector.shape_cast %152 : vector<1x1x16xf32> to vector<1x16xf32>
    %c0_92 = arith.constant 0 : index
    %c0_93 = arith.constant 0 : index
    %c1537_94 = arith.constant 1537 : index
    %154 = vector.load %arg10[%c0_92, %c0_93, %c1537_94] : memref<3x1x2304xf32, #tpu.memory_space<vmem>>, vector<1x1x16xf32>
    %155 = vector.shape_cast %154 : vector<1x1x16xf32> to vector<1x16xf32>
    %156 = vector.shape_cast %153 : vector<1x16xf32> to vector<1x1x16xf32>
    tpu.vector_store %arg10[%c0_92, %c0_93, %c1537_94], %156 {strides = array<i32>} : memref<3x1x2304xf32, #tpu.memory_space<vmem>>, vector<1x1x16xf32>,
    %157 = vector.extract_strided_slice %10 {offsets = [0, 12, 0], sizes = [4, 1, 16], strides = [1, 1, 1]} : vector<4x16x16xf32> to vector<4x1x16xf32>
    %158 = vector.shape_cast %157 : vector<4x1x16xf32> to vector<4x16xf32>
    %c0_95 = arith.constant 0 : index
    %c0_96 = arith.constant 0 : index
    %c1665 = arith.constant 1665 : index
    %159 = vector.load %arg9[%c0_95, %c0_96, %c1665] : memref<3x4x2304xf32, #tpu.memory_space<vmem>>, vector<1x4x16xf32>
    %160 = vector.shape_cast %159 : vector<1x4x16xf32> to vector<4x16xf32>
    %161 = vector.shape_cast %158 : vector<4x16xf32> to vector<1x4x16xf32>
    tpu.vector_store %arg9[%c0_95, %c0_96, %c1665], %161 {strides = array<i32>} : memref<3x4x2304xf32, #tpu.memory_space<vmem>>, vector<1x4x16xf32>,
    %162 = vector.extract_strided_slice %12 {offsets = [0, 12, 0], sizes = [1, 1, 16], strides = [1, 1, 1]} : vector<1x16x16xf32> to vector<1x1x16xf32>
    %163 = vector.shape_cast %162 : vector<1x1x16xf32> to vector<1x16xf32>
    %c0_97 = arith.constant 0 : index
    %c0_98 = arith.constant 0 : index
    %c1665_99 = arith.constant 1665 : index
    %164 = vector.load %arg10[%c0_97, %c0_98, %c1665_99] : memref<3x1x2304xf32, #tpu.memory_space<vmem>>, vector<1x1x16xf32>
    %165 = vector.shape_cast %164 : vector<1x1x16xf32> to vector<1x16xf32>
    %166 = vector.shape_cast %163 : vector<1x16xf32> to vector<1x1x16xf32>
    tpu.vector_store %arg10[%c0_97, %c0_98, %c1665_99], %166 {strides = array<i32>} : memref<3x1x2304xf32, #tpu.memory_space<vmem>>, vector<1x1x16xf32>,
    %167 = vector.extract_strided_slice %10 {offsets = [0, 13, 0], sizes = [4, 1, 16], strides = [1, 1, 1]} : vector<4x16x16xf32> to vector<4x1x16xf32>
    %168 = vector.shape_cast %167 : vector<4x1x16xf32> to vector<4x16xf32>
    %c0_100 = arith.constant 0 : index
    %c0_101 = arith.constant 0 : index
    %c1793 = arith.constant 1793 : index
    %169 = vector.load %arg9[%c0_100, %c0_101, %c1793] : memref<3x4x2304xf32, #tpu.memory_space<vmem>>, vector<1x4x16xf32>
    %170 = vector.shape_cast %169 : vector<1x4x16xf32> to vector<4x16xf32>
    %171 = vector.shape_cast %168 : vector<4x16xf32> to vector<1x4x16xf32>
    tpu.vector_store %arg9[%c0_100, %c0_101, %c1793], %171 {strides = array<i32>} : memref<3x4x2304xf32, #tpu.memory_space<vmem>>, vector<1x4x16xf32>,
    %172 = vector.extract_strided_slice %12 {offsets = [0, 13, 0], sizes = [1, 1, 16], strides = [1, 1, 1]} : vector<1x16x16xf32> to vector<1x1x16xf32>
    %173 = vector.shape_cast %172 : vector<1x1x16xf32> to vector<1x16xf32>
    %c0_102 = arith.constant 0 : index
    %c0_103 = arith.constant 0 : index
    %c1793_104 = arith.constant 1793 : index
    %174 = vector.load %arg10[%c0_102, %c0_103, %c1793_104] : memref<3x1x2304xf32, #tpu.memory_space<vmem>>, vector<1x1x16xf32>
    %175 = vector.shape_cast %174 : vector<1x1x16xf32> to vector<1x16xf32>
    %176 = vector.shape_cast %173 : vector<1x16xf32> to vector<1x1x16xf32>
    tpu.vector_store %arg10[%c0_102, %c0_103, %c1793_104], %176 {strides = array<i32>} : memref<3x1x2304xf32, #tpu.memory_space<vmem>>, vector<1x1x16xf32>,
    %177 = vector.extract_strided_slice %10 {offsets = [0, 14, 0], sizes = [4, 1, 16], strides = [1, 1, 1]} : vector<4x16x16xf32> to vector<4x1x16xf32>
    %178 = vector.shape_cast %177 : vector<4x1x16xf32> to vector<4x16xf32>
    %c0_105 = arith.constant 0 : index
    %c0_106 = arith.constant 0 : index
    %c1921 = arith.constant 1921 : index
    %179 = vector.load %arg9[%c0_105, %c0_106, %c1921] : memref<3x4x2304xf32, #tpu.memory_space<vmem>>, vector<1x4x16xf32>
    %180 = vector.shape_cast %179 : vector<1x4x16xf32> to vector<4x16xf32>
    %181 = vector.shape_cast %178 : vector<4x16xf32> to vector<1x4x16xf32>
    tpu.vector_store %arg9[%c0_105, %c0_106, %c1921], %181 {strides = array<i32>} : memref<3x4x2304xf32, #tpu.memory_space<vmem>>, vector<1x4x16xf32>,
    %182 = vector.extract_strided_slice %12 {offsets = [0, 14, 0], sizes = [1, 1, 16], strides = [1, 1, 1]} : vector<1x16x16xf32> to vector<1x1x16xf32>
    %183 = vector.shape_cast %182 : vector<1x1x16xf32> to vector<1x16xf32>
    %c0_107 = arith.constant 0 : index
    %c0_108 = arith.constant 0 : index
    %c1921_109 = arith.constant 1921 : index
    %184 = vector.load %arg10[%c0_107, %c0_108, %c1921_109] : memref<3x1x2304xf32, #tpu.memory_space<vmem>>, vector<1x1x16xf32>
    %185 = vector.shape_cast %184 : vector<1x1x16xf32> to vector<1x16xf32>
    %186 = vector.shape_cast %183 : vector<1x16xf32> to vector<1x1x16xf32>
    tpu.vector_store %arg10[%c0_107, %c0_108, %c1921_109], %186 {strides = array<i32>} : memref<3x1x2304xf32, #tpu.memory_space<vmem>>, vector<1x1x16xf32>,
    %187 = vector.extract_strided_slice %10 {offsets = [0, 15, 0], sizes = [4, 1, 16], strides = [1, 1, 1]} : vector<4x16x16xf32> to vector<4x1x16xf32>
    %188 = vector.shape_cast %187 : vector<4x1x16xf32> to vector<4x16xf32>
    %c0_110 = arith.constant 0 : index
    %c0_111 = arith.constant 0 : index
    %c2049 = arith.constant 2049 : index
    %189 = vector.load %arg9[%c0_110, %c0_111, %c2049] : memref<3x4x2304xf32, #tpu.memory_space<vmem>>, vector<1x4x16xf32>
    %190 = vector.shape_cast %189 : vector<1x4x16xf32> to vector<4x16xf32>
    %191 = vector.shape_cast %188 : vector<4x16xf32> to vector<1x4x16xf32>
    tpu.vector_store %arg9[%c0_110, %c0_111, %c2049], %191 {strides = array<i32>} : memref<3x4x2304xf32, #tpu.memory_space<vmem>>, vector<1x4x16xf32>,
    %192 = vector.extract_strided_slice %12 {offsets = [0, 15, 0], sizes = [1, 1, 16], strides = [1, 1, 1]} : vector<1x16x16xf32> to vector<1x1x16xf32>
    %193 = vector.shape_cast %192 : vector<1x1x16xf32> to vector<1x16xf32>
    %c0_112 = arith.constant 0 : index
    %c0_113 = arith.constant 0 : index
    %c2049_114 = arith.constant 2049 : index
    %194 = vector.load %arg10[%c0_112, %c0_113, %c2049_114] : memref<3x1x2304xf32, #tpu.memory_space<vmem>>, vector<1x1x16xf32>
    %195 = vector.shape_cast %194 : vector<1x1x16xf32> to vector<1x16xf32>
    %196 = vector.shape_cast %193 : vector<1x16xf32> to vector<1x1x16xf32>
    tpu.vector_store %arg10[%c0_112, %c0_113, %c2049_114], %196 {strides = array<i32>} : memref<3x1x2304xf32, #tpu.memory_space<vmem>>, vector<1x1x16xf32>,
    %197 = vector.extract_strided_slice %10 {offsets = [0, 0, 0], sizes = [4, 1, 16], strides = [1, 1, 1]} : vector<4x16x16xf32> to vector<4x1x16xf32>
    %198 = vector.shape_cast %197 : vector<4x1x16xf32> to vector<4x16xf32>
    %c1_115 = arith.constant 1 : index
    %c0_116 = arith.constant 0 : index
    %c128 = arith.constant 128 : index
    %199 = vector.load %arg9[%c1_115, %c0_116, %c128] : memref<3x4x2304xf32, #tpu.memory_space<vmem>>, vector<1x4x16xf32>
    %200 = vector.shape_cast %199 : vector<1x4x16xf32> to vector<4x16xf32>
    %201 = vector.shape_cast %198 : vector<4x16xf32> to vector<1x4x16xf32>
    tpu.vector_store %arg9[%c1_115, %c0_116, %c128], %201 {strides = array<i32>} : memref<3x4x2304xf32, #tpu.memory_space<vmem>>, vector<1x4x16xf32>,
    %202 = vector.extract_strided_slice %12 {offsets = [0, 0, 0], sizes = [1, 1, 16], strides = [1, 1, 1]} : vector<1x16x16xf32> to vector<1x1x16xf32>
    %203 = vector.shape_cast %202 : vector<1x1x16xf32> to vector<1x16xf32>
    %c1_117 = arith.constant 1 : index
    %c0_118 = arith.constant 0 : index
    %c128_119 = arith.constant 128 : index
    %204 = vector.load %arg10[%c1_117, %c0_118, %c128_119] : memref<3x1x2304xf32, #tpu.memory_space<vmem>>, vector<1x1x16xf32>
    %205 = vector.shape_cast %204 : vector<1x1x16xf32> to vector<1x16xf32>
    %206 = vector.shape_cast %203 : vector<1x16xf32> to vector<1x1x16xf32>
    tpu.vector_store %arg10[%c1_117, %c0_118, %c128_119], %206 {strides = array<i32>} : memref<3x1x2304xf32, #tpu.memory_space<vmem>>, vector<1x1x16xf32>,
    %207 = vector.extract_strided_slice %10 {offsets = [0, 1, 0], sizes = [4, 1, 16], strides = [1, 1, 1]} : vector<4x16x16xf32> to vector<4x1x16xf32>
    %208 = vector.shape_cast %207 : vector<4x1x16xf32> to vector<4x16xf32>
    %c1_120 = arith.constant 1 : index
    %c0_121 = arith.constant 0 : index
    %c256 = arith.constant 256 : index
    %209 = vector.load %arg9[%c1_120, %c0_121, %c256] : memref<3x4x2304xf32, #tpu.memory_space<vmem>>, vector<1x4x16xf32>
    %210 = vector.shape_cast %209 : vector<1x4x16xf32> to vector<4x16xf32>
    %211 = vector.shape_cast %208 : vector<4x16xf32> to vector<1x4x16xf32>
    tpu.vector_store %arg9[%c1_120, %c0_121, %c256], %211 {strides = array<i32>} : memref<3x4x2304xf32, #tpu.memory_space<vmem>>, vector<1x4x16xf32>,
    %212 = vector.extract_strided_slice %12 {offsets = [0, 1, 0], sizes = [1, 1, 16], strides = [1, 1, 1]} : vector<1x16x16xf32> to vector<1x1x16xf32>
    %213 = vector.shape_cast %212 : vector<1x1x16xf32> to vector<1x16xf32>
    %c1_122 = arith.constant 1 : index
    %c0_123 = arith.constant 0 : index
    %c256_124 = arith.constant 256 : index
    %214 = vector.load %arg10[%c1_122, %c0_123, %c256_124] : memref<3x1x2304xf32, #tpu.memory_space<vmem>>, vector<1x1x16xf32>
    %215 = vector.shape_cast %214 : vector<1x1x16xf32> to vector<1x16xf32>
    %216 = vector.shape_cast %213 : vector<1x16xf32> to vector<1x1x16xf32>
    tpu.vector_store %arg10[%c1_122, %c0_123, %c256_124], %216 {strides = array<i32>} : memref<3x1x2304xf32, #tpu.memory_space<vmem>>, vector<1x1x16xf32>,
    %217 = vector.extract_strided_slice %10 {offsets = [0, 2, 0], sizes = [4, 1, 16], strides = [1, 1, 1]} : vector<4x16x16xf32> to vector<4x1x16xf32>
    %218 = vector.shape_cast %217 : vector<4x1x16xf32> to vector<4x16xf32>
    %c1_125 = arith.constant 1 : index
    %c0_126 = arith.constant 0 : index
    %c384 = arith.constant 384 : index
    %219 = vector.load %arg9[%c1_125, %c0_126, %c384] : memref<3x4x2304xf32, #tpu.memory_space<vmem>>, vector<1x4x16xf32>
    %220 = vector.shape_cast %219 : vector<1x4x16xf32> to vector<4x16xf32>
    %221 = vector.shape_cast %218 : vector<4x16xf32> to vector<1x4x16xf32>
    tpu.vector_store %arg9[%c1_125, %c0_126, %c384], %221 {strides = array<i32>} : memref<3x4x2304xf32, #tpu.memory_space<vmem>>, vector<1x4x16xf32>,
    %222 = vector.extract_strided_slice %12 {offsets = [0, 2, 0], sizes = [1, 1, 16], strides = [1, 1, 1]} : vector<1x16x16xf32> to vector<1x1x16xf32>
    %223 = vector.shape_cast %222 : vector<1x1x16xf32> to vector<1x16xf32>
    %c1_127 = arith.constant 1 : index
    %c0_128 = arith.constant 0 : index
    %c384_129 = arith.constant 384 : index
    %224 = vector.load %arg10[%c1_127, %c0_128, %c384_129] : memref<3x1x2304xf32, #tpu.memory_space<vmem>>, vector<1x1x16xf32>
    %225 = vector.shape_cast %224 : vector<1x1x16xf32> to vector<1x16xf32>
    %226 = vector.shape_cast %223 : vector<1x16xf32> to vector<1x1x16xf32>
    tpu.vector_store %arg10[%c1_127, %c0_128, %c384_129], %226 {strides = array<i32>} : memref<3x1x2304xf32, #tpu.memory_space<vmem>>, vector<1x1x16xf32>,
    %227 = vector.extract_strided_slice %10 {offsets = [0, 3, 0], sizes = [4, 1, 16], strides = [1, 1, 1]} : vector<4x16x16xf32> to vector<4x1x16xf32>
    %228 = vector.shape_cast %227 : vector<4x1x16xf32> to vector<4x16xf32>
    %c1_130 = arith.constant 1 : index
    %c0_131 = arith.constant 0 : index
    %c512 = arith.constant 512 : index
    %229 = vector.load %arg9[%c1_130, %c0_131, %c512] : memref<3x4x2304xf32, #tpu.memory_space<vmem>>, vector<1x4x16xf32>
    %230 = vector.shape_cast %229 : vector<1x4x16xf32> to vector<4x16xf32>
    %231 = vector.shape_cast %228 : vector<4x16xf32> to vector<1x4x16xf32>
    tpu.vector_store %arg9[%c1_130, %c0_131, %c512], %231 {strides = array<i32>} : memref<3x4x2304xf32, #tpu.memory_space<vmem>>, vector<1x4x16xf32>,
    %232 = vector.extract_strided_slice %12 {offsets = [0, 3, 0], sizes = [1, 1, 16], strides = [1, 1, 1]} : vector<1x16x16xf32> to vector<1x1x16xf32>
    %233 = vector.shape_cast %232 : vector<1x1x16xf32> to vector<1x16xf32>
    %c1_132 = arith.constant 1 : index
    %c0_133 = arith.constant 0 : index
    %c512_134 = arith.constant 512 : index
    %234 = vector.load %arg10[%c1_132, %c0_133, %c512_134] : memref<3x1x2304xf32, #tpu.memory_space<vmem>>, vector<1x1x16xf32>
    %235 = vector.shape_cast %234 : vector<1x1x16xf32> to vector<1x16xf32>
    %236 = vector.shape_cast %233 : vector<1x16xf32> to vector<1x1x16xf32>
    tpu.vector_store %arg10[%c1_132, %c0_133, %c512_134], %236 {strides = array<i32>} : memref<3x1x2304xf32, #tpu.memory_space<vmem>>, vector<1x1x16xf32>,
    %237 = vector.extract_strided_slice %10 {offsets = [0, 4, 0], sizes = [4, 1, 16], strides = [1, 1, 1]} : vector<4x16x16xf32> to vector<4x1x16xf32>
    %238 = vector.shape_cast %237 : vector<4x1x16xf32> to vector<4x16xf32>
    %c1_135 = arith.constant 1 : index
    %c0_136 = arith.constant 0 : index
    %c640 = arith.constant 640 : index
    %239 = vector.load %arg9[%c1_135, %c0_136, %c640] : memref<3x4x2304xf32, #tpu.memory_space<vmem>>, vector<1x4x16xf32>
    %240 = vector.shape_cast %239 : vector<1x4x16xf32> to vector<4x16xf32>
    %241 = vector.shape_cast %238 : vector<4x16xf32> to vector<1x4x16xf32>
    tpu.vector_store %arg9[%c1_135, %c0_136, %c640], %241 {strides = array<i32>} : memref<3x4x2304xf32, #tpu.memory_space<vmem>>, vector<1x4x16xf32>,
    %242 = vector.extract_strided_slice %12 {offsets = [0, 4, 0], sizes = [1, 1, 16], strides = [1, 1, 1]} : vector<1x16x16xf32> to vector<1x1x16xf32>
    %243 = vector.shape_cast %242 : vector<1x1x16xf32> to vector<1x16xf32>
    %c1_137 = arith.constant 1 : index
    %c0_138 = arith.constant 0 : index
    %c640_139 = arith.constant 640 : index
    %244 = vector.load %arg10[%c1_137, %c0_138, %c640_139] : memref<3x1x2304xf32, #tpu.memory_space<vmem>>, vector<1x1x16xf32>
    %245 = vector.shape_cast %244 : vector<1x1x16xf32> to vector<1x16xf32>
    %246 = vector.shape_cast %243 : vector<1x16xf32> to vector<1x1x16xf32>
    tpu.vector_store %arg10[%c1_137, %c0_138, %c640_139], %246 {strides = array<i32>} : memref<3x1x2304xf32, #tpu.memory_space<vmem>>, vector<1x1x16xf32>,
    %247 = vector.extract_strided_slice %10 {offsets = [0, 5, 0], sizes = [4, 1, 16], strides = [1, 1, 1]} : vector<4x16x16xf32> to vector<4x1x16xf32>
    %248 = vector.shape_cast %247 : vector<4x1x16xf32> to vector<4x16xf32>
    %c1_140 = arith.constant 1 : index
    %c0_141 = arith.constant 0 : index
    %c768 = arith.constant 768 : index
    %249 = vector.load %arg9[%c1_140, %c0_141, %c768] : memref<3x4x2304xf32, #tpu.memory_space<vmem>>, vector<1x4x16xf32>
    %250 = vector.shape_cast %249 : vector<1x4x16xf32> to vector<4x16xf32>
    %251 = vector.shape_cast %248 : vector<4x16xf32> to vector<1x4x16xf32>
    tpu.vector_store %arg9[%c1_140, %c0_141, %c768], %251 {strides = array<i32>} : memref<3x4x2304xf32, #tpu.memory_space<vmem>>, vector<1x4x16xf32>,
    %252 = vector.extract_strided_slice %12 {offsets = [0, 5, 0], sizes = [1, 1, 16], strides = [1, 1, 1]} : vector<1x16x16xf32> to vector<1x1x16xf32>
    %253 = vector.shape_cast %252 : vector<1x1x16xf32> to vector<1x16xf32>
    %c1_142 = arith.constant 1 : index
    %c0_143 = arith.constant 0 : index
    %c768_144 = arith.constant 768 : index
    %254 = vector.load %arg10[%c1_142, %c0_143, %c768_144] : memref<3x1x2304xf32, #tpu.memory_space<vmem>>, vector<1x1x16xf32>
    %255 = vector.shape_cast %254 : vector<1x1x16xf32> to vector<1x16xf32>
    %256 = vector.shape_cast %253 : vector<1x16xf32> to vector<1x1x16xf32>
    tpu.vector_store %arg10[%c1_142, %c0_143, %c768_144], %256 {strides = array<i32>} : memref<3x1x2304xf32, #tpu.memory_space<vmem>>, vector<1x1x16xf32>,
    %257 = vector.extract_strided_slice %10 {offsets = [0, 6, 0], sizes = [4, 1, 16], strides = [1, 1, 1]} : vector<4x16x16xf32> to vector<4x1x16xf32>
    %258 = vector.shape_cast %257 : vector<4x1x16xf32> to vector<4x16xf32>
    %c1_145 = arith.constant 1 : index
    %c0_146 = arith.constant 0 : index
    %c896 = arith.constant 896 : index
    %259 = vector.load %arg9[%c1_145, %c0_146, %c896] : memref<3x4x2304xf32, #tpu.memory_space<vmem>>, vector<1x4x16xf32>
    %260 = vector.shape_cast %259 : vector<1x4x16xf32> to vector<4x16xf32>
    %261 = vector.shape_cast %258 : vector<4x16xf32> to vector<1x4x16xf32>
    tpu.vector_store %arg9[%c1_145, %c0_146, %c896], %261 {strides = array<i32>} : memref<3x4x2304xf32, #tpu.memory_space<vmem>>, vector<1x4x16xf32>,
    %262 = vector.extract_strided_slice %12 {offsets = [0, 6, 0], sizes = [1, 1, 16], strides = [1, 1, 1]} : vector<1x16x16xf32> to vector<1x1x16xf32>
    %263 = vector.shape_cast %262 : vector<1x1x16xf32> to vector<1x16xf32>
    %c1_147 = arith.constant 1 : index
    %c0_148 = arith.constant 0 : index
    %c896_149 = arith.constant 896 : index
    %264 = vector.load %arg10[%c1_147, %c0_148, %c896_149] : memref<3x1x2304xf32, #tpu.memory_space<vmem>>, vector<1x1x16xf32>
    %265 = vector.shape_cast %264 : vector<1x1x16xf32> to vector<1x16xf32>
    %266 = vector.shape_cast %263 : vector<1x16xf32> to vector<1x1x16xf32>
    tpu.vector_store %arg10[%c1_147, %c0_148, %c896_149], %266 {strides = array<i32>} : memref<3x1x2304xf32, #tpu.memory_space<vmem>>, vector<1x1x16xf32>,
    %267 = vector.extract_strided_slice %10 {offsets = [0, 7, 0], sizes = [4, 1, 16], strides = [1, 1, 1]} : vector<4x16x16xf32> to vector<4x1x16xf32>
    %268 = vector.shape_cast %267 : vector<4x1x16xf32> to vector<4x16xf32>
    %c1_150 = arith.constant 1 : index
    %c0_151 = arith.constant 0 : index
    %c1024 = arith.constant 1024 : index
    %269 = vector.load %arg9[%c1_150, %c0_151, %c1024] : memref<3x4x2304xf32, #tpu.memory_space<vmem>>, vector<1x4x16xf32>
    %270 = vector.shape_cast %269 : vector<1x4x16xf32> to vector<4x16xf32>
    %271 = vector.shape_cast %268 : vector<4x16xf32> to vector<1x4x16xf32>
    tpu.vector_store %arg9[%c1_150, %c0_151, %c1024], %271 {strides = array<i32>} : memref<3x4x2304xf32, #tpu.memory_space<vmem>>, vector<1x4x16xf32>,
    %272 = vector.extract_strided_slice %12 {offsets = [0, 7, 0], sizes = [1, 1, 16], strides = [1, 1, 1]} : vector<1x16x16xf32> to vector<1x1x16xf32>
    %273 = vector.shape_cast %272 : vector<1x1x16xf32> to vector<1x16xf32>
    %c1_152 = arith.constant 1 : index
    %c0_153 = arith.constant 0 : index
    %c1024_154 = arith.constant 1024 : index
    %274 = vector.load %arg10[%c1_152, %c0_153, %c1024_154] : memref<3x1x2304xf32, #tpu.memory_space<vmem>>, vector<1x1x16xf32>
    %275 = vector.shape_cast %274 : vector<1x1x16xf32> to vector<1x16xf32>
    %276 = vector.shape_cast %273 : vector<1x16xf32> to vector<1x1x16xf32>
    tpu.vector_store %arg10[%c1_152, %c0_153, %c1024_154], %276 {strides = array<i32>} : memref<3x1x2304xf32, #tpu.memory_space<vmem>>, vector<1x1x16xf32>,
    %277 = vector.extract_strided_slice %10 {offsets = [0, 8, 0], sizes = [4, 1, 16], strides = [1, 1, 1]} : vector<4x16x16xf32> to vector<4x1x16xf32>
    %278 = vector.shape_cast %277 : vector<4x1x16xf32> to vector<4x16xf32>
    %c1_155 = arith.constant 1 : index
    %c0_156 = arith.constant 0 : index
    %c1152 = arith.constant 1152 : index
    %279 = vector.load %arg9[%c1_155, %c0_156, %c1152] : memref<3x4x2304xf32, #tpu.memory_space<vmem>>, vector<1x4x16xf32>
    %280 = vector.shape_cast %279 : vector<1x4x16xf32> to vector<4x16xf32>
    %281 = vector.shape_cast %278 : vector<4x16xf32> to vector<1x4x16xf32>
    tpu.vector_store %arg9[%c1_155, %c0_156, %c1152], %281 {strides = array<i32>} : memref<3x4x2304xf32, #tpu.memory_space<vmem>>, vector<1x4x16xf32>,
    %282 = vector.extract_strided_slice %12 {offsets = [0, 8, 0], sizes = [1, 1, 16], strides = [1, 1, 1]} : vector<1x16x16xf32> to vector<1x1x16xf32>
    %283 = vector.shape_cast %282 : vector<1x1x16xf32> to vector<1x16xf32>
    %c1_157 = arith.constant 1 : index
    %c0_158 = arith.constant 0 : index
    %c1152_159 = arith.constant 1152 : index
    %284 = vector.load %arg10[%c1_157, %c0_158, %c1152_159] : memref<3x1x2304xf32, #tpu.memory_space<vmem>>, vector<1x1x16xf32>
    %285 = vector.shape_cast %284 : vector<1x1x16xf32> to vector<1x16xf32>
    %286 = vector.shape_cast %283 : vector<1x16xf32> to vector<1x1x16xf32>
    tpu.vector_store %arg10[%c1_157, %c0_158, %c1152_159], %286 {strides = array<i32>} : memref<3x1x2304xf32, #tpu.memory_space<vmem>>, vector<1x1x16xf32>,
    %287 = vector.extract_strided_slice %10 {offsets = [0, 9, 0], sizes = [4, 1, 16], strides = [1, 1, 1]} : vector<4x16x16xf32> to vector<4x1x16xf32>
    %288 = vector.shape_cast %287 : vector<4x1x16xf32> to vector<4x16xf32>
    %c1_160 = arith.constant 1 : index
    %c0_161 = arith.constant 0 : index
    %c1280 = arith.constant 1280 : index
    %289 = vector.load %arg9[%c1_160, %c0_161, %c1280] : memref<3x4x2304xf32, #tpu.memory_space<vmem>>, vector<1x4x16xf32>
    %290 = vector.shape_cast %289 : vector<1x4x16xf32> to vector<4x16xf32>
    %291 = vector.shape_cast %288 : vector<4x16xf32> to vector<1x4x16xf32>
    tpu.vector_store %arg9[%c1_160, %c0_161, %c1280], %291 {strides = array<i32>} : memref<3x4x2304xf32, #tpu.memory_space<vmem>>, vector<1x4x16xf32>,
    %292 = vector.extract_strided_slice %12 {offsets = [0, 9, 0], sizes = [1, 1, 16], strides = [1, 1, 1]} : vector<1x16x16xf32> to vector<1x1x16xf32>
    %293 = vector.shape_cast %292 : vector<1x1x16xf32> to vector<1x16xf32>
    %c1_162 = arith.constant 1 : index
    %c0_163 = arith.constant 0 : index
    %c1280_164 = arith.constant 1280 : index
    %294 = vector.load %arg10[%c1_162, %c0_163, %c1280_164] : memref<3x1x2304xf32, #tpu.memory_space<vmem>>, vector<1x1x16xf32>
    %295 = vector.shape_cast %294 : vector<1x1x16xf32> to vector<1x16xf32>
    %296 = vector.shape_cast %293 : vector<1x16xf32> to vector<1x1x16xf32>
    tpu.vector_store %arg10[%c1_162, %c0_163, %c1280_164], %296 {strides = array<i32>} : memref<3x1x2304xf32, #tpu.memory_space<vmem>>, vector<1x1x16xf32>,
    %297 = vector.extract_strided_slice %10 {offsets = [0, 10, 0], sizes = [4, 1, 16], strides = [1, 1, 1]} : vector<4x16x16xf32> to vector<4x1x16xf32>
    %298 = vector.shape_cast %297 : vector<4x1x16xf32> to vector<4x16xf32>
    %c1_165 = arith.constant 1 : index
    %c0_166 = arith.constant 0 : index
    %c1408 = arith.constant 1408 : index
    %299 = vector.load %arg9[%c1_165, %c0_166, %c1408] : memref<3x4x2304xf32, #tpu.memory_space<vmem>>, vector<1x4x16xf32>
    %300 = vector.shape_cast %299 : vector<1x4x16xf32> to vector<4x16xf32>
    %301 = vector.shape_cast %298 : vector<4x16xf32> to vector<1x4x16xf32>
    tpu.vector_store %arg9[%c1_165, %c0_166, %c1408], %301 {strides = array<i32>} : memref<3x4x2304xf32, #tpu.memory_space<vmem>>, vector<1x4x16xf32>,
    %302 = vector.extract_strided_slice %12 {offsets = [0, 10, 0], sizes = [1, 1, 16], strides = [1, 1, 1]} : vector<1x16x16xf32> to vector<1x1x16xf32>
    %303 = vector.shape_cast %302 : vector<1x1x16xf32> to vector<1x16xf32>
    %c1_167 = arith.constant 1 : index
    %c0_168 = arith.constant 0 : index
    %c1408_169 = arith.constant 1408 : index
    %304 = vector.load %arg10[%c1_167, %c0_168, %c1408_169] : memref<3x1x2304xf32, #tpu.memory_space<vmem>>, vector<1x1x16xf32>
    %305 = vector.shape_cast %304 : vector<1x1x16xf32> to vector<1x16xf32>
    %306 = vector.shape_cast %303 : vector<1x16xf32> to vector<1x1x16xf32>
    tpu.vector_store %arg10[%c1_167, %c0_168, %c1408_169], %306 {strides = array<i32>} : memref<3x1x2304xf32, #tpu.memory_space<vmem>>, vector<1x1x16xf32>,
    %307 = vector.extract_strided_slice %10 {offsets = [0, 11, 0], sizes = [4, 1, 16], strides = [1, 1, 1]} : vector<4x16x16xf32> to vector<4x1x16xf32>
    %308 = vector.shape_cast %307 : vector<4x1x16xf32> to vector<4x16xf32>
    %c1_170 = arith.constant 1 : index
    %c0_171 = arith.constant 0 : index
    %c1536 = arith.constant 1536 : index
    %309 = vector.load %arg9[%c1_170, %c0_171, %c1536] : memref<3x4x2304xf32, #tpu.memory_space<vmem>>, vector<1x4x16xf32>
    %310 = vector.shape_cast %309 : vector<1x4x16xf32> to vector<4x16xf32>
    %311 = vector.shape_cast %308 : vector<4x16xf32> to vector<1x4x16xf32>
    tpu.vector_store %arg9[%c1_170, %c0_171, %c1536], %311 {strides = array<i32>} : memref<3x4x2304xf32, #tpu.memory_space<vmem>>, vector<1x4x16xf32>,
    %312 = vector.extract_strided_slice %12 {offsets = [0, 11, 0], sizes = [1, 1, 16], strides = [1, 1, 1]} : vector<1x16x16xf32> to vector<1x1x16xf32>
    %313 = vector.shape_cast %312 : vector<1x1x16xf32> to vector<1x16xf32>
    %c1_172 = arith.constant 1 : index
    %c0_173 = arith.constant 0 : index
    %c1536_174 = arith.constant 1536 : index
    %314 = vector.load %arg10[%c1_172, %c0_173, %c1536_174] : memref<3x1x2304xf32, #tpu.memory_space<vmem>>, vector<1x1x16xf32>
    %315 = vector.shape_cast %314 : vector<1x1x16xf32> to vector<1x16xf32>
    %316 = vector.shape_cast %313 : vector<1x16xf32> to vector<1x1x16xf32>
    tpu.vector_store %arg10[%c1_172, %c0_173, %c1536_174], %316 {strides = array<i32>} : memref<3x1x2304xf32, #tpu.memory_space<vmem>>, vector<1x1x16xf32>,
    %317 = vector.extract_strided_slice %10 {offsets = [0, 12, 0], sizes = [4, 1, 16], strides = [1, 1, 1]} : vector<4x16x16xf32> to vector<4x1x16xf32>
    %318 = vector.shape_cast %317 : vector<4x1x16xf32> to vector<4x16xf32>
    %c1_175 = arith.constant 1 : index
    %c0_176 = arith.constant 0 : index
    %c1664 = arith.constant 1664 : index
    %319 = vector.load %arg9[%c1_175, %c0_176, %c1664] : memref<3x4x2304xf32, #tpu.memory_space<vmem>>, vector<1x4x16xf32>
    %320 = vector.shape_cast %319 : vector<1x4x16xf32> to vector<4x16xf32>
    %321 = vector.shape_cast %318 : vector<4x16xf32> to vector<1x4x16xf32>
    tpu.vector_store %arg9[%c1_175, %c0_176, %c1664], %321 {strides = array<i32>} : memref<3x4x2304xf32, #tpu.memory_space<vmem>>, vector<1x4x16xf32>,
    %322 = vector.extract_strided_slice %12 {offsets = [0, 12, 0], sizes = [1, 1, 16], strides = [1, 1, 1]} : vector<1x16x16xf32> to vector<1x1x16xf32>
    %323 = vector.shape_cast %322 : vector<1x1x16xf32> to vector<1x16xf32>
    %c1_177 = arith.constant 1 : index
    %c0_178 = arith.constant 0 : index
    %c1664_179 = arith.constant 1664 : index
    %324 = vector.load %arg10[%c1_177, %c0_178, %c1664_179] : memref<3x1x2304xf32, #tpu.memory_space<vmem>>, vector<1x1x16xf32>
    %325 = vector.shape_cast %324 : vector<1x1x16xf32> to vector<1x16xf32>
    %326 = vector.shape_cast %323 : vector<1x16xf32> to vector<1x1x16xf32>
    tpu.vector_store %arg10[%c1_177, %c0_178, %c1664_179], %326 {strides = array<i32>} : memref<3x1x2304xf32, #tpu.memory_space<vmem>>, vector<1x1x16xf32>,
    %327 = vector.extract_strided_slice %10 {offsets = [0, 13, 0], sizes = [4, 1, 16], strides = [1, 1, 1]} : vector<4x16x16xf32> to vector<4x1x16xf32>
    %328 = vector.shape_cast %327 : vector<4x1x16xf32> to vector<4x16xf32>
    %c1_180 = arith.constant 1 : index
    %c0_181 = arith.constant 0 : index
    %c1792 = arith.constant 1792 : index
    %329 = vector.load %arg9[%c1_180, %c0_181, %c1792] : memref<3x4x2304xf32, #tpu.memory_space<vmem>>, vector<1x4x16xf32>
    %330 = vector.shape_cast %329 : vector<1x4x16xf32> to vector<4x16xf32>
    %331 = vector.shape_cast %328 : vector<4x16xf32> to vector<1x4x16xf32>
    tpu.vector_store %arg9[%c1_180, %c0_181, %c1792], %331 {strides = array<i32>} : memref<3x4x2304xf32, #tpu.memory_space<vmem>>, vector<1x4x16xf32>,
    %332 = vector.extract_strided_slice %12 {offsets = [0, 13, 0], sizes = [1, 1, 16], strides = [1, 1, 1]} : vector<1x16x16xf32> to vector<1x1x16xf32>
    %333 = vector.shape_cast %332 : vector<1x1x16xf32> to vector<1x16xf32>
    %c1_182 = arith.constant 1 : index
    %c0_183 = arith.constant 0 : index
    %c1792_184 = arith.constant 1792 : index
    %334 = vector.load %arg10[%c1_182, %c0_183, %c1792_184] : memref<3x1x2304xf32, #tpu.memory_space<vmem>>, vector<1x1x16xf32>
    %335 = vector.shape_cast %334 : vector<1x1x16xf32> to vector<1x16xf32>
    %336 = vector.shape_cast %333 : vector<1x16xf32> to vector<1x1x16xf32>
    tpu.vector_store %arg10[%c1_182, %c0_183, %c1792_184], %336 {strides = array<i32>} : memref<3x1x2304xf32, #tpu.memory_space<vmem>>, vector<1x1x16xf32>,
    %337 = vector.extract_strided_slice %10 {offsets = [0, 14, 0], sizes = [4, 1, 16], strides = [1, 1, 1]} : vector<4x16x16xf32> to vector<4x1x16xf32>
    %338 = vector.shape_cast %337 : vector<4x1x16xf32> to vector<4x16xf32>
    %c1_185 = arith.constant 1 : index
    %c0_186 = arith.constant 0 : index
    %c1920 = arith.constant 1920 : index
    %339 = vector.load %arg9[%c1_185, %c0_186, %c1920] : memref<3x4x2304xf32, #tpu.memory_space<vmem>>, vector<1x4x16xf32>
    %340 = vector.shape_cast %339 : vector<1x4x16xf32> to vector<4x16xf32>
    %341 = vector.shape_cast %338 : vector<4x16xf32> to vector<1x4x16xf32>
    tpu.vector_store %arg9[%c1_185, %c0_186, %c1920], %341 {strides = array<i32>} : memref<3x4x2304xf32, #tpu.memory_space<vmem>>, vector<1x4x16xf32>,
    %342 = vector.extract_strided_slice %12 {offsets = [0, 14, 0], sizes = [1, 1, 16], strides = [1, 1, 1]} : vector<1x16x16xf32> to vector<1x1x16xf32>
    %343 = vector.shape_cast %342 : vector<1x1x16xf32> to vector<1x16xf32>
    %c1_187 = arith.constant 1 : index
    %c0_188 = arith.constant 0 : index
    %c1920_189 = arith.constant 1920 : index
    %344 = vector.load %arg10[%c1_187, %c0_188, %c1920_189] : memref<3x1x2304xf32, #tpu.memory_space<vmem>>, vector<1x1x16xf32>
    %345 = vector.shape_cast %344 : vector<1x1x16xf32> to vector<1x16xf32>
    %346 = vector.shape_cast %343 : vector<1x16xf32> to vector<1x1x16xf32>
    tpu.vector_store %arg10[%c1_187, %c0_188, %c1920_189], %346 {strides = array<i32>} : memref<3x1x2304xf32, #tpu.memory_space<vmem>>, vector<1x1x16xf32>,
    %347 = vector.extract_strided_slice %10 {offsets = [0, 15, 0], sizes = [4, 1, 16], strides = [1, 1, 1]} : vector<4x16x16xf32> to vector<4x1x16xf32>
    %348 = vector.shape_cast %347 : vector<4x1x16xf32> to vector<4x16xf32>
    %c1_190 = arith.constant 1 : index
    %c0_191 = arith.constant 0 : index
    %c2048 = arith.constant 2048 : index
    %349 = vector.load %arg9[%c1_190, %c0_191, %c2048] : memref<3x4x2304xf32, #tpu.memory_space<vmem>>, vector<1x4x16xf32>
    %350 = vector.shape_cast %349 : vector<1x4x16xf32> to vector<4x16xf32>
    %351 = vector.shape_cast %348 : vector<4x16xf32> to vector<1x4x16xf32>
    tpu.vector_store %arg9[%c1_190, %c0_191, %c2048], %351 {strides = array<i32>} : memref<3x4x2304xf32, #tpu.memory_space<vmem>>, vector<1x4x16xf32>,
    %352 = vector.extract_strided_slice %12 {offsets = [0, 15, 0], sizes = [1, 1, 16], strides = [1, 1, 1]} : vector<1x16x16xf32> to vector<1x1x16xf32>
    %353 = vector.shape_cast %352 : vector<1x1x16xf32> to vector<1x16xf32>
    %c1_192 = arith.constant 1 : index
    %c0_193 = arith.constant 0 : index
    %c2048_194 = arith.constant 2048 : index
    %354 = vector.load %arg10[%c1_192, %c0_193, %c2048_194] : memref<3x1x2304xf32, #tpu.memory_space<vmem>>, vector<1x1x16xf32>
    %355 = vector.shape_cast %354 : vector<1x1x16xf32> to vector<1x16xf32>
    %356 = vector.shape_cast %353 : vector<1x16xf32> to vector<1x1x16xf32>
    tpu.vector_store %arg10[%c1_192, %c0_193, %c2048_194], %356 {strides = array<i32>} : memref<3x1x2304xf32, #tpu.memory_space<vmem>>, vector<1x1x16xf32>,
    %357 = vector.extract_strided_slice %10 {offsets = [0, 0, 1], sizes = [4, 1, 15], strides = [1, 1, 1]} : vector<4x16x16xf32> to vector<4x1x15xf32>
    %358 = vector.shape_cast %357 : vector<4x1x15xf32> to vector<4x15xf32>
    %c2_195 = arith.constant 2 : index
    %c0_196 = arith.constant 0 : index
    %c128_197 = arith.constant 128 : index
    %359 = vector.load %arg9[%c2_195, %c0_196, %c128_197] : memref<3x4x2304xf32, #tpu.memory_space<vmem>>, vector<1x4x15xf32>
    %360 = vector.shape_cast %359 : vector<1x4x15xf32> to vector<4x15xf32>
    %361 = vector.shape_cast %358 : vector<4x15xf32> to vector<1x4x15xf32>
    tpu.vector_store %arg9[%c2_195, %c0_196, %c128_197], %361 {strides = array<i32>} : memref<3x4x2304xf32, #tpu.memory_space<vmem>>, vector<1x4x15xf32>,
    %362 = vector.extract_strided_slice %12 {offsets = [0, 0, 1], sizes = [1, 1, 15], strides = [1, 1, 1]} : vector<1x16x16xf32> to vector<1x1x15xf32>
    %363 = vector.shape_cast %362 : vector<1x1x15xf32> to vector<1x15xf32>
    %c2_198 = arith.constant 2 : index
    %c0_199 = arith.constant 0 : index
    %c128_200 = arith.constant 128 : index
    %364 = vector.load %arg10[%c2_198, %c0_199, %c128_200] : memref<3x1x2304xf32, #tpu.memory_space<vmem>>, vector<1x1x15xf32>
    %365 = vector.shape_cast %364 : vector<1x1x15xf32> to vector<1x15xf32>
    %366 = vector.shape_cast %363 : vector<1x15xf32> to vector<1x1x15xf32>
    tpu.vector_store %arg10[%c2_198, %c0_199, %c128_200], %366 {strides = array<i32>} : memref<3x1x2304xf32, #tpu.memory_space<vmem>>, vector<1x1x15xf32>,
    %367 = vector.extract_strided_slice %10 {offsets = [0, 1, 1], sizes = [4, 1, 15], strides = [1, 1, 1]} : vector<4x16x16xf32> to vector<4x1x15xf32>
    %368 = vector.shape_cast %367 : vector<4x1x15xf32> to vector<4x15xf32>
    %c2_201 = arith.constant 2 : index
    %c0_202 = arith.constant 0 : index
    %c256_203 = arith.constant 256 : index
    %369 = vector.load %arg9[%c2_201, %c0_202, %c256_203] : memref<3x4x2304xf32, #tpu.memory_space<vmem>>, vector<1x4x15xf32>
    %370 = vector.shape_cast %369 : vector<1x4x15xf32> to vector<4x15xf32>
    %371 = vector.shape_cast %368 : vector<4x15xf32> to vector<1x4x15xf32>
    tpu.vector_store %arg9[%c2_201, %c0_202, %c256_203], %371 {strides = array<i32>} : memref<3x4x2304xf32, #tpu.memory_space<vmem>>, vector<1x4x15xf32>,
    %372 = vector.extract_strided_slice %12 {offsets = [0, 1, 1], sizes = [1, 1, 15], strides = [1, 1, 1]} : vector<1x16x16xf32> to vector<1x1x15xf32>
    %373 = vector.shape_cast %372 : vector<1x1x15xf32> to vector<1x15xf32>
    %c2_204 = arith.constant 2 : index
    %c0_205 = arith.constant 0 : index
    %c256_206 = arith.constant 256 : index
    %374 = vector.load %arg10[%c2_204, %c0_205, %c256_206] : memref<3x1x2304xf32, #tpu.memory_space<vmem>>, vector<1x1x15xf32>
    %375 = vector.shape_cast %374 : vector<1x1x15xf32> to vector<1x15xf32>
    %376 = vector.shape_cast %373 : vector<1x15xf32> to vector<1x1x15xf32>
    tpu.vector_store %arg10[%c2_204, %c0_205, %c256_206], %376 {strides = array<i32>} : memref<3x1x2304xf32, #tpu.memory_space<vmem>>, vector<1x1x15xf32>,
    %377 = vector.extract_strided_slice %10 {offsets = [0, 2, 1], sizes = [4, 1, 15], strides = [1, 1, 1]} : vector<4x16x16xf32> to vector<4x1x15xf32>
    %378 = vector.shape_cast %377 : vector<4x1x15xf32> to vector<4x15xf32>
    %c2_207 = arith.constant 2 : index
    %c0_208 = arith.constant 0 : index
    %c384_209 = arith.constant 384 : index
    %379 = vector.load %arg9[%c2_207, %c0_208, %c384_209] : memref<3x4x2304xf32, #tpu.memory_space<vmem>>, vector<1x4x15xf32>
    %380 = vector.shape_cast %379 : vector<1x4x15xf32> to vector<4x15xf32>
    %381 = vector.shape_cast %378 : vector<4x15xf32> to vector<1x4x15xf32>
    tpu.vector_store %arg9[%c2_207, %c0_208, %c384_209], %381 {strides = array<i32>} : memref<3x4x2304xf32, #tpu.memory_space<vmem>>, vector<1x4x15xf32>,
    %382 = vector.extract_strided_slice %12 {offsets = [0, 2, 1], sizes = [1, 1, 15], strides = [1, 1, 1]} : vector<1x16x16xf32> to vector<1x1x15xf32>
    %383 = vector.shape_cast %382 : vector<1x1x15xf32> to vector<1x15xf32>
    %c2_210 = arith.constant 2 : index
    %c0_211 = arith.constant 0 : index
    %c384_212 = arith.constant 384 : index
    %384 = vector.load %arg10[%c2_210, %c0_211, %c384_212] : memref<3x1x2304xf32, #tpu.memory_space<vmem>>, vector<1x1x15xf32>
    %385 = vector.shape_cast %384 : vector<1x1x15xf32> to vector<1x15xf32>
    %386 = vector.shape_cast %383 : vector<1x15xf32> to vector<1x1x15xf32>
    tpu.vector_store %arg10[%c2_210, %c0_211, %c384_212], %386 {strides = array<i32>} : memref<3x1x2304xf32, #tpu.memory_space<vmem>>, vector<1x1x15xf32>,
    %387 = vector.extract_strided_slice %10 {offsets = [0, 3, 1], sizes = [4, 1, 15], strides = [1, 1, 1]} : vector<4x16x16xf32> to vector<4x1x15xf32>
    %388 = vector.shape_cast %387 : vector<4x1x15xf32> to vector<4x15xf32>
    %c2_213 = arith.constant 2 : index
    %c0_214 = arith.constant 0 : index
    %c512_215 = arith.constant 512 : index
    %389 = vector.load %arg9[%c2_213, %c0_214, %c512_215] : memref<3x4x2304xf32, #tpu.memory_space<vmem>>, vector<1x4x15xf32>
    %390 = vector.shape_cast %389 : vector<1x4x15xf32> to vector<4x15xf32>
    %391 = vector.shape_cast %388 : vector<4x15xf32> to vector<1x4x15xf32>
    tpu.vector_store %arg9[%c2_213, %c0_214, %c512_215], %391 {strides = array<i32>} : memref<3x4x2304xf32, #tpu.memory_space<vmem>>, vector<1x4x15xf32>,
    %392 = vector.extract_strided_slice %12 {offsets = [0, 3, 1], sizes = [1, 1, 15], strides = [1, 1, 1]} : vector<1x16x16xf32> to vector<1x1x15xf32>
    %393 = vector.shape_cast %392 : vector<1x1x15xf32> to vector<1x15xf32>
    %c2_216 = arith.constant 2 : index
    %c0_217 = arith.constant 0 : index
    %c512_218 = arith.constant 512 : index
    %394 = vector.load %arg10[%c2_216, %c0_217, %c512_218] : memref<3x1x2304xf32, #tpu.memory_space<vmem>>, vector<1x1x15xf32>
    %395 = vector.shape_cast %394 : vector<1x1x15xf32> to vector<1x15xf32>
    %396 = vector.shape_cast %393 : vector<1x15xf32> to vector<1x1x15xf32>
    tpu.vector_store %arg10[%c2_216, %c0_217, %c512_218], %396 {strides = array<i32>} : memref<3x1x2304xf32, #tpu.memory_space<vmem>>, vector<1x1x15xf32>,
    %397 = vector.extract_strided_slice %10 {offsets = [0, 4, 1], sizes = [4, 1, 15], strides = [1, 1, 1]} : vector<4x16x16xf32> to vector<4x1x15xf32>
    %398 = vector.shape_cast %397 : vector<4x1x15xf32> to vector<4x15xf32>
    %c2_219 = arith.constant 2 : index
    %c0_220 = arith.constant 0 : index
    %c640_221 = arith.constant 640 : index
    %399 = vector.load %arg9[%c2_219, %c0_220, %c640_221] : memref<3x4x2304xf32, #tpu.memory_space<vmem>>, vector<1x4x15xf32>
    %400 = vector.shape_cast %399 : vector<1x4x15xf32> to vector<4x15xf32>
    %401 = vector.shape_cast %398 : vector<4x15xf32> to vector<1x4x15xf32>
    tpu.vector_store %arg9[%c2_219, %c0_220, %c640_221], %401 {strides = array<i32>} : memref<3x4x2304xf32, #tpu.memory_space<vmem>>, vector<1x4x15xf32>,
    %402 = vector.extract_strided_slice %12 {offsets = [0, 4, 1], sizes = [1, 1, 15], strides = [1, 1, 1]} : vector<1x16x16xf32> to vector<1x1x15xf32>
    %403 = vector.shape_cast %402 : vector<1x1x15xf32> to vector<1x15xf32>
    %c2_222 = arith.constant 2 : index
    %c0_223 = arith.constant 0 : index
    %c640_224 = arith.constant 640 : index
    %404 = vector.load %arg10[%c2_222, %c0_223, %c640_224] : memref<3x1x2304xf32, #tpu.memory_space<vmem>>, vector<1x1x15xf32>
    %405 = vector.shape_cast %404 : vector<1x1x15xf32> to vector<1x15xf32>
    %406 = vector.shape_cast %403 : vector<1x15xf32> to vector<1x1x15xf32>
    tpu.vector_store %arg10[%c2_222, %c0_223, %c640_224], %406 {strides = array<i32>} : memref<3x1x2304xf32, #tpu.memory_space<vmem>>, vector<1x1x15xf32>,
    %407 = vector.extract_strided_slice %10 {offsets = [0, 5, 1], sizes = [4, 1, 15], strides = [1, 1, 1]} : vector<4x16x16xf32> to vector<4x1x15xf32>
    %408 = vector.shape_cast %407 : vector<4x1x15xf32> to vector<4x15xf32>
    %c2_225 = arith.constant 2 : index
    %c0_226 = arith.constant 0 : index
    %c768_227 = arith.constant 768 : index
    %409 = vector.load %arg9[%c2_225, %c0_226, %c768_227] : memref<3x4x2304xf32, #tpu.memory_space<vmem>>, vector<1x4x15xf32>
    %410 = vector.shape_cast %409 : vector<1x4x15xf32> to vector<4x15xf32>
    %411 = vector.shape_cast %408 : vector<4x15xf32> to vector<1x4x15xf32>
    tpu.vector_store %arg9[%c2_225, %c0_226, %c768_227], %411 {strides = array<i32>} : memref<3x4x2304xf32, #tpu.memory_space<vmem>>, vector<1x4x15xf32>,
    %412 = vector.extract_strided_slice %12 {offsets = [0, 5, 1], sizes = [1, 1, 15], strides = [1, 1, 1]} : vector<1x16x16xf32> to vector<1x1x15xf32>
    %413 = vector.shape_cast %412 : vector<1x1x15xf32> to vector<1x15xf32>
    %c2_228 = arith.constant 2 : index
    %c0_229 = arith.constant 0 : index
    %c768_230 = arith.constant 768 : index
    %414 = vector.load %arg10[%c2_228, %c0_229, %c768_230] : memref<3x1x2304xf32, #tpu.memory_space<vmem>>, vector<1x1x15xf32>
    %415 = vector.shape_cast %414 : vector<1x1x15xf32> to vector<1x15xf32>
    %416 = vector.shape_cast %413 : vector<1x15xf32> to vector<1x1x15xf32>
    tpu.vector_store %arg10[%c2_228, %c0_229, %c768_230], %416 {strides = array<i32>} : memref<3x1x2304xf32, #tpu.memory_space<vmem>>, vector<1x1x15xf32>,
    %417 = vector.extract_strided_slice %10 {offsets = [0, 6, 1], sizes = [4, 1, 15], strides = [1, 1, 1]} : vector<4x16x16xf32> to vector<4x1x15xf32>
    %418 = vector.shape_cast %417 : vector<4x1x15xf32> to vector<4x15xf32>
    %c2_231 = arith.constant 2 : index
    %c0_232 = arith.constant 0 : index
    %c896_233 = arith.constant 896 : index
    %419 = vector.load %arg9[%c2_231, %c0_232, %c896_233] : memref<3x4x2304xf32, #tpu.memory_space<vmem>>, vector<1x4x15xf32>
    %420 = vector.shape_cast %419 : vector<1x4x15xf32> to vector<4x15xf32>
    %421 = vector.shape_cast %418 : vector<4x15xf32> to vector<1x4x15xf32>
    tpu.vector_store %arg9[%c2_231, %c0_232, %c896_233], %421 {strides = array<i32>} : memref<3x4x2304xf32, #tpu.memory_space<vmem>>, vector<1x4x15xf32>,
    %422 = vector.extract_strided_slice %12 {offsets = [0, 6, 1], sizes = [1, 1, 15], strides = [1, 1, 1]} : vector<1x16x16xf32> to vector<1x1x15xf32>
    %423 = vector.shape_cast %422 : vector<1x1x15xf32> to vector<1x15xf32>
    %c2_234 = arith.constant 2 : index
    %c0_235 = arith.constant 0 : index
    %c896_236 = arith.constant 896 : index
    %424 = vector.load %arg10[%c2_234, %c0_235, %c896_236] : memref<3x1x2304xf32, #tpu.memory_space<vmem>>, vector<1x1x15xf32>
    %425 = vector.shape_cast %424 : vector<1x1x15xf32> to vector<1x15xf32>
    %426 = vector.shape_cast %423 : vector<1x15xf32> to vector<1x1x15xf32>
    tpu.vector_store %arg10[%c2_234, %c0_235, %c896_236], %426 {strides = array<i32>} : memref<3x1x2304xf32, #tpu.memory_space<vmem>>, vector<1x1x15xf32>,
    %427 = vector.extract_strided_slice %10 {offsets = [0, 7, 1], sizes = [4, 1, 15], strides = [1, 1, 1]} : vector<4x16x16xf32> to vector<4x1x15xf32>
    %428 = vector.shape_cast %427 : vector<4x1x15xf32> to vector<4x15xf32>
    %c2_237 = arith.constant 2 : index
    %c0_238 = arith.constant 0 : index
    %c1024_239 = arith.constant 1024 : index
    %429 = vector.load %arg9[%c2_237, %c0_238, %c1024_239] : memref<3x4x2304xf32, #tpu.memory_space<vmem>>, vector<1x4x15xf32>
    %430 = vector.shape_cast %429 : vector<1x4x15xf32> to vector<4x15xf32>
    %431 = vector.shape_cast %428 : vector<4x15xf32> to vector<1x4x15xf32>
    tpu.vector_store %arg9[%c2_237, %c0_238, %c1024_239], %431 {strides = array<i32>} : memref<3x4x2304xf32, #tpu.memory_space<vmem>>, vector<1x4x15xf32>,
    %432 = vector.extract_strided_slice %12 {offsets = [0, 7, 1], sizes = [1, 1, 15], strides = [1, 1, 1]} : vector<1x16x16xf32> to vector<1x1x15xf32>
    %433 = vector.shape_cast %432 : vector<1x1x15xf32> to vector<1x15xf32>
    %c2_240 = arith.constant 2 : index
    %c0_241 = arith.constant 0 : index
    %c1024_242 = arith.constant 1024 : index
    %434 = vector.load %arg10[%c2_240, %c0_241, %c1024_242] : memref<3x1x2304xf32, #tpu.memory_space<vmem>>, vector<1x1x15xf32>
    %435 = vector.shape_cast %434 : vector<1x1x15xf32> to vector<1x15xf32>
    %436 = vector.shape_cast %433 : vector<1x15xf32> to vector<1x1x15xf32>
    tpu.vector_store %arg10[%c2_240, %c0_241, %c1024_242], %436 {strides = array<i32>} : memref<3x1x2304xf32, #tpu.memory_space<vmem>>, vector<1x1x15xf32>,
    %437 = vector.extract_strided_slice %10 {offsets = [0, 8, 1], sizes = [4, 1, 15], strides = [1, 1, 1]} : vector<4x16x16xf32> to vector<4x1x15xf32>
    %438 = vector.shape_cast %437 : vector<4x1x15xf32> to vector<4x15xf32>
    %c2_243 = arith.constant 2 : index
    %c0_244 = arith.constant 0 : index
    %c1152_245 = arith.constant 1152 : index
    %439 = vector.load %arg9[%c2_243, %c0_244, %c1152_245] : memref<3x4x2304xf32, #tpu.memory_space<vmem>>, vector<1x4x15xf32>
    %440 = vector.shape_cast %439 : vector<1x4x15xf32> to vector<4x15xf32>
    %441 = vector.shape_cast %438 : vector<4x15xf32> to vector<1x4x15xf32>
    tpu.vector_store %arg9[%c2_243, %c0_244, %c1152_245], %441 {strides = array<i32>} : memref<3x4x2304xf32, #tpu.memory_space<vmem>>, vector<1x4x15xf32>,
    %442 = vector.extract_strided_slice %12 {offsets = [0, 8, 1], sizes = [1, 1, 15], strides = [1, 1, 1]} : vector<1x16x16xf32> to vector<1x1x15xf32>
    %443 = vector.shape_cast %442 : vector<1x1x15xf32> to vector<1x15xf32>
    %c2_246 = arith.constant 2 : index
    %c0_247 = arith.constant 0 : index
    %c1152_248 = arith.constant 1152 : index
    %444 = vector.load %arg10[%c2_246, %c0_247, %c1152_248] : memref<3x1x2304xf32, #tpu.memory_space<vmem>>, vector<1x1x15xf32>
    %445 = vector.shape_cast %444 : vector<1x1x15xf32> to vector<1x15xf32>
    %446 = vector.shape_cast %443 : vector<1x15xf32> to vector<1x1x15xf32>
    tpu.vector_store %arg10[%c2_246, %c0_247, %c1152_248], %446 {strides = array<i32>} : memref<3x1x2304xf32, #tpu.memory_space<vmem>>, vector<1x1x15xf32>,
    %447 = vector.extract_strided_slice %10 {offsets = [0, 9, 1], sizes = [4, 1, 15], strides = [1, 1, 1]} : vector<4x16x16xf32> to vector<4x1x15xf32>
    %448 = vector.shape_cast %447 : vector<4x1x15xf32> to vector<4x15xf32>
    %c2_249 = arith.constant 2 : index
    %c0_250 = arith.constant 0 : index
    %c1280_251 = arith.constant 1280 : index
    %449 = vector.load %arg9[%c2_249, %c0_250, %c1280_251] : memref<3x4x2304xf32, #tpu.memory_space<vmem>>, vector<1x4x15xf32>
    %450 = vector.shape_cast %449 : vector<1x4x15xf32> to vector<4x15xf32>
    %451 = vector.shape_cast %448 : vector<4x15xf32> to vector<1x4x15xf32>
    tpu.vector_store %arg9[%c2_249, %c0_250, %c1280_251], %451 {strides = array<i32>} : memref<3x4x2304xf32, #tpu.memory_space<vmem>>, vector<1x4x15xf32>,
    %452 = vector.extract_strided_slice %12 {offsets = [0, 9, 1], sizes = [1, 1, 15], strides = [1, 1, 1]} : vector<1x16x16xf32> to vector<1x1x15xf32>
    %453 = vector.shape_cast %452 : vector<1x1x15xf32> to vector<1x15xf32>
    %c2_252 = arith.constant 2 : index
    %c0_253 = arith.constant 0 : index
    %c1280_254 = arith.constant 1280 : index
    %454 = vector.load %arg10[%c2_252, %c0_253, %c1280_254] : memref<3x1x2304xf32, #tpu.memory_space<vmem>>, vector<1x1x15xf32>
    %455 = vector.shape_cast %454 : vector<1x1x15xf32> to vector<1x15xf32>
    %456 = vector.shape_cast %453 : vector<1x15xf32> to vector<1x1x15xf32>
    tpu.vector_store %arg10[%c2_252, %c0_253, %c1280_254], %456 {strides = array<i32>} : memref<3x1x2304xf32, #tpu.memory_space<vmem>>, vector<1x1x15xf32>,
    %457 = vector.extract_strided_slice %10 {offsets = [0, 10, 1], sizes = [4, 1, 15], strides = [1, 1, 1]} : vector<4x16x16xf32> to vector<4x1x15xf32>
    %458 = vector.shape_cast %457 : vector<4x1x15xf32> to vector<4x15xf32>
    %c2_255 = arith.constant 2 : index
    %c0_256 = arith.constant 0 : index
    %c1408_257 = arith.constant 1408 : index
    %459 = vector.load %arg9[%c2_255, %c0_256, %c1408_257] : memref<3x4x2304xf32, #tpu.memory_space<vmem>>, vector<1x4x15xf32>
    %460 = vector.shape_cast %459 : vector<1x4x15xf32> to vector<4x15xf32>
    %461 = vector.shape_cast %458 : vector<4x15xf32> to vector<1x4x15xf32>
    tpu.vector_store %arg9[%c2_255, %c0_256, %c1408_257], %461 {strides = array<i32>} : memref<3x4x2304xf32, #tpu.memory_space<vmem>>, vector<1x4x15xf32>,
    %462 = vector.extract_strided_slice %12 {offsets = [0, 10, 1], sizes = [1, 1, 15], strides = [1, 1, 1]} : vector<1x16x16xf32> to vector<1x1x15xf32>
    %463 = vector.shape_cast %462 : vector<1x1x15xf32> to vector<1x15xf32>
    %c2_258 = arith.constant 2 : index
    %c0_259 = arith.constant 0 : index
    %c1408_260 = arith.constant 1408 : index
    %464 = vector.load %arg10[%c2_258, %c0_259, %c1408_260] : memref<3x1x2304xf32, #tpu.memory_space<vmem>>, vector<1x1x15xf32>
    %465 = vector.shape_cast %464 : vector<1x1x15xf32> to vector<1x15xf32>
    %466 = vector.shape_cast %463 : vector<1x15xf32> to vector<1x1x15xf32>
    tpu.vector_store %arg10[%c2_258, %c0_259, %c1408_260], %466 {strides = array<i32>} : memref<3x1x2304xf32, #tpu.memory_space<vmem>>, vector<1x1x15xf32>,
    %467 = vector.extract_strided_slice %10 {offsets = [0, 11, 1], sizes = [4, 1, 15], strides = [1, 1, 1]} : vector<4x16x16xf32> to vector<4x1x15xf32>
    %468 = vector.shape_cast %467 : vector<4x1x15xf32> to vector<4x15xf32>
    %c2_261 = arith.constant 2 : index
    %c0_262 = arith.constant 0 : index
    %c1536_263 = arith.constant 1536 : index
    %469 = vector.load %arg9[%c2_261, %c0_262, %c1536_263] : memref<3x4x2304xf32, #tpu.memory_space<vmem>>, vector<1x4x15xf32>
    %470 = vector.shape_cast %469 : vector<1x4x15xf32> to vector<4x15xf32>
    %471 = vector.shape_cast %468 : vector<4x15xf32> to vector<1x4x15xf32>
    tpu.vector_store %arg9[%c2_261, %c0_262, %c1536_263], %471 {strides = array<i32>} : memref<3x4x2304xf32, #tpu.memory_space<vmem>>, vector<1x4x15xf32>,
    %472 = vector.extract_strided_slice %12 {offsets = [0, 11, 1], sizes = [1, 1, 15], strides = [1, 1, 1]} : vector<1x16x16xf32> to vector<1x1x15xf32>
    %473 = vector.shape_cast %472 : vector<1x1x15xf32> to vector<1x15xf32>
    %c2_264 = arith.constant 2 : index
    %c0_265 = arith.constant 0 : index
    %c1536_266 = arith.constant 1536 : index
    %474 = vector.load %arg10[%c2_264, %c0_265, %c1536_266] : memref<3x1x2304xf32, #tpu.memory_space<vmem>>, vector<1x1x15xf32>
    %475 = vector.shape_cast %474 : vector<1x1x15xf32> to vector<1x15xf32>
    %476 = vector.shape_cast %473 : vector<1x15xf32> to vector<1x1x15xf32>
    tpu.vector_store %arg10[%c2_264, %c0_265, %c1536_266], %476 {strides = array<i32>} : memref<3x1x2304xf32, #tpu.memory_space<vmem>>, vector<1x1x15xf32>,
    %477 = vector.extract_strided_slice %10 {offsets = [0, 12, 1], sizes = [4, 1, 15], strides = [1, 1, 1]} : vector<4x16x16xf32> to vector<4x1x15xf32>
    %478 = vector.shape_cast %477 : vector<4x1x15xf32> to vector<4x15xf32>
    %c2_267 = arith.constant 2 : index
    %c0_268 = arith.constant 0 : index
    %c1664_269 = arith.constant 1664 : index
    %479 = vector.load %arg9[%c2_267, %c0_268, %c1664_269] : memref<3x4x2304xf32, #tpu.memory_space<vmem>>, vector<1x4x15xf32>
    %480 = vector.shape_cast %479 : vector<1x4x15xf32> to vector<4x15xf32>
    %481 = vector.shape_cast %478 : vector<4x15xf32> to vector<1x4x15xf32>
    tpu.vector_store %arg9[%c2_267, %c0_268, %c1664_269], %481 {strides = array<i32>} : memref<3x4x2304xf32, #tpu.memory_space<vmem>>, vector<1x4x15xf32>,
    %482 = vector.extract_strided_slice %12 {offsets = [0, 12, 1], sizes = [1, 1, 15], strides = [1, 1, 1]} : vector<1x16x16xf32> to vector<1x1x15xf32>
    %483 = vector.shape_cast %482 : vector<1x1x15xf32> to vector<1x15xf32>
    %c2_270 = arith.constant 2 : index
    %c0_271 = arith.constant 0 : index
    %c1664_272 = arith.constant 1664 : index
    %484 = vector.load %arg10[%c2_270, %c0_271, %c1664_272] : memref<3x1x2304xf32, #tpu.memory_space<vmem>>, vector<1x1x15xf32>
    %485 = vector.shape_cast %484 : vector<1x1x15xf32> to vector<1x15xf32>
    %486 = vector.shape_cast %483 : vector<1x15xf32> to vector<1x1x15xf32>
    tpu.vector_store %arg10[%c2_270, %c0_271, %c1664_272], %486 {strides = array<i32>} : memref<3x1x2304xf32, #tpu.memory_space<vmem>>, vector<1x1x15xf32>,
    %487 = vector.extract_strided_slice %10 {offsets = [0, 13, 1], sizes = [4, 1, 15], strides = [1, 1, 1]} : vector<4x16x16xf32> to vector<4x1x15xf32>
    %488 = vector.shape_cast %487 : vector<4x1x15xf32> to vector<4x15xf32>
    %c2_273 = arith.constant 2 : index
    %c0_274 = arith.constant 0 : index
    %c1792_275 = arith.constant 1792 : index
    %489 = vector.load %arg9[%c2_273, %c0_274, %c1792_275] : memref<3x4x2304xf32, #tpu.memory_space<vmem>>, vector<1x4x15xf32>
    %490 = vector.shape_cast %489 : vector<1x4x15xf32> to vector<4x15xf32>
    %491 = vector.shape_cast %488 : vector<4x15xf32> to vector<1x4x15xf32>
    tpu.vector_store %arg9[%c2_273, %c0_274, %c1792_275], %491 {strides = array<i32>} : memref<3x4x2304xf32, #tpu.memory_space<vmem>>, vector<1x4x15xf32>,
    %492 = vector.extract_strided_slice %12 {offsets = [0, 13, 1], sizes = [1, 1, 15], strides = [1, 1, 1]} : vector<1x16x16xf32> to vector<1x1x15xf32>
    %493 = vector.shape_cast %492 : vector<1x1x15xf32> to vector<1x15xf32>
    %c2_276 = arith.constant 2 : index
    %c0_277 = arith.constant 0 : index
    %c1792_278 = arith.constant 1792 : index
    %494 = vector.load %arg10[%c2_276, %c0_277, %c1792_278] : memref<3x1x2304xf32, #tpu.memory_space<vmem>>, vector<1x1x15xf32>
    %495 = vector.shape_cast %494 : vector<1x1x15xf32> to vector<1x15xf32>
    %496 = vector.shape_cast %493 : vector<1x15xf32> to vector<1x1x15xf32>
    tpu.vector_store %arg10[%c2_276, %c0_277, %c1792_278], %496 {strides = array<i32>} : memref<3x1x2304xf32, #tpu.memory_space<vmem>>, vector<1x1x15xf32>,
    %497 = vector.extract_strided_slice %10 {offsets = [0, 14, 1], sizes = [4, 1, 15], strides = [1, 1, 1]} : vector<4x16x16xf32> to vector<4x1x15xf32>
    %498 = vector.shape_cast %497 : vector<4x1x15xf32> to vector<4x15xf32>
    %c2_279 = arith.constant 2 : index
    %c0_280 = arith.constant 0 : index
    %c1920_281 = arith.constant 1920 : index
    %499 = vector.load %arg9[%c2_279, %c0_280, %c1920_281] : memref<3x4x2304xf32, #tpu.memory_space<vmem>>, vector<1x4x15xf32>
    %500 = vector.shape_cast %499 : vector<1x4x15xf32> to vector<4x15xf32>
    %501 = vector.shape_cast %498 : vector<4x15xf32> to vector<1x4x15xf32>
    tpu.vector_store %arg9[%c2_279, %c0_280, %c1920_281], %501 {strides = array<i32>} : memref<3x4x2304xf32, #tpu.memory_space<vmem>>, vector<1x4x15xf32>,
    %502 = vector.extract_strided_slice %12 {offsets = [0, 14, 1], sizes = [1, 1, 15], strides = [1, 1, 1]} : vector<1x16x16xf32> to vector<1x1x15xf32>
    %503 = vector.shape_cast %502 : vector<1x1x15xf32> to vector<1x15xf32>
    %c2_282 = arith.constant 2 : index
    %c0_283 = arith.constant 0 : index
    %c1920_284 = arith.constant 1920 : index
    %504 = vector.load %arg10[%c2_282, %c0_283, %c1920_284] : memref<3x1x2304xf32, #tpu.memory_space<vmem>>, vector<1x1x15xf32>
    %505 = vector.shape_cast %504 : vector<1x1x15xf32> to vector<1x15xf32>
    %506 = vector.shape_cast %503 : vector<1x15xf32> to vector<1x1x15xf32>
    tpu.vector_store %arg10[%c2_282, %c0_283, %c1920_284], %506 {strides = array<i32>} : memref<3x1x2304xf32, #tpu.memory_space<vmem>>, vector<1x1x15xf32>,
    %507 = vector.extract_strided_slice %10 {offsets = [0, 15, 1], sizes = [4, 1, 15], strides = [1, 1, 1]} : vector<4x16x16xf32> to vector<4x1x15xf32>
    %508 = vector.shape_cast %507 : vector<4x1x15xf32> to vector<4x15xf32>
    %c2_285 = arith.constant 2 : index
    %c0_286 = arith.constant 0 : index
    %c2048_287 = arith.constant 2048 : index
    %509 = vector.load %arg9[%c2_285, %c0_286, %c2048_287] : memref<3x4x2304xf32, #tpu.memory_space<vmem>>, vector<1x4x15xf32>
    %510 = vector.shape_cast %509 : vector<1x4x15xf32> to vector<4x15xf32>
    %511 = vector.shape_cast %508 : vector<4x15xf32> to vector<1x4x15xf32>
    tpu.vector_store %arg9[%c2_285, %c0_286, %c2048_287], %511 {strides = array<i32>} : memref<3x4x2304xf32, #tpu.memory_space<vmem>>, vector<1x4x15xf32>,
    %512 = vector.extract_strided_slice %12 {offsets = [0, 15, 1], sizes = [1, 1, 15], strides = [1, 1, 1]} : vector<1x16x16xf32> to vector<1x1x15xf32>
    %513 = vector.shape_cast %512 : vector<1x1x15xf32> to vector<1x15xf32>
    %c2_288 = arith.constant 2 : index
    %c0_289 = arith.constant 0 : index
    %c2048_290 = arith.constant 2048 : index
    %514 = vector.load %arg10[%c2_288, %c0_289, %c2048_290] : memref<3x1x2304xf32, #tpu.memory_space<vmem>>, vector<1x1x15xf32>
    %515 = vector.shape_cast %514 : vector<1x1x15xf32> to vector<1x15xf32>
    %516 = vector.shape_cast %513 : vector<1x15xf32> to vector<1x1x15xf32>
    tpu.vector_store %arg10[%c2_288, %c0_289, %c2048_290], %516 {strides = array<i32>} : memref<3x1x2304xf32, #tpu.memory_space<vmem>>, vector<1x1x15xf32>,
    %c0_291 = arith.constant 0 : index
    %c0_292 = arith.constant 0 : index
    %517 = vector.load %arg3[%c0_291, %c0_292] : memref<8x36xf32, #tpu.memory_space<vmem>>, vector<8x36xf32>
    %c0_293 = arith.constant 0 : index
    %c0_294 = arith.constant 0 : index
    %518 = vector.load %arg4[%c0_293, %c0_294] : memref<8x1xf32, #tpu.memory_space<vmem>>, vector<8x1xf32>
    %c0_i32 = arith.constant 0 : i32
    %c512_i32 = arith.constant 512 : i32
    %519 = arith.muli %c0_i32, %c512_i32 : i32
    %520 = tpu.assume_multiple %519, 128 : i32
    %cst_295 = arith.constant 0.000000e+00 : f32
    %521 = vector.broadcast %cst_295 : f32 to vector<1x512xf32>
    %c0_i32_296 = arith.constant 0 : i32
    %522 = arith.addi %520, %c0_i32_296 : i32
    %523 = tpu.assume_multiple %522, 128 : i32
    %c0_297 = arith.constant 0 : index
    %c0_298 = arith.constant 0 : index
    %524 = arith.index_cast %523 : i32 to index
    %525 = vector.load %arg9[%c0_297, %c0_298, %524] : memref<3x4x2304xf32, #tpu.memory_space<vmem>>, vector<1x4x512xf32>
    %526 = vector.shape_cast %525 : vector<1x4x512xf32> to vector<4x512xf32>
    %c0_299 = arith.constant 0 : index
    %c0_300 = arith.constant 0 : index
    %527 = vector.load %arg11[%c0_299, %c0_300] : memref<36x512xf32, #tpu.memory_space<vmem>>, vector<4x512xf32>
    tpu.vector_store %arg11[%c0_299, %c0_300], %526 {strides = array<i32>} : memref<36x512xf32, #tpu.memory_space<vmem>>, vector<4x512xf32>,
    %c0_301 = arith.constant 0 : index
    %c0_302 = arith.constant 0 : index
    %528 = arith.index_cast %523 : i32 to index
    %529 = vector.load %arg10[%c0_301, %c0_302, %528] : memref<3x1x2304xf32, #tpu.memory_space<vmem>>, vector<1x1x512xf32>
    %530 = vector.shape_cast %529 : vector<1x1x512xf32> to vector<1x512xf32>
    %531 = arith.addf %521, %530 : vector<1x512xf32>
    %c0_i32_303 = arith.constant 0 : i32
    %532 = arith.addi %520, %c0_i32_303 : i32
    %533 = tpu.assume_multiple %532, 128 : i32
    %c1_304 = arith.constant 1 : index
    %c0_305 = arith.constant 0 : index
    %534 = arith.index_cast %533 : i32 to index
    %535 = vector.load %arg9[%c1_304, %c0_305, %534] : memref<3x4x2304xf32, #tpu.memory_space<vmem>>, vector<1x4x512xf32>
    %536 = vector.shape_cast %535 : vector<1x4x512xf32> to vector<4x512xf32>
    %c4 = arith.constant 4 : index
    %c0_306 = arith.constant 0 : index
    %537 = vector.load %arg11[%c4, %c0_306] : memref<36x512xf32, #tpu.memory_space<vmem>>, vector<4x512xf32>
    tpu.vector_store %arg11[%c4, %c0_306], %536 {strides = array<i32>} : memref<36x512xf32, #tpu.memory_space<vmem>>, vector<4x512xf32>,
    %c1_307 = arith.constant 1 : index
    %c0_308 = arith.constant 0 : index
    %538 = arith.index_cast %533 : i32 to index
    %539 = vector.load %arg10[%c1_307, %c0_308, %538] : memref<3x1x2304xf32, #tpu.memory_space<vmem>>, vector<1x1x512xf32>
    %540 = vector.shape_cast %539 : vector<1x1x512xf32> to vector<1x512xf32>
    %541 = arith.addf %531, %540 : vector<1x512xf32>
    %c0_i32_309 = arith.constant 0 : i32
    %542 = arith.addi %520, %c0_i32_309 : i32
    %543 = tpu.assume_multiple %542, 128 : i32
    %c2_310 = arith.constant 2 : index
    %c0_311 = arith.constant 0 : index
    %544 = arith.index_cast %543 : i32 to index
    %545 = vector.load %arg9[%c2_310, %c0_311, %544] : memref<3x4x2304xf32, #tpu.memory_space<vmem>>, vector<1x4x512xf32>
    %546 = vector.shape_cast %545 : vector<1x4x512xf32> to vector<4x512xf32>
    %c8 = arith.constant 8 : index
    %c0_312 = arith.constant 0 : index
    %547 = vector.load %arg11[%c8, %c0_312] : memref<36x512xf32, #tpu.memory_space<vmem>>, vector<4x512xf32>
    tpu.vector_store %arg11[%c8, %c0_312], %546 {strides = array<i32>} : memref<36x512xf32, #tpu.memory_space<vmem>>, vector<4x512xf32>,
    %c2_313 = arith.constant 2 : index
    %c0_314 = arith.constant 0 : index
    %548 = arith.index_cast %543 : i32 to index
    %549 = vector.load %arg10[%c2_313, %c0_314, %548] : memref<3x1x2304xf32, #tpu.memory_space<vmem>>, vector<1x1x512xf32>
    %550 = vector.shape_cast %549 : vector<1x1x512xf32> to vector<1x512xf32>
    %551 = arith.addf %541, %550 : vector<1x512xf32>
    %c128_i32 = arith.constant 128 : i32
    %552 = arith.addi %520, %c128_i32 : i32
    %553 = tpu.assume_multiple %552, 128 : i32
    %c0_315 = arith.constant 0 : index
    %c0_316 = arith.constant 0 : index
    %554 = arith.index_cast %553 : i32 to index
    %555 = vector.load %arg9[%c0_315, %c0_316, %554] : memref<3x4x2304xf32, #tpu.memory_space<vmem>>, vector<1x4x512xf32>
    %556 = vector.shape_cast %555 : vector<1x4x512xf32> to vector<4x512xf32>
    %c12 = arith.constant 12 : index
    %c0_317 = arith.constant 0 : index
    %557 = vector.load %arg11[%c12, %c0_317] : memref<36x512xf32, #tpu.memory_space<vmem>>, vector<4x512xf32>
    tpu.vector_store %arg11[%c12, %c0_317], %556 {strides = array<i32>} : memref<36x512xf32, #tpu.memory_space<vmem>>, vector<4x512xf32>,
    %c0_318 = arith.constant 0 : index
    %c0_319 = arith.constant 0 : index
    %558 = arith.index_cast %553 : i32 to index
    %559 = vector.load %arg10[%c0_318, %c0_319, %558] : memref<3x1x2304xf32, #tpu.memory_space<vmem>>, vector<1x1x512xf32>
    %560 = vector.shape_cast %559 : vector<1x1x512xf32> to vector<1x512xf32>
    %561 = arith.addf %551, %560 : vector<1x512xf32>
    %c128_i32_320 = arith.constant 128 : i32
    %562 = arith.addi %520, %c128_i32_320 : i32
    %563 = tpu.assume_multiple %562, 128 : i32
    %c1_321 = arith.constant 1 : index
    %c0_322 = arith.constant 0 : index
    %564 = arith.index_cast %563 : i32 to index
    %565 = vector.load %arg9[%c1_321, %c0_322, %564] : memref<3x4x2304xf32, #tpu.memory_space<vmem>>, vector<1x4x512xf32>
    %566 = vector.shape_cast %565 : vector<1x4x512xf32> to vector<4x512xf32>
    %c16 = arith.constant 16 : index
    %c0_323 = arith.constant 0 : index
    %567 = vector.load %arg11[%c16, %c0_323] : memref<36x512xf32, #tpu.memory_space<vmem>>, vector<4x512xf32>
    tpu.vector_store %arg11[%c16, %c0_323], %566 {strides = array<i32>} : memref<36x512xf32, #tpu.memory_space<vmem>>, vector<4x512xf32>,
    %c1_324 = arith.constant 1 : index
    %c0_325 = arith.constant 0 : index
    %568 = arith.index_cast %563 : i32 to index
    %569 = vector.load %arg10[%c1_324, %c0_325, %568] : memref<3x1x2304xf32, #tpu.memory_space<vmem>>, vector<1x1x512xf32>
    %570 = vector.shape_cast %569 : vector<1x1x512xf32> to vector<1x512xf32>
    %571 = arith.addf %561, %570 : vector<1x512xf32>
    %c128_i32_326 = arith.constant 128 : i32
    %572 = arith.addi %520, %c128_i32_326 : i32
    %573 = tpu.assume_multiple %572, 128 : i32
    %c2_327 = arith.constant 2 : index
    %c0_328 = arith.constant 0 : index
    %574 = arith.index_cast %573 : i32 to index
    %575 = vector.load %arg9[%c2_327, %c0_328, %574] : memref<3x4x2304xf32, #tpu.memory_space<vmem>>, vector<1x4x512xf32>
    %576 = vector.shape_cast %575 : vector<1x4x512xf32> to vector<4x512xf32>
    %c20 = arith.constant 20 : index
    %c0_329 = arith.constant 0 : index
    %577 = vector.load %arg11[%c20, %c0_329] : memref<36x512xf32, #tpu.memory_space<vmem>>, vector<4x512xf32>
    tpu.vector_store %arg11[%c20, %c0_329], %576 {strides = array<i32>} : memref<36x512xf32, #tpu.memory_space<vmem>>, vector<4x512xf32>,
    %c2_330 = arith.constant 2 : index
    %c0_331 = arith.constant 0 : index
    %578 = arith.index_cast %573 : i32 to index
    %579 = vector.load %arg10[%c2_330, %c0_331, %578] : memref<3x1x2304xf32, #tpu.memory_space<vmem>>, vector<1x1x512xf32>
    %580 = vector.shape_cast %579 : vector<1x1x512xf32> to vector<1x512xf32>
    %581 = arith.addf %571, %580 : vector<1x512xf32>
    %c256_i32 = arith.constant 256 : i32
    %582 = arith.addi %520, %c256_i32 : i32
    %583 = tpu.assume_multiple %582, 128 : i32
    %c0_332 = arith.constant 0 : index
    %c0_333 = arith.constant 0 : index
    %584 = arith.index_cast %583 : i32 to index
    %585 = vector.load %arg9[%c0_332, %c0_333, %584] : memref<3x4x2304xf32, #tpu.memory_space<vmem>>, vector<1x4x512xf32>
    %586 = vector.shape_cast %585 : vector<1x4x512xf32> to vector<4x512xf32>
    %c24 = arith.constant 24 : index
    %c0_334 = arith.constant 0 : index
    %587 = vector.load %arg11[%c24, %c0_334] : memref<36x512xf32, #tpu.memory_space<vmem>>, vector<4x512xf32>
    tpu.vector_store %arg11[%c24, %c0_334], %586 {strides = array<i32>} : memref<36x512xf32, #tpu.memory_space<vmem>>, vector<4x512xf32>,
    %c0_335 = arith.constant 0 : index
    %c0_336 = arith.constant 0 : index
    %588 = arith.index_cast %583 : i32 to index
    %589 = vector.load %arg10[%c0_335, %c0_336, %588] : memref<3x1x2304xf32, #tpu.memory_space<vmem>>, vector<1x1x512xf32>
    %590 = vector.shape_cast %589 : vector<1x1x512xf32> to vector<1x512xf32>
    %591 = arith.addf %581, %590 : vector<1x512xf32>
    %c256_i32_337 = arith.constant 256 : i32
    %592 = arith.addi %520, %c256_i32_337 : i32
    %593 = tpu.assume_multiple %592, 128 : i32
    %c1_338 = arith.constant 1 : index
    %c0_339 = arith.constant 0 : index
    %594 = arith.index_cast %593 : i32 to index
    %595 = vector.load %arg9[%c1_338, %c0_339, %594] : memref<3x4x2304xf32, #tpu.memory_space<vmem>>, vector<1x4x512xf32>
    %596 = vector.shape_cast %595 : vector<1x4x512xf32> to vector<4x512xf32>
    %c28 = arith.constant 28 : index
    %c0_340 = arith.constant 0 : index
    %597 = vector.load %arg11[%c28, %c0_340] : memref<36x512xf32, #tpu.memory_space<vmem>>, vector<4x512xf32>
    tpu.vector_store %arg11[%c28, %c0_340], %596 {strides = array<i32>} : memref<36x512xf32, #tpu.memory_space<vmem>>, vector<4x512xf32>,
    %c1_341 = arith.constant 1 : index
    %c0_342 = arith.constant 0 : index
    %598 = arith.index_cast %593 : i32 to index
    %599 = vector.load %arg10[%c1_341, %c0_342, %598] : memref<3x1x2304xf32, #tpu.memory_space<vmem>>, vector<1x1x512xf32>
    %600 = vector.shape_cast %599 : vector<1x1x512xf32> to vector<1x512xf32>
    %601 = arith.addf %591, %600 : vector<1x512xf32>
    %c256_i32_343 = arith.constant 256 : i32
    %602 = arith.addi %520, %c256_i32_343 : i32
    %603 = tpu.assume_multiple %602, 128 : i32
    %c2_344 = arith.constant 2 : index
    %c0_345 = arith.constant 0 : index
    %604 = arith.index_cast %603 : i32 to index
    %605 = vector.load %arg9[%c2_344, %c0_345, %604] : memref<3x4x2304xf32, #tpu.memory_space<vmem>>, vector<1x4x512xf32>
    %606 = vector.shape_cast %605 : vector<1x4x512xf32> to vector<4x512xf32>
    %c32 = arith.constant 32 : index
    %c0_346 = arith.constant 0 : index
    %607 = vector.load %arg11[%c32, %c0_346] : memref<36x512xf32, #tpu.memory_space<vmem>>, vector<4x512xf32>
    tpu.vector_store %arg11[%c32, %c0_346], %606 {strides = array<i32>} : memref<36x512xf32, #tpu.memory_space<vmem>>, vector<4x512xf32>,
    %c2_347 = arith.constant 2 : index
    %c0_348 = arith.constant 0 : index
    %608 = arith.index_cast %603 : i32 to index
    %609 = vector.load %arg10[%c2_347, %c0_348, %608] : memref<3x1x2304xf32, #tpu.memory_space<vmem>>, vector<1x1x512xf32>
    %610 = vector.shape_cast %609 : vector<1x1x512xf32> to vector<1x512xf32>
    %611 = arith.addf %601, %610 : vector<1x512xf32>
    %c0_349 = arith.constant 0 : index
    %c0_350 = arith.constant 0 : index
    %612 = vector.load %arg11[%c0_349, %c0_350] : memref<36x512xf32, #tpu.memory_space<vmem>>, vector<36x512xf32>
    %cst_351 = arith.constant dense<0.000000e+00> : vector<8x512xf32>
    %613 = tpu.matmul %517, %612, %cst_351 {dimension_numbers = #tpu.dot_dimension_numbers<[1], [0], [0], [1], [0, 0, 1, 1], [], []>} : vector<8x36xf32>, vector<36x512xf32>, vector<8x512xf32> -> vector<8x512xf32>
    %cst_352 = arith.constant 9.99999993E-9 : f32
    %614 = vector.broadcast %cst_352 : f32 to vector<1x512xf32>
    %615 = arith.addf %611, %614 : vector<1x512xf32>
    %616 = tpu.reciprocal %615 {approx = true} : vector<1x512xf32> -> vector<1x512xf32>
    %617 = arith.mulf %615, %616 : vector<1x512xf32>
    %cst_353 = arith.constant 2.000000e+00 : f32
    %618 = vector.broadcast %cst_353 : f32 to vector<1x512xf32>
    %619 = arith.subf %618, %617 : vector<1x512xf32>
    %620 = arith.mulf %616, %619 : vector<1x512xf32>
    %cst_354 = arith.constant 0.000000e+00 : f32
    %cst_355 = arith.constant 1.000000e+00 : f32
    %621 = vector.broadcast %cst_354 : f32 to vector<1x512xf32>
    %622 = arith.maximumf %621, %611 : vector<1x512xf32>
    %623 = vector.broadcast %cst_355 : f32 to vector<1x512xf32>
    %624 = arith.minimumf %623, %622 : vector<1x512xf32>
    %cst_356 = arith.constant 3.600000e+01 : f32
    %625 = vector.broadcast %cst_356 : f32 to vector<1x512xf32>
    %626 = arith.mulf %625, %620 : vector<1x512xf32>
    %627 = arith.mulf %626, %624 : vector<1x512xf32>
    %628 = vector.broadcast %518 : vector<8x1xf32> to vector<8x512xf32>
    %629 = arith.subf %613, %628 : vector<8x512xf32>
    %630 = vector.broadcast %627 : vector<1x512xf32> to vector<8x512xf32>
    %631 = arith.mulf %629, %630 : vector<8x512xf32>
    %632 = vector.broadcast %518 : vector<8x1xf32> to vector<8x512xf32>
    %633 = arith.addf %631, %632 : vector<8x512xf32>
    %634 = vector.broadcast %624 : vector<1x512xf32> to vector<8x512xf32>
    %635 = arith.mulf %633, %634 : vector<8x512xf32>
    %cst_357 = arith.constant 0.000000e+00 : f32
    %636 = vector.broadcast %cst_357 : f32 to vector<8x512xf32>
    %637 = arith.maximumf %635, %636 : vector<8x512xf32>
    %c0_358 = arith.constant 0 : index
    %c0_359 = arith.constant 0 : index
    %638 = arith.index_cast %520 : i32 to index
    %639 = vector.load %arg7[%c0_358, %c0_359, %638] : memref<1x8x2048xf32, #tpu.memory_space<vmem>>, vector<1x8x512xf32>
    %640 = vector.shape_cast %639 : vector<1x8x512xf32> to vector<8x512xf32>
    %641 = vector.shape_cast %637 : vector<8x512xf32> to vector<1x8x512xf32>
    tpu.vector_store %arg7[%c0_358, %c0_359, %638], %641 {strides = array<i32>} : memref<1x8x2048xf32, #tpu.memory_space<vmem>>, vector<1x8x512xf32>,
    %c0_360 = arith.constant 0 : index
    %c0_361 = arith.constant 0 : index
    %642 = arith.index_cast %520 : i32 to index
    %643 = vector.load %arg8[%c0_360, %c0_361, %642] : memref<1x1x2048xf32, #tpu.memory_space<vmem>>, vector<1x1x512xf32>
    %644 = vector.shape_cast %643 : vector<1x1x512xf32> to vector<1x512xf32>
    %645 = vector.shape_cast %624 : vector<1x512xf32> to vector<1x1x512xf32>
    tpu.vector_store %arg8[%c0_360, %c0_361, %642], %645 {strides = array<i32>} : memref<1x1x2048xf32, #tpu.memory_space<vmem>>, vector<1x1x512xf32>,
    %c1_i32 = arith.constant 1 : i32
    %c512_i32_362 = arith.constant 512 : i32
    %646 = arith.muli %c1_i32, %c512_i32_362 : i32
    %647 = tpu.assume_multiple %646, 128 : i32
    %cst_363 = arith.constant 0.000000e+00 : f32
    %648 = vector.broadcast %cst_363 : f32 to vector<1x512xf32>
    %c0_i32_364 = arith.constant 0 : i32
    %649 = arith.addi %647, %c0_i32_364 : i32
    %650 = tpu.assume_multiple %649, 128 : i32
    %c0_365 = arith.constant 0 : index
    %c0_366 = arith.constant 0 : index
    %651 = arith.index_cast %650 : i32 to index
    %652 = vector.load %arg9[%c0_365, %c0_366, %651] : memref<3x4x2304xf32, #tpu.memory_space<vmem>>, vector<1x4x512xf32>
    %653 = vector.shape_cast %652 : vector<1x4x512xf32> to vector<4x512xf32>
    %c0_367 = arith.constant 0 : index
    %c0_368 = arith.constant 0 : index
    %654 = vector.load %arg11[%c0_367, %c0_368] : memref<36x512xf32, #tpu.memory_space<vmem>>, vector<4x512xf32>
    tpu.vector_store %arg11[%c0_367, %c0_368], %653 {strides = array<i32>} : memref<36x512xf32, #tpu.memory_space<vmem>>, vector<4x512xf32>,
    %c0_369 = arith.constant 0 : index
    %c0_370 = arith.constant 0 : index
    %655 = arith.index_cast %650 : i32 to index
    %656 = vector.load %arg10[%c0_369, %c0_370, %655] : memref<3x1x2304xf32, #tpu.memory_space<vmem>>, vector<1x1x512xf32>
    %657 = vector.shape_cast %656 : vector<1x1x512xf32> to vector<1x512xf32>
    %658 = arith.addf %648, %657 : vector<1x512xf32>
    %c0_i32_371 = arith.constant 0 : i32
    %659 = arith.addi %647, %c0_i32_371 : i32
    %660 = tpu.assume_multiple %659, 128 : i32
    %c1_372 = arith.constant 1 : index
    %c0_373 = arith.constant 0 : index
    %661 = arith.index_cast %660 : i32 to index
    %662 = vector.load %arg9[%c1_372, %c0_373, %661] : memref<3x4x2304xf32, #tpu.memory_space<vmem>>, vector<1x4x512xf32>
    %663 = vector.shape_cast %662 : vector<1x4x512xf32> to vector<4x512xf32>
    %c4_374 = arith.constant 4 : index
    %c0_375 = arith.constant 0 : index
    %664 = vector.load %arg11[%c4_374, %c0_375] : memref<36x512xf32, #tpu.memory_space<vmem>>, vector<4x512xf32>
    tpu.vector_store %arg11[%c4_374, %c0_375], %663 {strides = array<i32>} : memref<36x512xf32, #tpu.memory_space<vmem>>, vector<4x512xf32>,
    %c1_376 = arith.constant 1 : index
    %c0_377 = arith.constant 0 : index
    %665 = arith.index_cast %660 : i32 to index
    %666 = vector.load %arg10[%c1_376, %c0_377, %665] : memref<3x1x2304xf32, #tpu.memory_space<vmem>>, vector<1x1x512xf32>
    %667 = vector.shape_cast %666 : vector<1x1x512xf32> to vector<1x512xf32>
    %668 = arith.addf %658, %667 : vector<1x512xf32>
    %c0_i32_378 = arith.constant 0 : i32
    %669 = arith.addi %647, %c0_i32_378 : i32
    %670 = tpu.assume_multiple %669, 128 : i32
    %c2_379 = arith.constant 2 : index
    %c0_380 = arith.constant 0 : index
    %671 = arith.index_cast %670 : i32 to index
    %672 = vector.load %arg9[%c2_379, %c0_380, %671] : memref<3x4x2304xf32, #tpu.memory_space<vmem>>, vector<1x4x512xf32>
    %673 = vector.shape_cast %672 : vector<1x4x512xf32> to vector<4x512xf32>
    %c8_381 = arith.constant 8 : index
    %c0_382 = arith.constant 0 : index
    %674 = vector.load %arg11[%c8_381, %c0_382] : memref<36x512xf32, #tpu.memory_space<vmem>>, vector<4x512xf32>
    tpu.vector_store %arg11[%c8_381, %c0_382], %673 {strides = array<i32>} : memref<36x512xf32, #tpu.memory_space<vmem>>, vector<4x512xf32>,
    %c2_383 = arith.constant 2 : index
    %c0_384 = arith.constant 0 : index
    %675 = arith.index_cast %670 : i32 to index
    %676 = vector.load %arg10[%c2_383, %c0_384, %675] : memref<3x1x2304xf32, #tpu.memory_space<vmem>>, vector<1x1x512xf32>
    %677 = vector.shape_cast %676 : vector<1x1x512xf32> to vector<1x512xf32>
    %678 = arith.addf %668, %677 : vector<1x512xf32>
    %c128_i32_385 = arith.constant 128 : i32
    %679 = arith.addi %647, %c128_i32_385 : i32
    %680 = tpu.assume_multiple %679, 128 : i32
    %c0_386 = arith.constant 0 : index
    %c0_387 = arith.constant 0 : index
    %681 = arith.index_cast %680 : i32 to index
    %682 = vector.load %arg9[%c0_386, %c0_387, %681] : memref<3x4x2304xf32, #tpu.memory_space<vmem>>, vector<1x4x512xf32>
    %683 = vector.shape_cast %682 : vector<1x4x512xf32> to vector<4x512xf32>
    %c12_388 = arith.constant 12 : index
    %c0_389 = arith.constant 0 : index
    %684 = vector.load %arg11[%c12_388, %c0_389] : memref<36x512xf32, #tpu.memory_space<vmem>>, vector<4x512xf32>
    tpu.vector_store %arg11[%c12_388, %c0_389], %683 {strides = array<i32>} : memref<36x512xf32, #tpu.memory_space<vmem>>, vector<4x512xf32>,
    %c0_390 = arith.constant 0 : index
    %c0_391 = arith.constant 0 : index
    %685 = arith.index_cast %680 : i32 to index
    %686 = vector.load %arg10[%c0_390, %c0_391, %685] : memref<3x1x2304xf32, #tpu.memory_space<vmem>>, vector<1x1x512xf32>
    %687 = vector.shape_cast %686 : vector<1x1x512xf32> to vector<1x512xf32>
    %688 = arith.addf %678, %687 : vector<1x512xf32>
    %c128_i32_392 = arith.constant 128 : i32
    %689 = arith.addi %647, %c128_i32_392 : i32
    %690 = tpu.assume_multiple %689, 128 : i32
    %c1_393 = arith.constant 1 : index
    %c0_394 = arith.constant 0 : index
    %691 = arith.index_cast %690 : i32 to index
    %692 = vector.load %arg9[%c1_393, %c0_394, %691] : memref<3x4x2304xf32, #tpu.memory_space<vmem>>, vector<1x4x512xf32>
    %693 = vector.shape_cast %692 : vector<1x4x512xf32> to vector<4x512xf32>
    %c16_395 = arith.constant 16 : index
    %c0_396 = arith.constant 0 : index
    %694 = vector.load %arg11[%c16_395, %c0_396] : memref<36x512xf32, #tpu.memory_space<vmem>>, vector<4x512xf32>
    tpu.vector_store %arg11[%c16_395, %c0_396], %693 {strides = array<i32>} : memref<36x512xf32, #tpu.memory_space<vmem>>, vector<4x512xf32>,
    %c1_397 = arith.constant 1 : index
    %c0_398 = arith.constant 0 : index
    %695 = arith.index_cast %690 : i32 to index
    %696 = vector.load %arg10[%c1_397, %c0_398, %695] : memref<3x1x2304xf32, #tpu.memory_space<vmem>>, vector<1x1x512xf32>
    %697 = vector.shape_cast %696 : vector<1x1x512xf32> to vector<1x512xf32>
    %698 = arith.addf %688, %697 : vector<1x512xf32>
    %c128_i32_399 = arith.constant 128 : i32
    %699 = arith.addi %647, %c128_i32_399 : i32
    %700 = tpu.assume_multiple %699, 128 : i32
    %c2_400 = arith.constant 2 : index
    %c0_401 = arith.constant 0 : index
    %701 = arith.index_cast %700 : i32 to index
    %702 = vector.load %arg9[%c2_400, %c0_401, %701] : memref<3x4x2304xf32, #tpu.memory_space<vmem>>, vector<1x4x512xf32>
    %703 = vector.shape_cast %702 : vector<1x4x512xf32> to vector<4x512xf32>
    %c20_402 = arith.constant 20 : index
    %c0_403 = arith.constant 0 : index
    %704 = vector.load %arg11[%c20_402, %c0_403] : memref<36x512xf32, #tpu.memory_space<vmem>>, vector<4x512xf32>
    tpu.vector_store %arg11[%c20_402, %c0_403], %703 {strides = array<i32>} : memref<36x512xf32, #tpu.memory_space<vmem>>, vector<4x512xf32>,
    %c2_404 = arith.constant 2 : index
    %c0_405 = arith.constant 0 : index
    %705 = arith.index_cast %700 : i32 to index
    %706 = vector.load %arg10[%c2_404, %c0_405, %705] : memref<3x1x2304xf32, #tpu.memory_space<vmem>>, vector<1x1x512xf32>
    %707 = vector.shape_cast %706 : vector<1x1x512xf32> to vector<1x512xf32>
    %708 = arith.addf %698, %707 : vector<1x512xf32>
    %c256_i32_406 = arith.constant 256 : i32
    %709 = arith.addi %647, %c256_i32_406 : i32
    %710 = tpu.assume_multiple %709, 128 : i32
    %c0_407 = arith.constant 0 : index
    %c0_408 = arith.constant 0 : index
    %711 = arith.index_cast %710 : i32 to index
    %712 = vector.load %arg9[%c0_407, %c0_408, %711] : memref<3x4x2304xf32, #tpu.memory_space<vmem>>, vector<1x4x512xf32>
    %713 = vector.shape_cast %712 : vector<1x4x512xf32> to vector<4x512xf32>
    %c24_409 = arith.constant 24 : index
    %c0_410 = arith.constant 0 : index
    %714 = vector.load %arg11[%c24_409, %c0_410] : memref<36x512xf32, #tpu.memory_space<vmem>>, vector<4x512xf32>
    tpu.vector_store %arg11[%c24_409, %c0_410], %713 {strides = array<i32>} : memref<36x512xf32, #tpu.memory_space<vmem>>, vector<4x512xf32>,
    %c0_411 = arith.constant 0 : index
    %c0_412 = arith.constant 0 : index
    %715 = arith.index_cast %710 : i32 to index
    %716 = vector.load %arg10[%c0_411, %c0_412, %715] : memref<3x1x2304xf32, #tpu.memory_space<vmem>>, vector<1x1x512xf32>
    %717 = vector.shape_cast %716 : vector<1x1x512xf32> to vector<1x512xf32>
    %718 = arith.addf %708, %717 : vector<1x512xf32>
    %c256_i32_413 = arith.constant 256 : i32
    %719 = arith.addi %647, %c256_i32_413 : i32
    %720 = tpu.assume_multiple %719, 128 : i32
    %c1_414 = arith.constant 1 : index
    %c0_415 = arith.constant 0 : index
    %721 = arith.index_cast %720 : i32 to index
    %722 = vector.load %arg9[%c1_414, %c0_415, %721] : memref<3x4x2304xf32, #tpu.memory_space<vmem>>, vector<1x4x512xf32>
    %723 = vector.shape_cast %722 : vector<1x4x512xf32> to vector<4x512xf32>
    %c28_416 = arith.constant 28 : index
    %c0_417 = arith.constant 0 : index
    %724 = vector.load %arg11[%c28_416, %c0_417] : memref<36x512xf32, #tpu.memory_space<vmem>>, vector<4x512xf32>
    tpu.vector_store %arg11[%c28_416, %c0_417], %723 {strides = array<i32>} : memref<36x512xf32, #tpu.memory_space<vmem>>, vector<4x512xf32>,
    %c1_418 = arith.constant 1 : index
    %c0_419 = arith.constant 0 : index
    %725 = arith.index_cast %720 : i32 to index
    %726 = vector.load %arg10[%c1_418, %c0_419, %725] : memref<3x1x2304xf32, #tpu.memory_space<vmem>>, vector<1x1x512xf32>
    %727 = vector.shape_cast %726 : vector<1x1x512xf32> to vector<1x512xf32>
    %728 = arith.addf %718, %727 : vector<1x512xf32>
    %c256_i32_420 = arith.constant 256 : i32
    %729 = arith.addi %647, %c256_i32_420 : i32
    %730 = tpu.assume_multiple %729, 128 : i32
    %c2_421 = arith.constant 2 : index
    %c0_422 = arith.constant 0 : index
    %731 = arith.index_cast %730 : i32 to index
    %732 = vector.load %arg9[%c2_421, %c0_422, %731] : memref<3x4x2304xf32, #tpu.memory_space<vmem>>, vector<1x4x512xf32>
    %733 = vector.shape_cast %732 : vector<1x4x512xf32> to vector<4x512xf32>
    %c32_423 = arith.constant 32 : index
    %c0_424 = arith.constant 0 : index
    %734 = vector.load %arg11[%c32_423, %c0_424] : memref<36x512xf32, #tpu.memory_space<vmem>>, vector<4x512xf32>
    tpu.vector_store %arg11[%c32_423, %c0_424], %733 {strides = array<i32>} : memref<36x512xf32, #tpu.memory_space<vmem>>, vector<4x512xf32>,
    %c2_425 = arith.constant 2 : index
    %c0_426 = arith.constant 0 : index
    %735 = arith.index_cast %730 : i32 to index
    %736 = vector.load %arg10[%c2_425, %c0_426, %735] : memref<3x1x2304xf32, #tpu.memory_space<vmem>>, vector<1x1x512xf32>
    %737 = vector.shape_cast %736 : vector<1x1x512xf32> to vector<1x512xf32>
    %738 = arith.addf %728, %737 : vector<1x512xf32>
    %c0_427 = arith.constant 0 : index
    %c0_428 = arith.constant 0 : index
    %739 = vector.load %arg11[%c0_427, %c0_428] : memref<36x512xf32, #tpu.memory_space<vmem>>, vector<36x512xf32>
    %cst_429 = arith.constant dense<0.000000e+00> : vector<8x512xf32>
    %740 = tpu.matmul %517, %739, %cst_429 {dimension_numbers = #tpu.dot_dimension_numbers<[1], [0], [0], [1], [0, 0, 1, 1], [], []>} : vector<8x36xf32>, vector<36x512xf32>, vector<8x512xf32> -> vector<8x512xf32>
    %cst_430 = arith.constant 9.99999993E-9 : f32
    %741 = vector.broadcast %cst_430 : f32 to vector<1x512xf32>
    %742 = arith.addf %738, %741 : vector<1x512xf32>
    %743 = tpu.reciprocal %742 {approx = true} : vector<1x512xf32> -> vector<1x512xf32>
    %744 = arith.mulf %742, %743 : vector<1x512xf32>
    %cst_431 = arith.constant 2.000000e+00 : f32
    %745 = vector.broadcast %cst_431 : f32 to vector<1x512xf32>
    %746 = arith.subf %745, %744 : vector<1x512xf32>
    %747 = arith.mulf %743, %746 : vector<1x512xf32>
    %cst_432 = arith.constant 0.000000e+00 : f32
    %cst_433 = arith.constant 1.000000e+00 : f32
    %748 = vector.broadcast %cst_432 : f32 to vector<1x512xf32>
    %749 = arith.maximumf %748, %738 : vector<1x512xf32>
    %750 = vector.broadcast %cst_433 : f32 to vector<1x512xf32>
    %751 = arith.minimumf %750, %749 : vector<1x512xf32>
    %cst_434 = arith.constant 3.600000e+01 : f32
    %752 = vector.broadcast %cst_434 : f32 to vector<1x512xf32>
    %753 = arith.mulf %752, %747 : vector<1x512xf32>
    %754 = arith.mulf %753, %751 : vector<1x512xf32>
    %755 = vector.broadcast %518 : vector<8x1xf32> to vector<8x512xf32>
    %756 = arith.subf %740, %755 : vector<8x512xf32>
    %757 = vector.broadcast %754 : vector<1x512xf32> to vector<8x512xf32>
    %758 = arith.mulf %756, %757 : vector<8x512xf32>
    %759 = vector.broadcast %518 : vector<8x1xf32> to vector<8x512xf32>
    %760 = arith.addf %758, %759 : vector<8x512xf32>
    %761 = vector.broadcast %751 : vector<1x512xf32> to vector<8x512xf32>
    %762 = arith.mulf %760, %761 : vector<8x512xf32>
    %cst_435 = arith.constant 0.000000e+00 : f32
    %763 = vector.broadcast %cst_435 : f32 to vector<8x512xf32>
    %764 = arith.maximumf %762, %763 : vector<8x512xf32>
    %c0_436 = arith.constant 0 : index
    %c0_437 = arith.constant 0 : index
    %765 = arith.index_cast %647 : i32 to index
    %766 = vector.load %arg7[%c0_436, %c0_437, %765] : memref<1x8x2048xf32, #tpu.memory_space<vmem>>, vector<1x8x512xf32>
    %767 = vector.shape_cast %766 : vector<1x8x512xf32> to vector<8x512xf32>
    %768 = vector.shape_cast %764 : vector<8x512xf32> to vector<1x8x512xf32>
    tpu.vector_store %arg7[%c0_436, %c0_437, %765], %768 {strides = array<i32>} : memref<1x8x2048xf32, #tpu.memory_space<vmem>>, vector<1x8x512xf32>,
    %c0_438 = arith.constant 0 : index
    %c0_439 = arith.constant 0 : index
    %769 = arith.index_cast %647 : i32 to index
    %770 = vector.load %arg8[%c0_438, %c0_439, %769] : memref<1x1x2048xf32, #tpu.memory_space<vmem>>, vector<1x1x512xf32>
    %771 = vector.shape_cast %770 : vector<1x1x512xf32> to vector<1x512xf32>
    %772 = vector.shape_cast %751 : vector<1x512xf32> to vector<1x1x512xf32>
    tpu.vector_store %arg8[%c0_438, %c0_439, %769], %772 {strides = array<i32>} : memref<1x1x2048xf32, #tpu.memory_space<vmem>>, vector<1x1x512xf32>,
    %c2_i32 = arith.constant 2 : i32
    %c512_i32_440 = arith.constant 512 : i32
    %773 = arith.muli %c2_i32, %c512_i32_440 : i32
    %774 = tpu.assume_multiple %773, 128 : i32
    %cst_441 = arith.constant 0.000000e+00 : f32
    %775 = vector.broadcast %cst_441 : f32 to vector<1x512xf32>
    %c0_i32_442 = arith.constant 0 : i32
    %776 = arith.addi %774, %c0_i32_442 : i32
    %777 = tpu.assume_multiple %776, 128 : i32
    %c0_443 = arith.constant 0 : index
    %c0_444 = arith.constant 0 : index
    %778 = arith.index_cast %777 : i32 to index
    %779 = vector.load %arg9[%c0_443, %c0_444, %778] : memref<3x4x2304xf32, #tpu.memory_space<vmem>>, vector<1x4x512xf32>
    %780 = vector.shape_cast %779 : vector<1x4x512xf32> to vector<4x512xf32>
    %c0_445 = arith.constant 0 : index
    %c0_446 = arith.constant 0 : index
    %781 = vector.load %arg11[%c0_445, %c0_446] : memref<36x512xf32, #tpu.memory_space<vmem>>, vector<4x512xf32>
    tpu.vector_store %arg11[%c0_445, %c0_446], %780 {strides = array<i32>} : memref<36x512xf32, #tpu.memory_space<vmem>>, vector<4x512xf32>,
    %c0_447 = arith.constant 0 : index
    %c0_448 = arith.constant 0 : index
    %782 = arith.index_cast %777 : i32 to index
    %783 = vector.load %arg10[%c0_447, %c0_448, %782] : memref<3x1x2304xf32, #tpu.memory_space<vmem>>, vector<1x1x512xf32>
    %784 = vector.shape_cast %783 : vector<1x1x512xf32> to vector<1x512xf32>
    %785 = arith.addf %775, %784 : vector<1x512xf32>
    %c0_i32_449 = arith.constant 0 : i32
    %786 = arith.addi %774, %c0_i32_449 : i32
    %787 = tpu.assume_multiple %786, 128 : i32
    %c1_450 = arith.constant 1 : index
    %c0_451 = arith.constant 0 : index
    %788 = arith.index_cast %787 : i32 to index
    %789 = vector.load %arg9[%c1_450, %c0_451, %788] : memref<3x4x2304xf32, #tpu.memory_space<vmem>>, vector<1x4x512xf32>
    %790 = vector.shape_cast %789 : vector<1x4x512xf32> to vector<4x512xf32>
    %c4_452 = arith.constant 4 : index
    %c0_453 = arith.constant 0 : index
    %791 = vector.load %arg11[%c4_452, %c0_453] : memref<36x512xf32, #tpu.memory_space<vmem>>, vector<4x512xf32>
    tpu.vector_store %arg11[%c4_452, %c0_453], %790 {strides = array<i32>} : memref<36x512xf32, #tpu.memory_space<vmem>>, vector<4x512xf32>,
    %c1_454 = arith.constant 1 : index
    %c0_455 = arith.constant 0 : index
    %792 = arith.index_cast %787 : i32 to index
    %793 = vector.load %arg10[%c1_454, %c0_455, %792] : memref<3x1x2304xf32, #tpu.memory_space<vmem>>, vector<1x1x512xf32>
    %794 = vector.shape_cast %793 : vector<1x1x512xf32> to vector<1x512xf32>
    %795 = arith.addf %785, %794 : vector<1x512xf32>
    %c0_i32_456 = arith.constant 0 : i32
    %796 = arith.addi %774, %c0_i32_456 : i32
    %797 = tpu.assume_multiple %796, 128 : i32
    %c2_457 = arith.constant 2 : index
    %c0_458 = arith.constant 0 : index
    %798 = arith.index_cast %797 : i32 to index
    %799 = vector.load %arg9[%c2_457, %c0_458, %798] : memref<3x4x2304xf32, #tpu.memory_space<vmem>>, vector<1x4x512xf32>
    %800 = vector.shape_cast %799 : vector<1x4x512xf32> to vector<4x512xf32>
    %c8_459 = arith.constant 8 : index
    %c0_460 = arith.constant 0 : index
    %801 = vector.load %arg11[%c8_459, %c0_460] : memref<36x512xf32, #tpu.memory_space<vmem>>, vector<4x512xf32>
    tpu.vector_store %arg11[%c8_459, %c0_460], %800 {strides = array<i32>} : memref<36x512xf32, #tpu.memory_space<vmem>>, vector<4x512xf32>,
    %c2_461 = arith.constant 2 : index
    %c0_462 = arith.constant 0 : index
    %802 = arith.index_cast %797 : i32 to index
    %803 = vector.load %arg10[%c2_461, %c0_462, %802] : memref<3x1x2304xf32, #tpu.memory_space<vmem>>, vector<1x1x512xf32>
    %804 = vector.shape_cast %803 : vector<1x1x512xf32> to vector<1x512xf32>
    %805 = arith.addf %795, %804 : vector<1x512xf32>
    %c128_i32_463 = arith.constant 128 : i32
    %806 = arith.addi %774, %c128_i32_463 : i32
    %807 = tpu.assume_multiple %806, 128 : i32
    %c0_464 = arith.constant 0 : index
    %c0_465 = arith.constant 0 : index
    %808 = arith.index_cast %807 : i32 to index
    %809 = vector.load %arg9[%c0_464, %c0_465, %808] : memref<3x4x2304xf32, #tpu.memory_space<vmem>>, vector<1x4x512xf32>
    %810 = vector.shape_cast %809 : vector<1x4x512xf32> to vector<4x512xf32>
    %c12_466 = arith.constant 12 : index
    %c0_467 = arith.constant 0 : index
    %811 = vector.load %arg11[%c12_466, %c0_467] : memref<36x512xf32, #tpu.memory_space<vmem>>, vector<4x512xf32>
    tpu.vector_store %arg11[%c12_466, %c0_467], %810 {strides = array<i32>} : memref<36x512xf32, #tpu.memory_space<vmem>>, vector<4x512xf32>,
    %c0_468 = arith.constant 0 : index
    %c0_469 = arith.constant 0 : index
    %812 = arith.index_cast %807 : i32 to index
    %813 = vector.load %arg10[%c0_468, %c0_469, %812] : memref<3x1x2304xf32, #tpu.memory_space<vmem>>, vector<1x1x512xf32>
    %814 = vector.shape_cast %813 : vector<1x1x512xf32> to vector<1x512xf32>
    %815 = arith.addf %805, %814 : vector<1x512xf32>
    %c128_i32_470 = arith.constant 128 : i32
    %816 = arith.addi %774, %c128_i32_470 : i32
    %817 = tpu.assume_multiple %816, 128 : i32
    %c1_471 = arith.constant 1 : index
    %c0_472 = arith.constant 0 : index
    %818 = arith.index_cast %817 : i32 to index
    %819 = vector.load %arg9[%c1_471, %c0_472, %818] : memref<3x4x2304xf32, #tpu.memory_space<vmem>>, vector<1x4x512xf32>
    %820 = vector.shape_cast %819 : vector<1x4x512xf32> to vector<4x512xf32>
    %c16_473 = arith.constant 16 : index
    %c0_474 = arith.constant 0 : index
    %821 = vector.load %arg11[%c16_473, %c0_474] : memref<36x512xf32, #tpu.memory_space<vmem>>, vector<4x512xf32>
    tpu.vector_store %arg11[%c16_473, %c0_474], %820 {strides = array<i32>} : memref<36x512xf32, #tpu.memory_space<vmem>>, vector<4x512xf32>,
    %c1_475 = arith.constant 1 : index
    %c0_476 = arith.constant 0 : index
    %822 = arith.index_cast %817 : i32 to index
    %823 = vector.load %arg10[%c1_475, %c0_476, %822] : memref<3x1x2304xf32, #tpu.memory_space<vmem>>, vector<1x1x512xf32>
    %824 = vector.shape_cast %823 : vector<1x1x512xf32> to vector<1x512xf32>
    %825 = arith.addf %815, %824 : vector<1x512xf32>
    %c128_i32_477 = arith.constant 128 : i32
    %826 = arith.addi %774, %c128_i32_477 : i32
    %827 = tpu.assume_multiple %826, 128 : i32
    %c2_478 = arith.constant 2 : index
    %c0_479 = arith.constant 0 : index
    %828 = arith.index_cast %827 : i32 to index
    %829 = vector.load %arg9[%c2_478, %c0_479, %828] : memref<3x4x2304xf32, #tpu.memory_space<vmem>>, vector<1x4x512xf32>
    %830 = vector.shape_cast %829 : vector<1x4x512xf32> to vector<4x512xf32>
    %c20_480 = arith.constant 20 : index
    %c0_481 = arith.constant 0 : index
    %831 = vector.load %arg11[%c20_480, %c0_481] : memref<36x512xf32, #tpu.memory_space<vmem>>, vector<4x512xf32>
    tpu.vector_store %arg11[%c20_480, %c0_481], %830 {strides = array<i32>} : memref<36x512xf32, #tpu.memory_space<vmem>>, vector<4x512xf32>,
    %c2_482 = arith.constant 2 : index
    %c0_483 = arith.constant 0 : index
    %832 = arith.index_cast %827 : i32 to index
    %833 = vector.load %arg10[%c2_482, %c0_483, %832] : memref<3x1x2304xf32, #tpu.memory_space<vmem>>, vector<1x1x512xf32>
    %834 = vector.shape_cast %833 : vector<1x1x512xf32> to vector<1x512xf32>
    %835 = arith.addf %825, %834 : vector<1x512xf32>
    %c256_i32_484 = arith.constant 256 : i32
    %836 = arith.addi %774, %c256_i32_484 : i32
    %837 = tpu.assume_multiple %836, 128 : i32
    %c0_485 = arith.constant 0 : index
    %c0_486 = arith.constant 0 : index
    %838 = arith.index_cast %837 : i32 to index
    %839 = vector.load %arg9[%c0_485, %c0_486, %838] : memref<3x4x2304xf32, #tpu.memory_space<vmem>>, vector<1x4x512xf32>
    %840 = vector.shape_cast %839 : vector<1x4x512xf32> to vector<4x512xf32>
    %c24_487 = arith.constant 24 : index
    %c0_488 = arith.constant 0 : index
    %841 = vector.load %arg11[%c24_487, %c0_488] : memref<36x512xf32, #tpu.memory_space<vmem>>, vector<4x512xf32>
    tpu.vector_store %arg11[%c24_487, %c0_488], %840 {strides = array<i32>} : memref<36x512xf32, #tpu.memory_space<vmem>>, vector<4x512xf32>,
    %c0_489 = arith.constant 0 : index
    %c0_490 = arith.constant 0 : index
    %842 = arith.index_cast %837 : i32 to index
    %843 = vector.load %arg10[%c0_489, %c0_490, %842] : memref<3x1x2304xf32, #tpu.memory_space<vmem>>, vector<1x1x512xf32>
    %844 = vector.shape_cast %843 : vector<1x1x512xf32> to vector<1x512xf32>
    %845 = arith.addf %835, %844 : vector<1x512xf32>
    %c256_i32_491 = arith.constant 256 : i32
    %846 = arith.addi %774, %c256_i32_491 : i32
    %847 = tpu.assume_multiple %846, 128 : i32
    %c1_492 = arith.constant 1 : index
    %c0_493 = arith.constant 0 : index
    %848 = arith.index_cast %847 : i32 to index
    %849 = vector.load %arg9[%c1_492, %c0_493, %848] : memref<3x4x2304xf32, #tpu.memory_space<vmem>>, vector<1x4x512xf32>
    %850 = vector.shape_cast %849 : vector<1x4x512xf32> to vector<4x512xf32>
    %c28_494 = arith.constant 28 : index
    %c0_495 = arith.constant 0 : index
    %851 = vector.load %arg11[%c28_494, %c0_495] : memref<36x512xf32, #tpu.memory_space<vmem>>, vector<4x512xf32>
    tpu.vector_store %arg11[%c28_494, %c0_495], %850 {strides = array<i32>} : memref<36x512xf32, #tpu.memory_space<vmem>>, vector<4x512xf32>,
    %c1_496 = arith.constant 1 : index
    %c0_497 = arith.constant 0 : index
    %852 = arith.index_cast %847 : i32 to index
    %853 = vector.load %arg10[%c1_496, %c0_497, %852] : memref<3x1x2304xf32, #tpu.memory_space<vmem>>, vector<1x1x512xf32>
    %854 = vector.shape_cast %853 : vector<1x1x512xf32> to vector<1x512xf32>
    %855 = arith.addf %845, %854 : vector<1x512xf32>
    %c256_i32_498 = arith.constant 256 : i32
    %856 = arith.addi %774, %c256_i32_498 : i32
    %857 = tpu.assume_multiple %856, 128 : i32
    %c2_499 = arith.constant 2 : index
    %c0_500 = arith.constant 0 : index
    %858 = arith.index_cast %857 : i32 to index
    %859 = vector.load %arg9[%c2_499, %c0_500, %858] : memref<3x4x2304xf32, #tpu.memory_space<vmem>>, vector<1x4x512xf32>
    %860 = vector.shape_cast %859 : vector<1x4x512xf32> to vector<4x512xf32>
    %c32_501 = arith.constant 32 : index
    %c0_502 = arith.constant 0 : index
    %861 = vector.load %arg11[%c32_501, %c0_502] : memref<36x512xf32, #tpu.memory_space<vmem>>, vector<4x512xf32>
    tpu.vector_store %arg11[%c32_501, %c0_502], %860 {strides = array<i32>} : memref<36x512xf32, #tpu.memory_space<vmem>>, vector<4x512xf32>,
    %c2_503 = arith.constant 2 : index
    %c0_504 = arith.constant 0 : index
    %862 = arith.index_cast %857 : i32 to index
    %863 = vector.load %arg10[%c2_503, %c0_504, %862] : memref<3x1x2304xf32, #tpu.memory_space<vmem>>, vector<1x1x512xf32>
    %864 = vector.shape_cast %863 : vector<1x1x512xf32> to vector<1x512xf32>
    %865 = arith.addf %855, %864 : vector<1x512xf32>
    %c0_505 = arith.constant 0 : index
    %c0_506 = arith.constant 0 : index
    %866 = vector.load %arg11[%c0_505, %c0_506] : memref<36x512xf32, #tpu.memory_space<vmem>>, vector<36x512xf32>
    %cst_507 = arith.constant dense<0.000000e+00> : vector<8x512xf32>
    %867 = tpu.matmul %517, %866, %cst_507 {dimension_numbers = #tpu.dot_dimension_numbers<[1], [0], [0], [1], [0, 0, 1, 1], [], []>} : vector<8x36xf32>, vector<36x512xf32>, vector<8x512xf32> -> vector<8x512xf32>
    %cst_508 = arith.constant 9.99999993E-9 : f32
    %868 = vector.broadcast %cst_508 : f32 to vector<1x512xf32>
    %869 = arith.addf %865, %868 : vector<1x512xf32>
    %870 = tpu.reciprocal %869 {approx = true} : vector<1x512xf32> -> vector<1x512xf32>
    %871 = arith.mulf %869, %870 : vector<1x512xf32>
    %cst_509 = arith.constant 2.000000e+00 : f32
    %872 = vector.broadcast %cst_509 : f32 to vector<1x512xf32>
    %873 = arith.subf %872, %871 : vector<1x512xf32>
    %874 = arith.mulf %870, %873 : vector<1x512xf32>
    %cst_510 = arith.constant 0.000000e+00 : f32
    %cst_511 = arith.constant 1.000000e+00 : f32
    %875 = vector.broadcast %cst_510 : f32 to vector<1x512xf32>
    %876 = arith.maximumf %875, %865 : vector<1x512xf32>
    %877 = vector.broadcast %cst_511 : f32 to vector<1x512xf32>
    %878 = arith.minimumf %877, %876 : vector<1x512xf32>
    %cst_512 = arith.constant 3.600000e+01 : f32
    %879 = vector.broadcast %cst_512 : f32 to vector<1x512xf32>
    %880 = arith.mulf %879, %874 : vector<1x512xf32>
    %881 = arith.mulf %880, %878 : vector<1x512xf32>
    %882 = vector.broadcast %518 : vector<8x1xf32> to vector<8x512xf32>
    %883 = arith.subf %867, %882 : vector<8x512xf32>
    %884 = vector.broadcast %881 : vector<1x512xf32> to vector<8x512xf32>
    %885 = arith.mulf %883, %884 : vector<8x512xf32>
    %886 = vector.broadcast %518 : vector<8x1xf32> to vector<8x512xf32>
    %887 = arith.addf %885, %886 : vector<8x512xf32>
    %888 = vector.broadcast %878 : vector<1x512xf32> to vector<8x512xf32>
    %889 = arith.mulf %887, %888 : vector<8x512xf32>
    %cst_513 = arith.constant 0.000000e+00 : f32
    %890 = vector.broadcast %cst_513 : f32 to vector<8x512xf32>
    %891 = arith.maximumf %889, %890 : vector<8x512xf32>
    %c0_514 = arith.constant 0 : index
    %c0_515 = arith.constant 0 : index
    %892 = arith.index_cast %774 : i32 to index
    %893 = vector.load %arg7[%c0_514, %c0_515, %892] : memref<1x8x2048xf32, #tpu.memory_space<vmem>>, vector<1x8x512xf32>
    %894 = vector.shape_cast %893 : vector<1x8x512xf32> to vector<8x512xf32>
    %895 = vector.shape_cast %891 : vector<8x512xf32> to vector<1x8x512xf32>
    tpu.vector_store %arg7[%c0_514, %c0_515, %892], %895 {strides = array<i32>} : memref<1x8x2048xf32, #tpu.memory_space<vmem>>, vector<1x8x512xf32>,
    %c0_516 = arith.constant 0 : index
    %c0_517 = arith.constant 0 : index
    %896 = arith.index_cast %774 : i32 to index
    %897 = vector.load %arg8[%c0_516, %c0_517, %896] : memref<1x1x2048xf32, #tpu.memory_space<vmem>>, vector<1x1x512xf32>
    %898 = vector.shape_cast %897 : vector<1x1x512xf32> to vector<1x512xf32>
    %899 = vector.shape_cast %878 : vector<1x512xf32> to vector<1x1x512xf32>
    tpu.vector_store %arg8[%c0_516, %c0_517, %896], %899 {strides = array<i32>} : memref<1x1x2048xf32, #tpu.memory_space<vmem>>, vector<1x1x512xf32>,
    %c3_i32 = arith.constant 3 : i32
    %c512_i32_518 = arith.constant 512 : i32
    %900 = arith.muli %c3_i32, %c512_i32_518 : i32
    %901 = tpu.assume_multiple %900, 128 : i32
    %cst_519 = arith.constant 0.000000e+00 : f32
    %902 = vector.broadcast %cst_519 : f32 to vector<1x512xf32>
    %c0_i32_520 = arith.constant 0 : i32
    %903 = arith.addi %901, %c0_i32_520 : i32
    %904 = tpu.assume_multiple %903, 128 : i32
    %c0_521 = arith.constant 0 : index
    %c0_522 = arith.constant 0 : index
    %905 = arith.index_cast %904 : i32 to index
    %906 = vector.load %arg9[%c0_521, %c0_522, %905] : memref<3x4x2304xf32, #tpu.memory_space<vmem>>, vector<1x4x512xf32>
    %907 = vector.shape_cast %906 : vector<1x4x512xf32> to vector<4x512xf32>
    %c0_523 = arith.constant 0 : index
    %c0_524 = arith.constant 0 : index
    %908 = vector.load %arg11[%c0_523, %c0_524] : memref<36x512xf32, #tpu.memory_space<vmem>>, vector<4x512xf32>
    tpu.vector_store %arg11[%c0_523, %c0_524], %907 {strides = array<i32>} : memref<36x512xf32, #tpu.memory_space<vmem>>, vector<4x512xf32>,
    %c0_525 = arith.constant 0 : index
    %c0_526 = arith.constant 0 : index
    %909 = arith.index_cast %904 : i32 to index
    %910 = vector.load %arg10[%c0_525, %c0_526, %909] : memref<3x1x2304xf32, #tpu.memory_space<vmem>>, vector<1x1x512xf32>
    %911 = vector.shape_cast %910 : vector<1x1x512xf32> to vector<1x512xf32>
    %912 = arith.addf %902, %911 : vector<1x512xf32>
    %c0_i32_527 = arith.constant 0 : i32
    %913 = arith.addi %901, %c0_i32_527 : i32
    %914 = tpu.assume_multiple %913, 128 : i32
    %c1_528 = arith.constant 1 : index
    %c0_529 = arith.constant 0 : index
    %915 = arith.index_cast %914 : i32 to index
    %916 = vector.load %arg9[%c1_528, %c0_529, %915] : memref<3x4x2304xf32, #tpu.memory_space<vmem>>, vector<1x4x512xf32>
    %917 = vector.shape_cast %916 : vector<1x4x512xf32> to vector<4x512xf32>
    %c4_530 = arith.constant 4 : index
    %c0_531 = arith.constant 0 : index
    %918 = vector.load %arg11[%c4_530, %c0_531] : memref<36x512xf32, #tpu.memory_space<vmem>>, vector<4x512xf32>
    tpu.vector_store %arg11[%c4_530, %c0_531], %917 {strides = array<i32>} : memref<36x512xf32, #tpu.memory_space<vmem>>, vector<4x512xf32>,
    %c1_532 = arith.constant 1 : index
    %c0_533 = arith.constant 0 : index
    %919 = arith.index_cast %914 : i32 to index
    %920 = vector.load %arg10[%c1_532, %c0_533, %919] : memref<3x1x2304xf32, #tpu.memory_space<vmem>>, vector<1x1x512xf32>
    %921 = vector.shape_cast %920 : vector<1x1x512xf32> to vector<1x512xf32>
    %922 = arith.addf %912, %921 : vector<1x512xf32>
    %c0_i32_534 = arith.constant 0 : i32
    %923 = arith.addi %901, %c0_i32_534 : i32
    %924 = tpu.assume_multiple %923, 128 : i32
    %c2_535 = arith.constant 2 : index
    %c0_536 = arith.constant 0 : index
    %925 = arith.index_cast %924 : i32 to index
    %926 = vector.load %arg9[%c2_535, %c0_536, %925] : memref<3x4x2304xf32, #tpu.memory_space<vmem>>, vector<1x4x512xf32>
    %927 = vector.shape_cast %926 : vector<1x4x512xf32> to vector<4x512xf32>
    %c8_537 = arith.constant 8 : index
    %c0_538 = arith.constant 0 : index
    %928 = vector.load %arg11[%c8_537, %c0_538] : memref<36x512xf32, #tpu.memory_space<vmem>>, vector<4x512xf32>
    tpu.vector_store %arg11[%c8_537, %c0_538], %927 {strides = array<i32>} : memref<36x512xf32, #tpu.memory_space<vmem>>, vector<4x512xf32>,
    %c2_539 = arith.constant 2 : index
    %c0_540 = arith.constant 0 : index
    %929 = arith.index_cast %924 : i32 to index
    %930 = vector.load %arg10[%c2_539, %c0_540, %929] : memref<3x1x2304xf32, #tpu.memory_space<vmem>>, vector<1x1x512xf32>
    %931 = vector.shape_cast %930 : vector<1x1x512xf32> to vector<1x512xf32>
    %932 = arith.addf %922, %931 : vector<1x512xf32>
    %c128_i32_541 = arith.constant 128 : i32
    %933 = arith.addi %901, %c128_i32_541 : i32
    %934 = tpu.assume_multiple %933, 128 : i32
    %c0_542 = arith.constant 0 : index
    %c0_543 = arith.constant 0 : index
    %935 = arith.index_cast %934 : i32 to index
    %936 = vector.load %arg9[%c0_542, %c0_543, %935] : memref<3x4x2304xf32, #tpu.memory_space<vmem>>, vector<1x4x512xf32>
    %937 = vector.shape_cast %936 : vector<1x4x512xf32> to vector<4x512xf32>
    %c12_544 = arith.constant 12 : index
    %c0_545 = arith.constant 0 : index
    %938 = vector.load %arg11[%c12_544, %c0_545] : memref<36x512xf32, #tpu.memory_space<vmem>>, vector<4x512xf32>
    tpu.vector_store %arg11[%c12_544, %c0_545], %937 {strides = array<i32>} : memref<36x512xf32, #tpu.memory_space<vmem>>, vector<4x512xf32>,
    %c0_546 = arith.constant 0 : index
    %c0_547 = arith.constant 0 : index
    %939 = arith.index_cast %934 : i32 to index
    %940 = vector.load %arg10[%c0_546, %c0_547, %939] : memref<3x1x2304xf32, #tpu.memory_space<vmem>>, vector<1x1x512xf32>
    %941 = vector.shape_cast %940 : vector<1x1x512xf32> to vector<1x512xf32>
    %942 = arith.addf %932, %941 : vector<1x512xf32>
    %c128_i32_548 = arith.constant 128 : i32
    %943 = arith.addi %901, %c128_i32_548 : i32
    %944 = tpu.assume_multiple %943, 128 : i32
    %c1_549 = arith.constant 1 : index
    %c0_550 = arith.constant 0 : index
    %945 = arith.index_cast %944 : i32 to index
    %946 = vector.load %arg9[%c1_549, %c0_550, %945] : memref<3x4x2304xf32, #tpu.memory_space<vmem>>, vector<1x4x512xf32>
    %947 = vector.shape_cast %946 : vector<1x4x512xf32> to vector<4x512xf32>
    %c16_551 = arith.constant 16 : index
    %c0_552 = arith.constant 0 : index
    %948 = vector.load %arg11[%c16_551, %c0_552] : memref<36x512xf32, #tpu.memory_space<vmem>>, vector<4x512xf32>
    tpu.vector_store %arg11[%c16_551, %c0_552], %947 {strides = array<i32>} : memref<36x512xf32, #tpu.memory_space<vmem>>, vector<4x512xf32>,
    %c1_553 = arith.constant 1 : index
    %c0_554 = arith.constant 0 : index
    %949 = arith.index_cast %944 : i32 to index
    %950 = vector.load %arg10[%c1_553, %c0_554, %949] : memref<3x1x2304xf32, #tpu.memory_space<vmem>>, vector<1x1x512xf32>
    %951 = vector.shape_cast %950 : vector<1x1x512xf32> to vector<1x512xf32>
    %952 = arith.addf %942, %951 : vector<1x512xf32>
    %c128_i32_555 = arith.constant 128 : i32
    %953 = arith.addi %901, %c128_i32_555 : i32
    %954 = tpu.assume_multiple %953, 128 : i32
    %c2_556 = arith.constant 2 : index
    %c0_557 = arith.constant 0 : index
    %955 = arith.index_cast %954 : i32 to index
    %956 = vector.load %arg9[%c2_556, %c0_557, %955] : memref<3x4x2304xf32, #tpu.memory_space<vmem>>, vector<1x4x512xf32>
    %957 = vector.shape_cast %956 : vector<1x4x512xf32> to vector<4x512xf32>
    %c20_558 = arith.constant 20 : index
    %c0_559 = arith.constant 0 : index
    %958 = vector.load %arg11[%c20_558, %c0_559] : memref<36x512xf32, #tpu.memory_space<vmem>>, vector<4x512xf32>
    tpu.vector_store %arg11[%c20_558, %c0_559], %957 {strides = array<i32>} : memref<36x512xf32, #tpu.memory_space<vmem>>, vector<4x512xf32>,
    %c2_560 = arith.constant 2 : index
    %c0_561 = arith.constant 0 : index
    %959 = arith.index_cast %954 : i32 to index
    %960 = vector.load %arg10[%c2_560, %c0_561, %959] : memref<3x1x2304xf32, #tpu.memory_space<vmem>>, vector<1x1x512xf32>
    %961 = vector.shape_cast %960 : vector<1x1x512xf32> to vector<1x512xf32>
    %962 = arith.addf %952, %961 : vector<1x512xf32>
    %c256_i32_562 = arith.constant 256 : i32
    %963 = arith.addi %901, %c256_i32_562 : i32
    %964 = tpu.assume_multiple %963, 128 : i32
    %c0_563 = arith.constant 0 : index
    %c0_564 = arith.constant 0 : index
    %965 = arith.index_cast %964 : i32 to index
    %966 = vector.load %arg9[%c0_563, %c0_564, %965] : memref<3x4x2304xf32, #tpu.memory_space<vmem>>, vector<1x4x512xf32>
    %967 = vector.shape_cast %966 : vector<1x4x512xf32> to vector<4x512xf32>
    %c24_565 = arith.constant 24 : index
    %c0_566 = arith.constant 0 : index
    %968 = vector.load %arg11[%c24_565, %c0_566] : memref<36x512xf32, #tpu.memory_space<vmem>>, vector<4x512xf32>
    tpu.vector_store %arg11[%c24_565, %c0_566], %967 {strides = array<i32>} : memref<36x512xf32, #tpu.memory_space<vmem>>, vector<4x512xf32>,
    %c0_567 = arith.constant 0 : index
    %c0_568 = arith.constant 0 : index
    %969 = arith.index_cast %964 : i32 to index
    %970 = vector.load %arg10[%c0_567, %c0_568, %969] : memref<3x1x2304xf32, #tpu.memory_space<vmem>>, vector<1x1x512xf32>
    %971 = vector.shape_cast %970 : vector<1x1x512xf32> to vector<1x512xf32>
    %972 = arith.addf %962, %971 : vector<1x512xf32>
    %c256_i32_569 = arith.constant 256 : i32
    %973 = arith.addi %901, %c256_i32_569 : i32
    %974 = tpu.assume_multiple %973, 128 : i32
    %c1_570 = arith.constant 1 : index
    %c0_571 = arith.constant 0 : index
    %975 = arith.index_cast %974 : i32 to index
    %976 = vector.load %arg9[%c1_570, %c0_571, %975] : memref<3x4x2304xf32, #tpu.memory_space<vmem>>, vector<1x4x512xf32>
    %977 = vector.shape_cast %976 : vector<1x4x512xf32> to vector<4x512xf32>
    %c28_572 = arith.constant 28 : index
    %c0_573 = arith.constant 0 : index
    %978 = vector.load %arg11[%c28_572, %c0_573] : memref<36x512xf32, #tpu.memory_space<vmem>>, vector<4x512xf32>
    tpu.vector_store %arg11[%c28_572, %c0_573], %977 {strides = array<i32>} : memref<36x512xf32, #tpu.memory_space<vmem>>, vector<4x512xf32>,
    %c1_574 = arith.constant 1 : index
    %c0_575 = arith.constant 0 : index
    %979 = arith.index_cast %974 : i32 to index
    %980 = vector.load %arg10[%c1_574, %c0_575, %979] : memref<3x1x2304xf32, #tpu.memory_space<vmem>>, vector<1x1x512xf32>
    %981 = vector.shape_cast %980 : vector<1x1x512xf32> to vector<1x512xf32>
    %982 = arith.addf %972, %981 : vector<1x512xf32>
    %c256_i32_576 = arith.constant 256 : i32
    %983 = arith.addi %901, %c256_i32_576 : i32
    %984 = tpu.assume_multiple %983, 128 : i32
    %c2_577 = arith.constant 2 : index
    %c0_578 = arith.constant 0 : index
    %985 = arith.index_cast %984 : i32 to index
    %986 = vector.load %arg9[%c2_577, %c0_578, %985] : memref<3x4x2304xf32, #tpu.memory_space<vmem>>, vector<1x4x512xf32>
    %987 = vector.shape_cast %986 : vector<1x4x512xf32> to vector<4x512xf32>
    %c32_579 = arith.constant 32 : index
    %c0_580 = arith.constant 0 : index
    %988 = vector.load %arg11[%c32_579, %c0_580] : memref<36x512xf32, #tpu.memory_space<vmem>>, vector<4x512xf32>
    tpu.vector_store %arg11[%c32_579, %c0_580], %987 {strides = array<i32>} : memref<36x512xf32, #tpu.memory_space<vmem>>, vector<4x512xf32>,
    %c2_581 = arith.constant 2 : index
    %c0_582 = arith.constant 0 : index
    %989 = arith.index_cast %984 : i32 to index
    %990 = vector.load %arg10[%c2_581, %c0_582, %989] : memref<3x1x2304xf32, #tpu.memory_space<vmem>>, vector<1x1x512xf32>
    %991 = vector.shape_cast %990 : vector<1x1x512xf32> to vector<1x512xf32>
    %992 = arith.addf %982, %991 : vector<1x512xf32>
    %c0_583 = arith.constant 0 : index
    %c0_584 = arith.constant 0 : index
    %993 = vector.load %arg11[%c0_583, %c0_584] : memref<36x512xf32, #tpu.memory_space<vmem>>, vector<36x512xf32>
    %cst_585 = arith.constant dense<0.000000e+00> : vector<8x512xf32>
    %994 = tpu.matmul %517, %993, %cst_585 {dimension_numbers = #tpu.dot_dimension_numbers<[1], [0], [0], [1], [0, 0, 1, 1], [], []>} : vector<8x36xf32>, vector<36x512xf32>, vector<8x512xf32> -> vector<8x512xf32>
    %cst_586 = arith.constant 9.99999993E-9 : f32
    %995 = vector.broadcast %cst_586 : f32 to vector<1x512xf32>
    %996 = arith.addf %992, %995 : vector<1x512xf32>
    %997 = tpu.reciprocal %996 {approx = true} : vector<1x512xf32> -> vector<1x512xf32>
    %998 = arith.mulf %996, %997 : vector<1x512xf32>
    %cst_587 = arith.constant 2.000000e+00 : f32
    %999 = vector.broadcast %cst_587 : f32 to vector<1x512xf32>
    %1000 = arith.subf %999, %998 : vector<1x512xf32>
    %1001 = arith.mulf %997, %1000 : vector<1x512xf32>
    %cst_588 = arith.constant 0.000000e+00 : f32
    %cst_589 = arith.constant 1.000000e+00 : f32
    %1002 = vector.broadcast %cst_588 : f32 to vector<1x512xf32>
    %1003 = arith.maximumf %1002, %992 : vector<1x512xf32>
    %1004 = vector.broadcast %cst_589 : f32 to vector<1x512xf32>
    %1005 = arith.minimumf %1004, %1003 : vector<1x512xf32>
    %cst_590 = arith.constant 3.600000e+01 : f32
    %1006 = vector.broadcast %cst_590 : f32 to vector<1x512xf32>
    %1007 = arith.mulf %1006, %1001 : vector<1x512xf32>
    %1008 = arith.mulf %1007, %1005 : vector<1x512xf32>
    %1009 = vector.broadcast %518 : vector<8x1xf32> to vector<8x512xf32>
    %1010 = arith.subf %994, %1009 : vector<8x512xf32>
    %1011 = vector.broadcast %1008 : vector<1x512xf32> to vector<8x512xf32>
    %1012 = arith.mulf %1010, %1011 : vector<8x512xf32>
    %1013 = vector.broadcast %518 : vector<8x1xf32> to vector<8x512xf32>
    %1014 = arith.addf %1012, %1013 : vector<8x512xf32>
    %1015 = vector.broadcast %1005 : vector<1x512xf32> to vector<8x512xf32>
    %1016 = arith.mulf %1014, %1015 : vector<8x512xf32>
    %cst_591 = arith.constant 0.000000e+00 : f32
    %1017 = vector.broadcast %cst_591 : f32 to vector<8x512xf32>
    %1018 = arith.maximumf %1016, %1017 : vector<8x512xf32>
    %c0_592 = arith.constant 0 : index
    %c0_593 = arith.constant 0 : index
    %1019 = arith.index_cast %901 : i32 to index
    %1020 = vector.load %arg7[%c0_592, %c0_593, %1019] : memref<1x8x2048xf32, #tpu.memory_space<vmem>>, vector<1x8x512xf32>
    %1021 = vector.shape_cast %1020 : vector<1x8x512xf32> to vector<8x512xf32>
    %1022 = vector.shape_cast %1018 : vector<8x512xf32> to vector<1x8x512xf32>
    tpu.vector_store %arg7[%c0_592, %c0_593, %1019], %1022 {strides = array<i32>} : memref<1x8x2048xf32, #tpu.memory_space<vmem>>, vector<1x8x512xf32>,
    %c0_594 = arith.constant 0 : index
    %c0_595 = arith.constant 0 : index
    %1023 = arith.index_cast %901 : i32 to index
    %1024 = vector.load %arg8[%c0_594, %c0_595, %1023] : memref<1x1x2048xf32, #tpu.memory_space<vmem>>, vector<1x1x512xf32>
    %1025 = vector.shape_cast %1024 : vector<1x1x512xf32> to vector<1x512xf32>
    %1026 = vector.shape_cast %1005 : vector<1x512xf32> to vector<1x1x512xf32>
    tpu.vector_store %arg8[%c0_594, %c0_595, %1023], %1026 {strides = array<i32>} : memref<1x1x2048xf32, #tpu.memory_space<vmem>>, vector<1x1x512xf32>,
    %c4_i32 = arith.constant 4 : i32
    return
  }
  func.func @transform_0(%arg0: i32) -> (i32, i32, i32) {
    %c0_i32 = arith.constant 0 : i32
    %c0_i32_0 = arith.constant 0 : i32
    %c0_i32_1 = arith.constant 0 : i32
    %c0_i32_2 = arith.constant 0 : i32
    return %c0_i32, %c0_i32_0, %c0_i32_1 : i32, i32, i32
  }
  func.func @transform_1(%arg0: i32) -> (i32, i32, i32) {
    %c0_i32 = arith.constant 0 : i32
    %c0_i32_0 = arith.constant 0 : i32
    %c0_i32_1 = arith.constant 0 : i32
    %c0_i32_2 = arith.constant 0 : i32
    return %c0_i32, %c0_i32_0, %c0_i32_1 : i32, i32, i32
  }
  func.func @transform_2(%arg0: i32) -> (i32, i32) {
    %c0_i32 = arith.constant 0 : i32
    %c0_i32_0 = arith.constant 0 : i32
    %c0_i32_1 = arith.constant 0 : i32
    return %c0_i32, %c0_i32_0 : i32, i32
  }
  func.func @transform_3(%arg0: i32) -> (i32, i32) {
    %c0_i32 = arith.constant 0 : i32
    %c0_i32_0 = arith.constant 0 : i32
    %c0_i32_1 = arith.constant 0 : i32
    return %c0_i32, %c0_i32_0 : i32, i32
  }
  func.func @transform_4(%arg0: i32) -> (i32, i32, i32, i32) {
    %c0_i32 = arith.constant 0 : i32
    %c0_i32_0 = arith.constant 0 : i32
    %c0_i32_1 = arith.constant 0 : i32
    %c0_i32_2 = arith.constant 0 : i32
    return %arg0, %c0_i32, %c0_i32_0, %c0_i32_1 : i32, i32, i32, i32
  }
  func.func @transform_5(%arg0: i32) -> (i32, i32, i32, i32) {
    %c0_i32 = arith.constant 0 : i32
    %c0_i32_0 = arith.constant 0 : i32
    %c0_i32_1 = arith.constant 0 : i32
    %c0_i32_2 = arith.constant 0 : i32
    return %arg0, %c0_i32, %c0_i32_0, %c0_i32_1 : i32, i32, i32, i32
  }
  func.func @transform_6(%arg0: i32) -> (i32, i32, i32) {
    %c0_i32 = arith.constant 0 : i32
    %c0_i32_0 = arith.constant 0 : i32
    %c0_i32_1 = arith.constant 0 : i32
    return %arg0, %c0_i32, %c0_i32_0 : i32, i32, i32
  }
  func.func @transform_7(%arg0: i32) -> (i32, i32, i32) {
    %c0_i32 = arith.constant 0 : i32
    %c0_i32_0 = arith.constant 0 : i32
    %c0_i32_1 = arith.constant 0 : i32
    return %arg0, %c0_i32, %c0_i32_0 : i32, i32, i32
  }
}

</mosaic_0001>

<llo_original>
// kernel: partial_conv_layer.1
$region0: #{partial_conv_layer.1}
  #allocation0 [shape = 'u32[]', space=smem, size = 0x4, offset = 0x4, fixed_abs, tag = 'smem constant byte address 0x4 - core index']
  #allocation1 [shape = 'u32[72,128]{1,0:T(1,128)}', space=vmem, size = 0x9000, scoped, tag = 'internal scratch']
  #allocation2 [shape = 'f32[3,4,2304]{2,1,0:T(4,128)}', space=vmem, size = 0x1b000, scoped, tag = 'scratch operand']
  #allocation3 [shape = 'f32[3,1,2304]{2,1,0:T(1,128)}', space=vmem, size = 0x6c00, scoped, tag = 'scratch operand']
  #allocation4 [shape = 'f32[36,512]{1,0:T(8,128)}', space=vmem, size = 0x14000, scoped, tag = 'scratch operand']
  %s0 = inlined_call_operand.vmem [shape: f32[4,1,1], index: 0, kind: input, shape index: {}]
  %s1 = inlined_call_operand.vmem [shape: f32[4,1,1], index: 1, kind: input, shape index: {}]
  %s2 = inlined_call_operand.vmem [shape: f32[8,36], index: 2, kind: input, shape index: {}]
  %s3 = inlined_call_operand.vmem [shape: f32[8,1], index: 3, kind: input, shape index: {}]
  %s4 = inlined_call_operand.vmem [shape: f32[2,4,16,16], index: 4, kind: input, shape index: {}]
  %s5 = inlined_call_operand.vmem [shape: f32[2,4,16,16], index: 5, kind: input, shape index: {}]
  %s6 = inlined_call_operand.vmem [shape: f32[2,8,2048], index: 6, kind: output, shape index: {0}]
  %s7 = inlined_call_operand.vmem [shape: f32[2,1,2048], index: 7, kind: output, shape index: {1}]
  %8 = xla_tuple %s6, %s7
  %s9 = sld [smem:[#allocation0]]
  $region65: #{partial_conv_layer.1} parent=0
    _
  %s11 = ssub.s32 1, %s9
  %s12 = scalar_select 0, %s11, %s9
  loop: start=0, step=1, limit=4
  $region2: #{partial_conv_layer.1} parent=0 // loop_pre_header
    _
  $region3: #{partial_conv_layer.1} parent=0 // loop_header
    %s14 = sphi 0, %s18
    %p15 = scmp.ge.s32.totalorder %s14, 4
    %s22 = sphi 0, %s22
    %s24 = sphi 0, %s22
    %s25 = sphi 0, %s24
    %s39 = sphi 0, %s25
    %s43 = sphi 0, %s43
    %s45 = sphi 0, %s43
    %s46 = sphi 0, %s45
    %s60 = sphi 0, %s46
    %s64 = sphi 0, %s64
    %s66 = sphi 0, %s64
    %s67 = sphi 0, %s66
    %s81 = sphi 0, %s67
    %s85 = sphi 0, %s85
    %s87 = sphi 0, %s85
    %s88 = sphi 0, %s87
    %s102 = sphi 0, %s88
    %s108 = sphi 0, %s110
    %s111 = sphi 0, %s108
    %s112 = sphi 0, %s111
    %s128 = sphi 0, %s112
    %s134 = sphi 0, %s136
    %s137 = sphi 0, %s134
    %s138 = sphi 0, %s137
    %s154 = sphi 0, %s138
    %s160 = sphi 0, %s162
    %s163 = sphi 0, %s160
    %s164 = sphi 0, %s163
    %s180 = sphi 0, %s164
    %s186 = sphi 0, %s188
    %s189 = sphi 0, %s186
    %s190 = sphi 0, %s189
    %s206 = sphi 0, %s190
  $region4: #{partial_conv_layer.1} parent=0 // loop_header_branch
    %17 = sbr.rel (%p15) target = $region8
  $region5: #{partial_conv_layer.1} parent=0 // loop_body
    %s19 = ssub.s32 %s14, 1
    %s20 = ssub.s32 %s14, 2
    %s21 = sadd.s32 %s14, 1
    %s23 = sadd.s32 %s22, 1
    %p26 = scmp.eq.s32.totalorder %s14, 1
    %p27 = scmp.ne.s32.totalorder %s22, %s24
    %p28 = scmp.eq.s32.totalorder %s14, 0
    %p29 = por %p27, %p28
    %p30 = scmp.ne.s32.totalorder %s22, %s24
    %p31 = scmp.eq.s32.totalorder %s19, 1
    %p32 = por %p30, %p31
    %p33 = scmp.ne.s32.totalorder %s24, %s25
    %p34 = scmp.eq.s32.totalorder %s19, 0
    %p35 = por %p33, %p34
    %p36 = scmp.ne.s32.totalorder %s24, %s25
    %p37 = scmp.eq.s32.totalorder %s20, 1
    %p38 = por %p36, %p37
    %p40 = scmp.ne.s32.totalorder %s25, %s39
    %p41 = scmp.eq.s32.totalorder %s20, 0
    %p42 = por %p40, %p41
    %s44 = sadd.s32 %s43, 1
    %p47 = scmp.eq.s32.totalorder %s14, 1
    %p48 = scmp.ne.s32.totalorder %s43, %s45
    %p49 = scmp.eq.s32.totalorder %s14, 0
    %p50 = por %p48, %p49
    %p51 = scmp.ne.s32.totalorder %s43, %s45
    %p52 = scmp.eq.s32.totalorder %s19, 1
    %p53 = por %p51, %p52
    %p54 = scmp.ne.s32.totalorder %s45, %s46
    %p55 = scmp.eq.s32.totalorder %s19, 0
    %p56 = por %p54, %p55
    %p57 = scmp.ne.s32.totalorder %s45, %s46
    %p58 = scmp.eq.s32.totalorder %s20, 1
    %p59 = por %p57, %p58
    %p61 = scmp.ne.s32.totalorder %s46, %s60
    %p62 = scmp.eq.s32.totalorder %s20, 0
    %p63 = por %p61, %p62
    %s65 = sadd.s32 %s64, 1
    %p68 = scmp.eq.s32.totalorder %s14, 1
    %p69 = scmp.ne.s32.totalorder %s64, %s66
    %p70 = scmp.eq.s32.totalorder %s14, 0
    %p71 = por %p69, %p70
    %p72 = scmp.ne.s32.totalorder %s64, %s66
    %p73 = scmp.eq.s32.totalorder %s19, 1
    %p74 = por %p72, %p73
    %p75 = scmp.ne.s32.totalorder %s66, %s67
    %p76 = scmp.eq.s32.totalorder %s19, 0
    %p77 = por %p75, %p76
    %p78 = scmp.ne.s32.totalorder %s66, %s67
    %p79 = scmp.eq.s32.totalorder %s20, 1
    %p80 = por %p78, %p79
    %p82 = scmp.ne.s32.totalorder %s67, %s81
    %p83 = scmp.eq.s32.totalorder %s20, 0
    %p84 = por %p82, %p83
    %s86 = sadd.s32 %s85, 1
    %p89 = scmp.eq.s32.totalorder %s14, 1
    %p90 = scmp.ne.s32.totalorder %s85, %s87
    %p91 = scmp.eq.s32.totalorder %s14, 0
    %p92 = por %p90, %p91
    %p93 = scmp.ne.s32.totalorder %s85, %s87
    %p94 = scmp.eq.s32.totalorder %s19, 1
    %p95 = por %p93, %p94
    %p96 = scmp.ne.s32.totalorder %s87, %s88
    %p97 = scmp.eq.s32.totalorder %s19, 0
    %p98 = por %p96, %p97
    %p99 = scmp.ne.s32.totalorder %s87, %s88
    %p100 = scmp.eq.s32.totalorder %s20, 1
    %p101 = por %p99, %p100
    %p103 = scmp.ne.s32.totalorder %s88, %s102
    %p104 = scmp.eq.s32.totalorder %s20, 0
    %p105 = por %p103, %p104
    %s106 = ssub.s32 %s14, %s21
    %p107 = scmp.eq.s32.totalorder %s106, 0
    %s109 = sadd.s32 %s108, 1
    %s110 = scalar_select %p107, %s108, %s109
    %p113 = pneg %p107
    %p114 = scmp.eq.s32.totalorder %s14, 1
    %p115 = por %p113, %p114
    %p116 = scmp.ne.s32.totalorder %s108, %s111
    %p117 = scmp.eq.s32.totalorder %s14, 0
    %p118 = por %p116, %p117
    %p119 = scmp.ne.s32.totalorder %s108, %s111
    %p120 = scmp.eq.s32.totalorder %s19, 1
    %p121 = por %p119, %p120
    %p122 = scmp.ne.s32.totalorder %s111, %s112
    %p123 = scmp.eq.s32.totalorder %s19, 0
    %p124 = por %p122, %p123
    %p125 = scmp.ne.s32.totalorder %s111, %s112
    %p126 = scmp.eq.s32.totalorder %s20, 1
    %p127 = por %p125, %p126
    %p129 = scmp.ne.s32.totalorder %s112, %s128
    %p130 = scmp.eq.s32.totalorder %s20, 0
    %p131 = por %p129, %p130
    %s132 = ssub.s32 %s14, %s21
    %p133 = scmp.eq.s32.totalorder %s132, 0
    %s135 = sadd.s32 %s134, 1
    %s136 = scalar_select %p133, %s134, %s135
    %p139 = pneg %p133
    %p140 = scmp.eq.s32.totalorder %s14, 1
    %p141 = por %p139, %p140
    %p142 = scmp.ne.s32.totalorder %s134, %s137
    %p143 = scmp.eq.s32.totalorder %s14, 0
    %p144 = por %p142, %p143
    %p145 = scmp.ne.s32.totalorder %s134, %s137
    %p146 = scmp.eq.s32.totalorder %s19, 1
    %p147 = por %p145, %p146
    %p148 = scmp.ne.s32.totalorder %s137, %s138
    %p149 = scmp.eq.s32.totalorder %s19, 0
    %p150 = por %p148, %p149
    %p151 = scmp.ne.s32.totalorder %s137, %s138
    %p152 = scmp.eq.s32.totalorder %s20, 1
    %p153 = por %p151, %p152
    %p155 = scmp.ne.s32.totalorder %s138, %s154
    %p156 = scmp.eq.s32.totalorder %s20, 0
    %p157 = por %p155, %p156
    %s158 = ssub.s32 %s14, %s21
    %p159 = scmp.eq.s32.totalorder %s158, 0
    %s161 = sadd.s32 %s160, 1
    %s162 = scalar_select %p159, %s160, %s161
    %p165 = pneg %p159
    %p166 = scmp.eq.s32.totalorder %s14, 1
    %p167 = por %p165, %p166
    %p168 = scmp.ne.s32.totalorder %s160, %s163
    %p169 = scmp.eq.s32.totalorder %s14, 0
    %p170 = por %p168, %p169
    %p171 = scmp.ne.s32.totalorder %s160, %s163
    %p172 = scmp.eq.s32.totalorder %s19, 1
    %p173 = por %p171, %p172
    %p174 = scmp.ne.s32.totalorder %s163, %s164
    %p175 = scmp.eq.s32.totalorder %s19, 0
    %p176 = por %p174, %p175
    %p177 = scmp.ne.s32.totalorder %s163, %s164
    %p178 = scmp.eq.s32.totalorder %s20, 1
    %p179 = por %p177, %p178
    %p181 = scmp.ne.s32.totalorder %s164, %s180
    %p182 = scmp.eq.s32.totalorder %s20, 0
    %p183 = por %p181, %p182
    %s184 = ssub.s32 %s14, %s21
    %p185 = scmp.eq.s32.totalorder %s184, 0
    %s187 = sadd.s32 %s186, 1
    %s188 = scalar_select %p185, %s186, %s187
    %p191 = pneg %p185
    %p192 = scmp.eq.s32.totalorder %s14, 1
    %p193 = por %p191, %p192
    %p194 = scmp.ne.s32.totalorder %s186, %s189
    %p195 = scmp.eq.s32.totalorder %s14, 0
    %p196 = por %p194, %p195
    %p197 = scmp.ne.s32.totalorder %s186, %s189
    %p198 = scmp.eq.s32.totalorder %s19, 1
    %p199 = por %p197, %p198
    %p200 = scmp.ne.s32.totalorder %s189, %s190
    %p201 = scmp.eq.s32.totalorder %s19, 0
    %p202 = por %p200, %p201
    %p203 = scmp.ne.s32.totalorder %s189, %s190
    %p204 = scmp.eq.s32.totalorder %s20, 1
    %p205 = por %p203, %p204
    %p207 = scmp.ne.s32.totalorder %s190, %s206
    %p208 = scmp.eq.s32.totalorder %s20, 0
    %p209 = por %p207, %p208
    %p210 = scmp.le.s32.totalorder 1, %s14
    %p211 = scmp.lt.s32.totalorder %s14, 3
    %p212 = pnand %p210, %p211
    %p213 = pneg %p212
    // Predicated region
    $region9: #{partial_conv_layer.1} parent=5 // pred_check
      _
    $region10: #{partial_conv_layer.1} parent=5 // pred_check_branch
      %215 = sbr.rel (%p212) target = $region12
    $region11: #{partial_conv_layer.1} parent=5 // pred_region
      %s216 = ssub.s32 %s14, 1
      // Predicated region
      $region13: #{partial_conv_layer.1} parent=11 // pred_check
        %p217 = pneg %p35
      $region14: #{partial_conv_layer.1} parent=11 // pred_check_branch
        %219 = sbr.rel (%p217) target = $region16
      $region15: #{partial_conv_layer.1} parent=11 // pred_region
        _
      $region16: #{partial_conv_layer.1} parent=11 // pred_fallthru
        _
      // Predicated region
      $region17: #{partial_conv_layer.1} parent=11 // pred_check
        %p220 = pneg %p56
      $region18: #{partial_conv_layer.1} parent=11 // pred_check_branch
        %222 = sbr.rel (%p220) target = $region20
      $region19: #{partial_conv_layer.1} parent=11 // pred_region
        _
      $region20: #{partial_conv_layer.1} parent=11 // pred_fallthru
        _
      // Predicated region
      $region21: #{partial_conv_layer.1} parent=11 // pred_check
        %p223 = pneg %p77
      $region22: #{partial_conv_layer.1} parent=11 // pred_check_branch
        %225 = sbr.rel (%p223) target = $region24
      $region23: #{partial_conv_layer.1} parent=11 // pred_region
        _
      $region24: #{partial_conv_layer.1} parent=11 // pred_fallthru
        _
      // Predicated region
      $region25: #{partial_conv_layer.1} parent=11 // pred_check
        %p226 = pneg %p98
      $region26: #{partial_conv_layer.1} parent=11 // pred_check_branch
        %228 = sbr.rel (%p226) target = $region28
      $region27: #{partial_conv_layer.1} parent=11 // pred_region
        _
      $region28: #{partial_conv_layer.1} parent=11 // pred_fallthru
        _
    $region12: #{partial_conv_layer.1} parent=5 // pred_fallthru
      _
    %p229 = scmp.lt.s32.totalorder %s14, 2
    // Predicated region
    $region29: #{partial_conv_layer.1} parent=5 // pred_check
      %p230 = pneg %p229
    $region30: #{partial_conv_layer.1} parent=5 // pred_check_branch
      %232 = sbr.rel (%p230) target = $region32
    $region31: #{partial_conv_layer.1} parent=5 // pred_region
      // Predicated region
      $region33: #{partial_conv_layer.1} parent=31 // pred_check
        %p233 = pneg %p118
      $region34: #{partial_conv_layer.1} parent=31 // pred_check_branch
        %235 = sbr.rel (%p233) target = $region36
      $region35: #{partial_conv_layer.1} parent=31 // pred_region
        %p236 = scmp.lt.s32.totalorder %s14, 1
        %s237 = scalar_select %p236, %s14, 1
        %s238 = smul.addr %s237, 8
        %s239 = smul.addr %s238, 8
        %s240 = scalar_lea.vmem %s4, %s239
      $region36: #{partial_conv_layer.1} parent=31 // pred_fallthru
        _
      // Predicated region
      $region37: #{partial_conv_layer.1} parent=31 // pred_check
        %p241 = pneg %p144
      $region38: #{partial_conv_layer.1} parent=31 // pred_check_branch
        %243 = sbr.rel (%p241) target = $region40
      $region39: #{partial_conv_layer.1} parent=31 // pred_region
        %p244 = scmp.lt.s32.totalorder %s14, 1
        %s245 = scalar_select %p244, %s14, 1
        %s246 = smul.addr %s245, 8
        %s247 = smul.addr %s246, 8
        %s248 = scalar_lea.vmem %s5, %s247
      $region40: #{partial_conv_layer.1} parent=31 // pred_fallthru
        _
    $region32: #{partial_conv_layer.1} parent=5 // pred_fallthru
      _
    %p249 = scmp.le.s32.totalorder 1, %s14
    %p250 = scmp.lt.s32.totalorder %s14, 3
    %p251 = pnand %p249, %p250
    %p252 = pneg %p251
    // Predicated region
    $region41: #{partial_conv_layer.1} parent=5 // pred_check
      _
    $region42: #{partial_conv_layer.1} parent=5 // pred_check_branch
      %254 = sbr.rel (%p251) target = $region44
    $region43: #{partial_conv_layer.1} parent=5 // pred_region
      %s255 = ssub.s32 %s14, 1
      %p256 = pneg %p35
      %p257 = pneg %p32
      %p258 = pneg %p56
      %p259 = pneg %p53
      %p260 = pneg %p77
      %p261 = pneg %p74
      %p262 = pneg %p98
      %p263 = pneg %p95
      %p264 = scmp.lt.s32.totalorder %s19, 1
      %s265 = scalar_select %p264, %s19, 1
      %s266 = smul.addr %s265, 8
      %s267 = smul.addr %s266, 8
      %s268 = scalar_lea.vmem %s4, %s267
      %p269 = pneg %p124
      %p270 = pneg %p121
      %p271 = scmp.lt.s32.totalorder %s19, 1
      %s272 = scalar_select %p271, %s19, 1
      %s273 = smul.addr %s272, 8
      %s274 = smul.addr %s273, 8
      %s275 = scalar_lea.vmem %s5, %s274
      %p276 = pneg %p150
      %p277 = pneg %p147
      %p278 = pneg %p176
      %p279 = pneg %p173
      %p280 = scmp.lt.s32.totalorder %s19, 1
      %s281 = scalar_select %p280, %s19, 1
      %s282 = smul.addr %s281, 16
      %s283 = smul.addr %s282, 8
      %s284 = scalar_lea.vmem %s6, %s283
      %p285 = pneg %p202
      %p286 = pneg %p199
      %p287 = scmp.lt.s32.totalorder %s19, 1
      %s288 = scalar_select %p287, %s19, 1
      %s289 = smul.addr %s288, 16
      %s290 = scalar_lea.vmem %s7, %s289
      %p291 = scmp.lt.s32.totalorder %s19, 1
      %s292 = scalar_select %p291, %s19, 1
      %s293 = smul.addr %s292, 8
      %s294 = smul.addr %s293, 8
      %s295 = scalar_lea.vmem %s4, %s294
      %p296 = scmp.lt.s32.totalorder %s19, 1
      %s297 = scalar_select %p296, %s19, 1
      %s298 = smul.addr %s297, 8
      %s299 = smul.addr %s298, 8
      %s300 = scalar_lea.vmem %s5, %s299
      %p301 = scmp.lt.s32.totalorder %s19, 1
      %s302 = scalar_select %p301, %s19, 1
      %s303 = smul.addr %s302, 16
      %s304 = smul.addr %s303, 8
      %s305 = scalar_lea.vmem %s6, %s304
      %p306 = scmp.lt.s32.totalorder %s19, 1
      %s307 = scalar_select %p306, %s19, 1
      %s308 = smul.addr %s307, 16
      %s309 = scalar_lea.vmem %s7, %s308
      %v310 = vld [vmem:[%s295] sm:$0xff]
      %v311 = vld [vmem:[%s295 + $0x8] sm:$0xff]
      %v312 = vld [vmem:[%s295 + $0x10] sm:$0xff]
      %v313 = vld [vmem:[%s295 + $0x18] sm:$0xff]
      %v314 = vld [vmem:[%s295 + $0x20] sm:$0xff]
      %v315 = vld [vmem:[%s295 + $0x28] sm:$0xff]
      %v316 = vld [vmem:[%s295 + $0x30] sm:$0xff]
      %v317 = vld [vmem:[%s295 + $0x38] sm:$0xff]
      %v318 = vld [vmem:[%s300] sm:$0xff]
      %v319 = vld [vmem:[%s300 + $0x8] sm:$0xff]
      %v320 = vld [vmem:[%s300 + $0x10] sm:$0xff]
      %v321 = vld [vmem:[%s300 + $0x18] sm:$0xff]
      %v322 = vld [vmem:[%s300 + $0x20] sm:$0xff]
      %v323 = vld [vmem:[%s300 + $0x28] sm:$0xff]
      %v324 = vld [vmem:[%s300 + $0x30] sm:$0xff]
      %v325 = vld [vmem:[%s300 + $0x38] sm:$0xff]
      %v326 = vld [vmem:[%s0] sm:$0x1]
      %v327 = vld [vmem:[%s0 + $0x1] sm:$0x1]
      %v328 = vld [vmem:[%s0 + $0x2] sm:$0x1]
      %v329 = vld [vmem:[%s0 + $0x3] sm:$0x1]
      %v334 = vperm.slane %v326, 0
      %v335 = vperm.slane %v327, 0
      %v336 = vperm.slane %v328, 0
      %v337 = vperm.slane %v329, 0
      %338 = vset.pattern.permute.xlu0 0
      %339 = vperm.xlu0 %338, %v334
      %v340 = vpop.permute.xlu0 %339
      %342 = vset.pattern.permute.xlu0 0
      %343 = vperm.xlu0 %342, %v335
      %v344 = vpop.permute.xlu0 %343
      %346 = vset.pattern.permute.xlu0 0
      %347 = vperm.xlu0 %346, %v336
      %v348 = vpop.permute.xlu0 %347
      %350 = vset.pattern.permute.xlu0 0
      %351 = vperm.xlu0 %350, %v337
      %v352 = vpop.permute.xlu0 %351
      %v354 = vmul.f32 %v310, %v340
      %v355 = vmul.f32 %v311, %v340
      %v356 = vmul.f32 %v312, %v344
      %v357 = vmul.f32 %v313, %v344
      %v358 = vmul.f32 %v314, %v348
      %v359 = vmul.f32 %v315, %v348
      %v360 = vmul.f32 %v316, %v352
      %v361 = vmul.f32 %v317, %v352
      %v362 = vld [vmem:[%s1] sm:$0x1]
      %v363 = vld [vmem:[%s1 + $0x1] sm:$0x1]
      %v364 = vld [vmem:[%s1 + $0x2] sm:$0x1]
      %v365 = vld [vmem:[%s1 + $0x3] sm:$0x1]
      %v370 = vperm.slane %v362, 0
      %v371 = vperm.slane %v363, 0
      %v372 = vperm.slane %v364, 0
      %v373 = vperm.slane %v365, 0
      %374 = vset.pattern.permute.xlu0 0
      %375 = vperm.xlu0 %374, %v370
      %v376 = vpop.permute.xlu0 %375
      %378 = vset.pattern.permute.xlu0 0
      %379 = vperm.xlu0 %378, %v371
      %v380 = vpop.permute.xlu0 %379
      %382 = vset.pattern.permute.xlu0 0
      %383 = vperm.xlu0 %382, %v372
      %v384 = vpop.permute.xlu0 %383
      %386 = vset.pattern.permute.xlu0 0
      %387 = vperm.xlu0 %386, %v373
      %v388 = vpop.permute.xlu0 %387
      %v390 = vadd.f32 %v354, %v376
      %v391 = vadd.f32 %v355, %v376
      %v392 = vadd.f32 %v356, %v380
      %v393 = vadd.f32 %v357, %v380
      %v394 = vadd.f32 %v358, %v384
      %v395 = vadd.f32 %v359, %v384
      %v396 = vadd.f32 %v360, %v388
      %v397 = vadd.f32 %v361, %v388
      %v398 = vmul.f32 %v390, %v318
      %v399 = vmul.f32 %v391, %v319
      %v400 = vmul.f32 %v392, %v320
      %v401 = vmul.f32 %v393, %v321
      %v402 = vmul.f32 %v394, %v322
      %v403 = vmul.f32 %v395, %v323
      %v404 = vmul.f32 %v396, %v324
      %v405 = vmul.f32 %v397, %v325
      %vm406 = vcmask 130048
      %v407 = vsel %vm406, %v318, 0.0
      %v408 = vsel %vm406, %v320, 0.0
      %v409 = vadd.f32 %v407, %v408
      %v410 = vsel %vm406, %v322, 0.0
      %v411 = vadd.f32 %v409, %v410
      %v412 = vsel %vm406, %v324, 0.0
      %v413 = vadd.f32 %v411, %v412
      %v414 = vsel %vm406, %v319, 0.0
      %v415 = vsel %vm406, %v321, 0.0
      %v416 = vadd.f32 %v414, %v415
      %v417 = vsel %vm406, %v323, 0.0
      %v418 = vadd.f32 %v416, %v417
      %v419 = vsel %vm406, %v325, 0.0
      %v420 = vadd.f32 %v418, %v419
      %421 = vst [vmem:[#allocation2] sm:$0xff] 0.0
      %422 = vst [vmem:[#allocation2 + $0x8] sm:$0xff] 0.0
      %423 = vst [vmem:[#allocation2 + $0x10] sm:$0xff] 0.0
      %424 = vst [vmem:[#allocation2 + $0x18] sm:$0xff] 0.0
      %425 = vst [vmem:[#allocation2 + $0x20] sm:$0xff] 0.0
      %426 = vst [vmem:[#allocation2 + $0x28] sm:$0xff] 0.0
      %427 = vst [vmem:[#allocation2 + $0x30] sm:$0xff] 0.0
      %428 = vst [vmem:[#allocation2 + $0x38] sm:$0xff] 0.0
      %429 = vst [vmem:[#allocation2 + $0x40] sm:$0xff] 0.0
      %430 = vst [vmem:[#allocation3] sm:$0xff] 0.0
      %431 = vst [vmem:[#allocation3 + $0x8] sm:$0xff] 0.0
      %v432 = vlaneseq
      %vm433 = vcmp.ge.s32.totalorder %v432, 0
      %vm434 = vcmp.lt.s32.totalorder %v432, 256
      %vm435 = vmand %vm433, %vm434
      %436 = vst.msk [vmem:[#allocation3 + $0x10] sm:$0x3] %vm435, 0.0
      %s437 = scalar_lea.vmem [#allocation2], 72
      %438 = vst [vmem:[%s437] sm:$0xff] 0.0
      %439 = vst [vmem:[%s437 + $0x8] sm:$0xff] 0.0
      %440 = vst [vmem:[%s437 + $0x10] sm:$0xff] 0.0
      %441 = vst [vmem:[%s437 + $0x18] sm:$0xff] 0.0
      %442 = vst [vmem:[%s437 + $0x20] sm:$0xff] 0.0
      %443 = vst [vmem:[%s437 + $0x28] sm:$0xff] 0.0
      %444 = vst [vmem:[%s437 + $0x30] sm:$0xff] 0.0
      %445 = vst [vmem:[%s437 + $0x38] sm:$0xff] 0.0
      %446 = vst [vmem:[%s437 + $0x40] sm:$0xff] 0.0
      %s447 = scalar_lea.vmem [#allocation3], 18
      %448 = vst [vmem:[%s447] sm:$0xff] 0.0
      %449 = vst [vmem:[%s447 + $0x8] sm:$0xff] 0.0
      %450 = vst.msk [vmem:[%s447 + $0x10] sm:$0x3] %vm435, 0.0
      %s451 = scalar_lea.vmem [#allocation2], 144
      %452 = vst [vmem:[%s451] sm:$0xff] 0.0
      %453 = vst [vmem:[%s451 + $0x8] sm:$0xff] 0.0
      %454 = vst [vmem:[%s451 + $0x10] sm:$0xff] 0.0
      %455 = vst [vmem:[%s451 + $0x18] sm:$0xff] 0.0
      %456 = vst [vmem:[%s451 + $0x20] sm:$0xff] 0.0
      %457 = vst [vmem:[%s451 + $0x28] sm:$0xff] 0.0
      %458 = vst [vmem:[%s451 + $0x30] sm:$0xff] 0.0
      %459 = vst [vmem:[%s451 + $0x38] sm:$0xff] 0.0
      %460 = vst [vmem:[%s451 + $0x40] sm:$0xff] 0.0
      %s461 = scalar_lea.vmem [#allocation3], 36
      %462 = vst [vmem:[%s461] sm:$0xff] 0.0
      %463 = vst [vmem:[%s461 + $0x8] sm:$0xff] 0.0
      %464 = vst.msk [vmem:[%s461 + $0x10] sm:$0x3] %vm435, 0.0
      %v469 = vrot.slane %v400, 7
      %vm470 = vcmask 1041409
      %v471 = vsel %vm470, %v469, %v398
      %vm472 = vcmask 1045509
      %v473 = vsel %vm472, %v469, %v471
      %v474 = vrot.slane %v402, 6
      %vm475 = vcmask 1042434
      %v476 = vsel %vm475, %v474, %v473
      %vm477 = vcmask 1046534
      %v478 = vsel %vm477, %v474, %v476
      %v479 = vrot.slane %v404, 5
      %vm480 = vcmask 1043459
      %v481 = vsel %vm480, %v479, %v478
      %vm482 = vcmask 1047559
      %v483 = vsel %vm482, %v479, %v481
      %484 = vrot.lane.b32.xlu0 %v483, 1
      %v485 = vpop.permute.xlu0 %484
      %vm487 = vcmask 134152
      %488 = vst.msk [vmem:[#allocation2 + $0x4] sm:$0xf] %vm487, %v485
      %490 = vrot.lane.b32.xlu0 %v413, 1
      %v491 = vpop.permute.xlu0 %490
      %vm493 = vcmp.ge.s32.totalorder %v432, 1
      %vm494 = vcmp.lt.s32.totalorder %v432, 17
      %vm495 = vmand %vm493, %vm494
      %496 = vst.msk [vmem:[#allocation3 + $0x1] sm:$0x1] %vm495, %v491
      %v497 = vrot.slane %v398, 1
      %v498 = vsel %vm470, %v400, %v497
      %v499 = vsel %vm472, %v400, %v498
      %v500 = vrot.slane %v402, 7
      %v501 = vsel %vm475, %v500, %v499
      %v502 = vsel %vm477, %v500, %v501
      %v503 = vrot.slane %v404, 6
      %v504 = vsel %vm480, %v503, %v502
      %v505 = vsel %vm482, %v503, %v504
      %506 = vrot.lane.b32.xlu0 %v505, 1
      %v507 = vpop.permute.xlu0 %506
      %509 = vst.msk [vmem:[#allocation2 + $0x8] sm:$0xf] %vm487, %v507
      %510 = vst [vmem:[#allocation1] sm:$0xff] %v413
      %s511 = scalar_lea.vmem [#allocation1], 1
      %v512 = vld [vmem:[%s511] ss:$9 sm:$0xff]
      %513 = vrot.lane.b32.xlu0 %v512, 1
      %v514 = vpop.permute.xlu0 %513
      %516 = vst.msk [vmem:[#allocation3 + $0x2] sm:$0x1] %vm495, %v514
      %v517 = vrot.slane %v398, 2
      %v518 = vrot.slane %v400, 1
      %v519 = vsel %vm470, %v518, %v517
      %v520 = vsel %vm472, %v518, %v519
      %v521 = vsel %vm475, %v402, %v520
      %v522 = vsel %vm477, %v402, %v521
      %v523 = vrot.slane %v404, 7
      %v524 = vsel %vm480, %v523, %v522
      %v525 = vsel %vm482, %v523, %v524
      %526 = vrot.lane.b32.xlu0 %v525, 1
      %v527 = vpop.permute.xlu0 %526
      %529 = vst.msk [vmem:[#allocation2 + $0xc] sm:$0xf] %vm487, %v527
      %530 = vst [vmem:[#allocation1] sm:$0xff] %v413
      %s531 = scalar_lea.vmem [#allocation1], 2
      %v532 = vld [vmem:[%s531] ss:$9 sm:$0xff]
      %533 = vrot.lane.b32.xlu0 %v532, 1
      %v534 = vpop.permute.xlu0 %533
      %536 = vst.msk [vmem:[#allocation3 + $0x3] sm:$0x1] %vm495, %v534
      %v537 = vrot.slane %v398, 3
      %v538 = vrot.slane %v400, 2
      %v539 = vsel %vm470, %v538, %v537
      %v540 = vsel %vm472, %v538, %v539
      %v541 = vrot.slane %v402, 1
      %v542 = vsel %vm475, %v541, %v540
      %v543 = vsel %vm477, %v541, %v542
      %v544 = vsel %vm480, %v404, %v543
      %v545 = vsel %vm482, %v404, %v544
      %546 = vrot.lane.b32.xlu0 %v545, 1
      %v547 = vpop.permute.xlu0 %546
      %549 = vst.msk [vmem:[#allocation2 + $0x10] sm:$0xf] %vm487, %v547
      %550 = vst [vmem:[#allocation1] sm:$0xff] %v413
      %s551 = scalar_lea.vmem [#allocation1], 3
      %v552 = vld [vmem:[%s551] ss:$9 sm:$0xff]
      %553 = vrot.lane.b32.xlu0 %v552, 1
      %v554 = vpop.permute.xlu0 %553
      %556 = vst.msk [vmem:[#allocation3 + $0x4] sm:$0x1] %vm495, %v554
      %557 = vst.sshfl [vmem:[#allocation1] sm:$0xff pattern:$0x75316420] %v398
      %s558 = scalar_lea.vmem [#allocation1], 1
      %v559 = vld [vmem:[%s558] ss:$2 sm:$0xff]
      %560 = vst.sshfl [vmem:[#allocation1 + $0x10] sm:$0xff pattern:$0x75316420] %v400
      %s561 = scalar_lea.vmem [#allocation1], 17
      %v562 = vld [vmem:[%s561] ss:$2 sm:$0xff]
      %563 = vst.sshfl [vmem:[#allocation1 + $0x20] sm:$0xff pattern:$0x75316420] %v402
      %s564 = scalar_lea.vmem [#allocation1], 33
      %v565 = vld [vmem:[%s564] ss:$2 sm:$0xff]
      %566 = vst.sshfl [vmem:[#allocation1 + $0x30] sm:$0xff pattern:$0x75316420] %v404
      %s567 = scalar_lea.vmem [#allocation1], 49
      %v568 = vld [vmem:[%s567] ss:$2 sm:$0xff]
      %v569 = vrot.slane %v562, 7
      %v570 = vsel %vm470, %v569, %v559
      %v571 = vsel %vm472, %v569, %v570
      %v572 = vrot.slane %v565, 6
      %v573 = vsel %vm475, %v572, %v571
      %v574 = vsel %vm477, %v572, %v573
      %v575 = vrot.slane %v568, 5
      %v576 = vsel %vm480, %v575, %v574
      %v577 = vsel %vm482, %v575, %v576
      %578 = vrot.lane.b32.xlu0 %v577, 1
      %v579 = vpop.permute.xlu0 %578
      %581 = vst.msk [vmem:[#allocation2 + $0x14] sm:$0xf] %vm487, %v579
      %582 = vst [vmem:[#allocation1] sm:$0xff] %v413
      %s583 = scalar_lea.vmem [#allocation1], 4
      %v584 = vld [vmem:[%s583] ss:$9 sm:$0xff]
      %585 = vrot.lane.b32.xlu0 %v584, 1
      %v586 = vpop.permute.xlu0 %585
      %588 = vst.msk [vmem:[#allocation3 + $0x5] sm:$0x1] %vm495, %v586
      %589 = vst.sshfl [vmem:[#allocation1] sm:$0xff pattern:$0x75316420] %v398
      %s590 = scalar_lea.vmem [#allocation1], 1
      %v591 = vld [vmem:[%s590] ss:$2 sm:$0xff]
      %592 = vst.sshfl [vmem:[#allocation1 + $0x10] sm:$0xff pattern:$0x75316420] %v400
      %s593 = scalar_lea.vmem [#allocation1], 17
      %v594 = vld [vmem:[%s593] ss:$2 sm:$0xff]
      %595 = vst.sshfl [vmem:[#allocation1 + $0x20] sm:$0xff pattern:$0x75316420] %v402
      %s596 = scalar_lea.vmem [#allocation1], 33
      %v597 = vld [vmem:[%s596] ss:$2 sm:$0xff]
      %598 = vst.sshfl [vmem:[#allocation1 + $0x30] sm:$0xff pattern:$0x75316420] %v404
      %s599 = scalar_lea.vmem [#allocation1], 49
      %v600 = vld [vmem:[%s599] ss:$2 sm:$0xff]
      %v601 = vrot.slane %v591, 1
      %v602 = vsel %vm470, %v594, %v601
      %v603 = vsel %vm472, %v594, %v602
      %v604 = vrot.slane %v597, 7
      %v605 = vsel %vm475, %v604, %v603
      %v606 = vsel %vm477, %v604, %v605
      %v607 = vrot.slane %v600, 6
      %v608 = vsel %vm480, %v607, %v606
      %v609 = vsel %vm482, %v607, %v608
      %610 = vrot.lane.b32.xlu0 %v609, 1
      %v611 = vpop.permute.xlu0 %610
      %613 = vst.msk [vmem:[#allocation2 + $0x18] sm:$0xf] %vm487, %v611
      %614 = vst [vmem:[#allocation1] sm:$0xff] %v413
      %s615 = scalar_lea.vmem [#allocation1], 5
      %v616 = vld [vmem:[%s615] ss:$9 sm:$0xff]
      %617 = vrot.lane.b32.xlu0 %v616, 1
      %v618 = vpop.permute.xlu0 %617
      %620 = vst.msk [vmem:[#allocation3 + $0x6] sm:$0x1] %vm495, %v618
      %621 = vst.sshfl [vmem:[#allocation1] sm:$0xff pattern:$0x75316420] %v398
      %s622 = scalar_lea.vmem [#allocation1], 1
      %v623 = vld [vmem:[%s622] ss:$2 sm:$0xff]
      %624 = vst.sshfl [vmem:[#allocation1 + $0x10] sm:$0xff pattern:$0x75316420] %v400
      %s625 = scalar_lea.vmem [#allocation1], 17
      %v626 = vld [vmem:[%s625] ss:$2 sm:$0xff]
      %627 = vst.sshfl [vmem:[#allocation1 + $0x20] sm:$0xff pattern:$0x75316420] %v402
      %s628 = scalar_lea.vmem [#allocation1], 33
      %v629 = vld [vmem:[%s628] ss:$2 sm:$0xff]
      %630 = vst.sshfl [vmem:[#allocation1 + $0x30] sm:$0xff pattern:$0x75316420] %v404
      %s631 = scalar_lea.vmem [#allocation1], 49
      %v632 = vld [vmem:[%s631] ss:$2 sm:$0xff]
      %v633 = vrot.slane %v623, 2
      %v634 = vrot.slane %v626, 1
      %v635 = vsel %vm470, %v634, %v633
      %v636 = vsel %vm472, %v634, %v635
      %v637 = vsel %vm475, %v629, %v636
      %v638 = vsel %vm477, %v629, %v637
      %v639 = vrot.slane %v632, 7
      %v640 = vsel %vm480, %v639, %v638
      %v641 = vsel %vm482, %v639, %v640
      %642 = vrot.lane.b32.xlu0 %v641, 1
      %v643 = vpop.permute.xlu0 %642
      %645 = vst.msk [vmem:[#allocation2 + $0x1c] sm:$0xf] %vm487, %v643
      %646 = vst [vmem:[#allocation1] sm:$0xff] %v413
      %s647 = scalar_lea.vmem [#allocation1], 6
      %v648 = vld [vmem:[%s647] ss:$9 sm:$0xff]
      %649 = vrot.lane.b32.xlu0 %v648, 1
      %v650 = vpop.permute.xlu0 %649
      %652 = vst.msk [vmem:[#allocation3 + $0x7] sm:$0x1] %vm495, %v650
      %653 = vst.sshfl [vmem:[#allocation1] sm:$0xff pattern:$0x75316420] %v398
      %s654 = scalar_lea.vmem [#allocation1], 1
      %v655 = vld [vmem:[%s654] ss:$2 sm:$0xff]
      %656 = vst.sshfl [vmem:[#allocation1 + $0x10] sm:$0xff pattern:$0x75316420] %v400
      %s657 = scalar_lea.vmem [#allocation1], 17
      %v658 = vld [vmem:[%s657] ss:$2 sm:$0xff]
      %659 = vst.sshfl [vmem:[#allocation1 + $0x20] sm:$0xff pattern:$0x75316420] %v402
      %s660 = scalar_lea.vmem [#allocation1], 33
      %v661 = vld [vmem:[%s660] ss:$2 sm:$0xff]
      %662 = vst.sshfl [vmem:[#allocation1 + $0x30] sm:$0xff pattern:$0x75316420] %v404
      %s663 = scalar_lea.vmem [#allocation1], 49
      %v664 = vld [vmem:[%s663] ss:$2 sm:$0xff]
      %v665 = vrot.slane %v655, 3
      %v666 = vrot.slane %v658, 2
      %v667 = vsel %vm470, %v666, %v665
      %v668 = vsel %vm472, %v666, %v667
      %v669 = vrot.slane %v661, 1
      %v670 = vsel %vm475, %v669, %v668
      %v671 = vsel %vm477, %v669, %v670
      %v672 = vsel %vm480, %v664, %v671
      %v673 = vsel %vm482, %v664, %v672
      %674 = vrot.lane.b32.xlu0 %v673, 1
      %v675 = vpop.permute.xlu0 %674
      %677 = vst.msk [vmem:[#allocation2 + $0x20] sm:$0xf] %vm487, %v675
      %678 = vst [vmem:[#allocation1] sm:$0xff] %v413
      %s679 = scalar_lea.vmem [#allocation1], 7
      %v680 = vld [vmem:[%s679] ss:$9 sm:$0xff]
      %681 = vrot.lane.b32.xlu0 %v680, 1
      %v682 = vpop.permute.xlu0 %681
      %684 = vst.msk [vmem:[#allocation3 + $0x8] sm:$0x1] %vm495, %v682
      %v689 = vrot.slane %v401, 7
      %v690 = vsel %vm470, %v689, %v399
      %v691 = vsel %vm472, %v689, %v690
      %v692 = vrot.slane %v403, 6
      %v693 = vsel %vm475, %v692, %v691
      %v694 = vsel %vm477, %v692, %v693
      %v695 = vrot.slane %v405, 5
      %v696 = vsel %vm480, %v695, %v694
      %v697 = vsel %vm482, %v695, %v696
      %698 = vrot.lane.b32.xlu0 %v697, 1
      %v699 = vpop.permute.xlu0 %698
      %701 = vst.msk [vmem:[#allocation2 + $0x24] sm:$0xf] %vm487, %v699
      %703 = vrot.lane.b32.xlu0 %v420, 1
      %v704 = vpop.permute.xlu0 %703
      %706 = vst.msk [vmem:[#allocation3 + $0x9] sm:$0x1] %vm495, %v704
      %v707 = vrot.slane %v399, 1
      %v708 = vsel %vm470, %v401, %v707
      %v709 = vsel %vm472, %v401, %v708
      %v710 = vrot.slane %v403, 7
      %v711 = vsel %vm475, %v710, %v709
      %v712 = vsel %vm477, %v710, %v711
      %v713 = vrot.slane %v405, 6
      %v714 = vsel %vm480, %v713, %v712
      %v715 = vsel %vm482, %v713, %v714
      %716 = vrot.lane.b32.xlu0 %v715, 1
      %v717 = vpop.permute.xlu0 %716
      %719 = vst.msk [vmem:[#allocation2 + $0x28] sm:$0xf] %vm487, %v717
      %720 = vst [vmem:[#allocation1] sm:$0xff] %v420
      %s721 = scalar_lea.vmem [#allocation1], 1
      %v722 = vld [vmem:[%s721] ss:$9 sm:$0xff]
      %723 = vrot.lane.b32.xlu0 %v722, 1
      %v724 = vpop.permute.xlu0 %723
      %726 = vst.msk [vmem:[#allocation3 + $0xa] sm:$0x1] %vm495, %v724
      %v727 = vrot.slane %v399, 2
      %v728 = vrot.slane %v401, 1
      %v729 = vsel %vm470, %v728, %v727
      %v730 = vsel %vm472, %v728, %v729
      %v731 = vsel %vm475, %v403, %v730
      %v732 = vsel %vm477, %v403, %v731
      %v733 = vrot.slane %v405, 7
      %v734 = vsel %vm480, %v733, %v732
      %v735 = vsel %vm482, %v733, %v734
      %736 = vrot.lane.b32.xlu0 %v735, 1
      %v737 = vpop.permute.xlu0 %736
      %739 = vst.msk [vmem:[#allocation2 + $0x2c] sm:$0xf] %vm487, %v737
      %740 = vst [vmem:[#allocation1] sm:$0xff] %v420
      %s741 = scalar_lea.vmem [#allocation1], 2
      %v742 = vld [vmem:[%s741] ss:$9 sm:$0xff]
      %743 = vrot.lane.b32.xlu0 %v742, 1
      %v744 = vpop.permute.xlu0 %743
      %746 = vst.msk [vmem:[#allocation3 + $0xb] sm:$0x1] %vm495, %v744
      %v747 = vrot.slane %v399, 3
      %v748 = vrot.slane %v401, 2
      %v749 = vsel %vm470, %v748, %v747
      %v750 = vsel %vm472, %v748, %v749
      %v751 = vrot.slane %v403, 1
      %v752 = vsel %vm475, %v751, %v750
      %v753 = vsel %vm477, %v751, %v752
      %v754 = vsel %vm480, %v405, %v753
      %v755 = vsel %vm482, %v405, %v754
      %756 = vrot.lane.b32.xlu0 %v755, 1
      %v757 = vpop.permute.xlu0 %756
      %759 = vst.msk [vmem:[#allocation2 + $0x30] sm:$0xf] %vm487, %v757
      %760 = vst [vmem:[#allocation1] sm:$0xff] %v420
      %s761 = scalar_lea.vmem [#allocation1], 3
      %v762 = vld [vmem:[%s761] ss:$9 sm:$0xff]
      %763 = vrot.lane.b32.xlu0 %v762, 1
      %v764 = vpop.permute.xlu0 %763
      %766 = vst.msk [vmem:[#allocation3 + $0xc] sm:$0x1] %vm495, %v764
      %767 = vst.sshfl [vmem:[#allocation1] sm:$0xff pattern:$0x75316420] %v399
      %s768 = scalar_lea.vmem [#allocation1], 1
      %v769 = vld [vmem:[%s768] ss:$2 sm:$0xff]
      %770 = vst.sshfl [vmem:[#allocation1 + $0x10] sm:$0xff pattern:$0x75316420] %v401
      %s771 = scalar_lea.vmem [#allocation1], 17
      %v772 = vld [vmem:[%s771] ss:$2 sm:$0xff]
      %773 = vst.sshfl [vmem:[#allocation1 + $0x20] sm:$0xff pattern:$0x75316420] %v403
      %s774 = scalar_lea.vmem [#allocation1], 33
      %v775 = vld [vmem:[%s774] ss:$2 sm:$0xff]
      %776 = vst.sshfl [vmem:[#allocation1 + $0x30] sm:$0xff pattern:$0x75316420] %v405
      %s777 = scalar_lea.vmem [#allocation1], 49
      %v778 = vld [vmem:[%s777] ss:$2 sm:$0xff]
      %v779 = vrot.slane %v772, 7
      %v780 = vsel %vm470, %v779, %v769
      %v781 = vsel %vm472, %v779, %v780
      %v782 = vrot.slane %v775, 6
      %v783 = vsel %vm475, %v782, %v781
      %v784 = vsel %vm477, %v782, %v783
      %v785 = vrot.slane %v778, 5
      %v786 = vsel %vm480, %v785, %v784
      %v787 = vsel %vm482, %v785, %v786
      %788 = vrot.lane.b32.xlu0 %v787, 1
      %v789 = vpop.permute.xlu0 %788
      %791 = vst.msk [vmem:[#allocation2 + $0x34] sm:$0xf] %vm487, %v789
      %792 = vst [vmem:[#allocation1] sm:$0xff] %v420
      %s793 = scalar_lea.vmem [#allocation1], 4
      %v794 = vld [vmem:[%s793] ss:$9 sm:$0xff]
      %795 = vrot.lane.b32.xlu0 %v794, 1
      %v796 = vpop.permute.xlu0 %795
      %798 = vst.msk [vmem:[#allocation3 + $0xd] sm:$0x1] %vm495, %v796
      %799 = vst.sshfl [vmem:[#allocation1] sm:$0xff pattern:$0x75316420] %v399
      %s800 = scalar_lea.vmem [#allocation1], 1
      %v801 = vld [vmem:[%s800] ss:$2 sm:$0xff]
      %802 = vst.sshfl [vmem:[#allocation1 + $0x10] sm:$0xff pattern:$0x75316420] %v401
      %s803 = scalar_lea.vmem [#allocation1], 17
      %v804 = vld [vmem:[%s803] ss:$2 sm:$0xff]
      %805 = vst.sshfl [vmem:[#allocation1 + $0x20] sm:$0xff pattern:$0x75316420] %v403
      %s806 = scalar_lea.vmem [#allocation1], 33
      %v807 = vld [vmem:[%s806] ss:$2 sm:$0xff]
      %808 = vst.sshfl [vmem:[#allocation1 + $0x30] sm:$0xff pattern:$0x75316420] %v405
      %s809 = scalar_lea.vmem [#allocation1], 49
      %v810 = vld [vmem:[%s809] ss:$2 sm:$0xff]
      %v811 = vrot.slane %v801, 1
      %v812 = vsel %vm470, %v804, %v811
      %v813 = vsel %vm472, %v804, %v812
      %v814 = vrot.slane %v807, 7
      %v815 = vsel %vm475, %v814, %v813
      %v816 = vsel %vm477, %v814, %v815
      %v817 = vrot.slane %v810, 6
      %v818 = vsel %vm480, %v817, %v816
      %v819 = vsel %vm482, %v817, %v818
      %820 = vrot.lane.b32.xlu0 %v819, 1
      %v821 = vpop.permute.xlu0 %820
      %823 = vst.msk [vmem:[#allocation2 + $0x38] sm:$0xf] %vm487, %v821
      %824 = vst [vmem:[#allocation1] sm:$0xff] %v420
      %s825 = scalar_lea.vmem [#allocation1], 5
      %v826 = vld [vmem:[%s825] ss:$9 sm:$0xff]
      %827 = vrot.lane.b32.xlu0 %v826, 1
      %v828 = vpop.permute.xlu0 %827
      %830 = vst.msk [vmem:[#allocation3 + $0xe] sm:$0x1] %vm495, %v828
      %831 = vst.sshfl [vmem:[#allocation1] sm:$0xff pattern:$0x75316420] %v399
      %s832 = scalar_lea.vmem [#allocation1], 1
      %v833 = vld [vmem:[%s832] ss:$2 sm:$0xff]
      %834 = vst.sshfl [vmem:[#allocation1 + $0x10] sm:$0xff pattern:$0x75316420] %v401
      %s835 = scalar_lea.vmem [#allocation1], 17
      %v836 = vld [vmem:[%s835] ss:$2 sm:$0xff]
      %837 = vst.sshfl [vmem:[#allocation1 + $0x20] sm:$0xff pattern:$0x75316420] %v403
      %s838 = scalar_lea.vmem [#allocation1], 33
      %v839 = vld [vmem:[%s838] ss:$2 sm:$0xff]
      %840 = vst.sshfl [vmem:[#allocation1 + $0x30] sm:$0xff pattern:$0x75316420] %v405
      %s841 = scalar_lea.vmem [#allocation1], 49
      %v842 = vld [vmem:[%s841] ss:$2 sm:$0xff]
      %v843 = vrot.slane %v833, 2
      %v844 = vrot.slane %v836, 1
      %v845 = vsel %vm470, %v844, %v843
      %v846 = vsel %vm472, %v844, %v845
      %v847 = vsel %vm475, %v839, %v846
      %v848 = vsel %vm477, %v839, %v847
      %v849 = vrot.slane %v842, 7
      %v850 = vsel %vm480, %v849, %v848
      %v851 = vsel %vm482, %v849, %v850
      %852 = vrot.lane.b32.xlu0 %v851, 1
      %v853 = vpop.permute.xlu0 %852
      %855 = vst.msk [vmem:[#allocation2 + $0x3c] sm:$0xf] %vm487, %v853
      %856 = vst [vmem:[#allocation1] sm:$0xff] %v420
      %s857 = scalar_lea.vmem [#allocation1], 6
      %v858 = vld [vmem:[%s857] ss:$9 sm:$0xff]
      %859 = vrot.lane.b32.xlu0 %v858, 1
      %v860 = vpop.permute.xlu0 %859
      %862 = vst.msk [vmem:[#allocation3 + $0xf] sm:$0x1] %vm495, %v860
      %863 = vst.sshfl [vmem:[#allocation1] sm:$0xff pattern:$0x75316420] %v399
      %s864 = scalar_lea.vmem [#allocation1], 1
      %v865 = vld [vmem:[%s864] ss:$2 sm:$0xff]
      %866 = vst.sshfl [vmem:[#allocation1 + $0x10] sm:$0xff pattern:$0x75316420] %v401
      %s867 = scalar_lea.vmem [#allocation1], 17
      %v868 = vld [vmem:[%s867] ss:$2 sm:$0xff]
      %869 = vst.sshfl [vmem:[#allocation1 + $0x20] sm:$0xff pattern:$0x75316420] %v403
      %s870 = scalar_lea.vmem [#allocation1], 33
      %v871 = vld [vmem:[%s870] ss:$2 sm:$0xff]
      %872 = vst.sshfl [vmem:[#allocation1 + $0x30] sm:$0xff pattern:$0x75316420] %v405
      %s873 = scalar_lea.vmem [#allocation1], 49
      %v874 = vld [vmem:[%s873] ss:$2 sm:$0xff]
      %v875 = vrot.slane %v865, 3
      %v876 = vrot.slane %v868, 2
      %v877 = vsel %vm470, %v876, %v875
      %v878 = vsel %vm472, %v876, %v877
      %v879 = vrot.slane %v871, 1
      %v880 = vsel %vm475, %v879, %v878
      %v881 = vsel %vm477, %v879, %v880
      %v882 = vsel %vm480, %v874, %v881
      %v883 = vsel %vm482, %v874, %v882
      %884 = vrot.lane.b32.xlu0 %v883, 1
      %v885 = vpop.permute.xlu0 %884
      %887 = vst.msk [vmem:[#allocation2 + $0x40] sm:$0xf] %vm487, %v885
      %888 = vst [vmem:[#allocation1] sm:$0xff] %v420
      %s889 = scalar_lea.vmem [#allocation1], 7
      %v890 = vld [vmem:[%s889] ss:$9 sm:$0xff]
      %891 = vrot.lane.b32.xlu0 %v890, 1
      %v892 = vpop.permute.xlu0 %891
      %894 = vst.msk [vmem:[#allocation3 + $0x10] sm:$0x1] %vm495, %v892
      %vm896 = vcmask 125952
      %897 = vst.msk [vmem:[%s437 + $0x4] sm:$0xf] %vm896, %v483
      %vm898 = vcmp.lt.s32.totalorder %v432, 16
      %vm899 = vmand %vm433, %vm898
      %900 = vst.msk [vmem:[%s447 + $0x1] sm:$0x1] %vm899, %v413
      %902 = vst.msk [vmem:[%s437 + $0x8] sm:$0xf] %vm896, %v505
      %903 = vst [vmem:[#allocation1] sm:$0xff] %v413
      %s904 = scalar_lea.vmem [#allocation1], 1
      %v905 = vld [vmem:[%s904] ss:$9 sm:$0xff]
      %907 = vst.msk [vmem:[%s447 + $0x2] sm:$0x1] %vm899, %v905
      %909 = vst.msk [vmem:[%s437 + $0xc] sm:$0xf] %vm896, %v525
      %910 = vst [vmem:[#allocation1] sm:$0xff] %v413
      %s911 = scalar_lea.vmem [#allocation1], 2
      %v912 = vld [vmem:[%s911] ss:$9 sm:$0xff]
      %914 = vst.msk [vmem:[%s447 + $0x3] sm:$0x1] %vm899, %v912
      %916 = vst.msk [vmem:[%s437 + $0x10] sm:$0xf] %vm896, %v545
      %917 = vst [vmem:[#allocation1] sm:$0xff] %v413
      %s918 = scalar_lea.vmem [#allocation1], 3
      %v919 = vld [vmem:[%s918] ss:$9 sm:$0xff]
      %921 = vst.msk [vmem:[%s447 + $0x4] sm:$0x1] %vm899, %v919
      %922 = vst.sshfl [vmem:[#allocation1] sm:$0xff pattern:$0x75316420] %v398
      %s923 = scalar_lea.vmem [#allocation1], 1
      %v924 = vld [vmem:[%s923] ss:$2 sm:$0xff]
      %925 = vst.sshfl [vmem:[#allocation1 + $0x10] sm:$0xff pattern:$0x75316420] %v400
      %s926 = scalar_lea.vmem [#allocation1], 17
      %v927 = vld [vmem:[%s926] ss:$2 sm:$0xff]
      %928 = vst.sshfl [vmem:[#allocation1 + $0x20] sm:$0xff pattern:$0x75316420] %v402
      %s929 = scalar_lea.vmem [#allocation1], 33
      %v930 = vld [vmem:[%s929] ss:$2 sm:$0xff]
      %931 = vst.sshfl [vmem:[#allocation1 + $0x30] sm:$0xff pattern:$0x75316420] %v404
      %s932 = scalar_lea.vmem [#allocation1], 49
      %v933 = vld [vmem:[%s932] ss:$2 sm:$0xff]
      %v934 = vrot.slane %v927, 7
      %v935 = vsel %vm470, %v934, %v924
      %v936 = vsel %vm472, %v934, %v935
      %v937 = vrot.slane %v930, 6
      %v938 = vsel %vm475, %v937, %v936
      %v939 = vsel %vm477, %v937, %v938
      %v940 = vrot.slane %v933, 5
      %v941 = vsel %vm480, %v940, %v939
      %v942 = vsel %vm482, %v940, %v941
      %944 = vst.msk [vmem:[%s437 + $0x14] sm:$0xf] %vm896, %v942
      %945 = vst [vmem:[#allocation1] sm:$0xff] %v413
      %s946 = scalar_lea.vmem [#allocation1], 4
      %v947 = vld [vmem:[%s946] ss:$9 sm:$0xff]
      %949 = vst.msk [vmem:[%s447 + $0x5] sm:$0x1] %vm899, %v947
      %950 = vst.sshfl [vmem:[#allocation1] sm:$0xff pattern:$0x75316420] %v398
      %s951 = scalar_lea.vmem [#allocation1], 1
      %v952 = vld [vmem:[%s951] ss:$2 sm:$0xff]
      %953 = vst.sshfl [vmem:[#allocation1 + $0x10] sm:$0xff pattern:$0x75316420] %v400
      %s954 = scalar_lea.vmem [#allocation1], 17
      %v955 = vld [vmem:[%s954] ss:$2 sm:$0xff]
      %956 = vst.sshfl [vmem:[#allocation1 + $0x20] sm:$0xff pattern:$0x75316420] %v402
      %s957 = scalar_lea.vmem [#allocation1], 33
      %v958 = vld [vmem:[%s957] ss:$2 sm:$0xff]
      %959 = vst.sshfl [vmem:[#allocation1 + $0x30] sm:$0xff pattern:$0x75316420] %v404
      %s960 = scalar_lea.vmem [#allocation1], 49
      %v961 = vld [vmem:[%s960] ss:$2 sm:$0xff]
      %v962 = vrot.slane %v952, 1
      %v963 = vsel %vm470, %v955, %v962
      %v964 = vsel %vm472, %v955, %v963
      %v965 = vrot.slane %v958, 7
      %v966 = vsel %vm475, %v965, %v964
      %v967 = vsel %vm477, %v965, %v966
      %v968 = vrot.slane %v961, 6
      %v969 = vsel %vm480, %v968, %v967
      %v970 = vsel %vm482, %v968, %v969
      %972 = vst.msk [vmem:[%s437 + $0x18] sm:$0xf] %vm896, %v970
      %973 = vst [vmem:[#allocation1] sm:$0xff] %v413
      %s974 = scalar_lea.vmem [#allocation1], 5
      %v975 = vld [vmem:[%s974] ss:$9 sm:$0xff]
      %977 = vst.msk [vmem:[%s447 + $0x6] sm:$0x1] %vm899, %v975
      %978 = vst.sshfl [vmem:[#allocation1] sm:$0xff pattern:$0x75316420] %v398
      %s979 = scalar_lea.vmem [#allocation1], 1
      %v980 = vld [vmem:[%s979] ss:$2 sm:$0xff]
      %981 = vst.sshfl [vmem:[#allocation1 + $0x10] sm:$0xff pattern:$0x75316420] %v400
      %s982 = scalar_lea.vmem [#allocation1], 17
      %v983 = vld [vmem:[%s982] ss:$2 sm:$0xff]
      %984 = vst.sshfl [vmem:[#allocation1 + $0x20] sm:$0xff pattern:$0x75316420] %v402
      %s985 = scalar_lea.vmem [#allocation1], 33
      %v986 = vld [vmem:[%s985] ss:$2 sm:$0xff]
      %987 = vst.sshfl [vmem:[#allocation1 + $0x30] sm:$0xff pattern:$0x75316420] %v404
      %s988 = scalar_lea.vmem [#allocation1], 49
      %v989 = vld [vmem:[%s988] ss:$2 sm:$0xff]
      %v990 = vrot.slane %v980, 2
      %v991 = vrot.slane %v983, 1
      %v992 = vsel %vm470, %v991, %v990
      %v993 = vsel %vm472, %v991, %v992
      %v994 = vsel %vm475, %v986, %v993
      %v995 = vsel %vm477, %v986, %v994
      %v996 = vrot.slane %v989, 7
      %v997 = vsel %vm480, %v996, %v995
      %v998 = vsel %vm482, %v996, %v997
      %1000 = vst.msk [vmem:[%s437 + $0x1c] sm:$0xf] %vm896, %v998
      %1001 = vst [vmem:[#allocation1] sm:$0xff] %v413
      %s1002 = scalar_lea.vmem [#allocation1], 6
      %v1003 = vld [vmem:[%s1002] ss:$9 sm:$0xff]
      %1005 = vst.msk [vmem:[%s447 + $0x7] sm:$0x1] %vm899, %v1003
      %1006 = vst.sshfl [vmem:[#allocation1] sm:$0xff pattern:$0x75316420] %v398
      %s1007 = scalar_lea.vmem [#allocation1], 1
      %v1008 = vld [vmem:[%s1007] ss:$2 sm:$0xff]
      %1009 = vst.sshfl [vmem:[#allocation1 + $0x10] sm:$0xff pattern:$0x75316420] %v400
      %s1010 = scalar_lea.vmem [#allocation1], 17
      %v1011 = vld [vmem:[%s1010] ss:$2 sm:$0xff]
      %1012 = vst.sshfl [vmem:[#allocation1 + $0x20] sm:$0xff pattern:$0x75316420] %v402
      %s1013 = scalar_lea.vmem [#allocation1], 33
      %v1014 = vld [vmem:[%s1013] ss:$2 sm:$0xff]
      %1015 = vst.sshfl [vmem:[#allocation1 + $0x30] sm:$0xff pattern:$0x75316420] %v404
      %s1016 = scalar_lea.vmem [#allocation1], 49
      %v1017 = vld [vmem:[%s1016] ss:$2 sm:$0xff]
      %v1018 = vrot.slane %v1008, 3
      %v1019 = vrot.slane %v1011, 2
      %v1020 = vsel %vm470, %v1019, %v1018
      %v1021 = vsel %vm472, %v1019, %v1020
      %v1022 = vrot.slane %v1014, 1
      %v1023 = vsel %vm475, %v1022, %v1021
      %v1024 = vsel %vm477, %v1022, %v1023
      %v1025 = vsel %vm480, %v1017, %v1024
      %v1026 = vsel %vm482, %v1017, %v1025
      %1028 = vst.msk [vmem:[%s437 + $0x20] sm:$0xf] %vm896, %v1026
      %1029 = vst [vmem:[#allocation1] sm:$0xff] %v413
      %s1030 = scalar_lea.vmem [#allocation1], 7
      %v1031 = vld [vmem:[%s1030] ss:$9 sm:$0xff]
      %1033 = vst.msk [vmem:[%s447 + $0x8] sm:$0x1] %vm899, %v1031
      %1035 = vst.msk [vmem:[%s437 + $0x24] sm:$0xf] %vm896, %v697
      %1036 = vst.msk [vmem:[%s447 + $0x9] sm:$0x1] %vm899, %v420
      %1038 = vst.msk [vmem:[%s437 + $0x28] sm:$0xf] %vm896, %v715
      %1039 = vst [vmem:[#allocation1] sm:$0xff] %v420
      %s1040 = scalar_lea.vmem [#allocation1], 1
      %v1041 = vld [vmem:[%s1040] ss:$9 sm:$0xff]
      %1043 = vst.msk [vmem:[%s447 + $0xa] sm:$0x1] %vm899, %v1041
      %1045 = vst.msk [vmem:[%s437 + $0x2c] sm:$0xf] %vm896, %v735
      %1046 = vst [vmem:[#allocation1] sm:$0xff] %v420
      %s1047 = scalar_lea.vmem [#allocation1], 2
      %v1048 = vld [vmem:[%s1047] ss:$9 sm:$0xff]
      %1050 = vst.msk [vmem:[%s447 + $0xb] sm:$0x1] %vm899, %v1048
      %1052 = vst.msk [vmem:[%s437 + $0x30] sm:$0xf] %vm896, %v755
      %1053 = vst [vmem:[#allocation1] sm:$0xff] %v420
      %s1054 = scalar_lea.vmem [#allocation1], 3
      %v1055 = vld [vmem:[%s1054] ss:$9 sm:$0xff]
      %1057 = vst.msk [vmem:[%s447 + $0xc] sm:$0x1] %vm899, %v1055
      %1058 = vst.sshfl [vmem:[#allocation1] sm:$0xff pattern:$0x75316420] %v399
      %s1059 = scalar_lea.vmem [#allocation1], 1
      %v1060 = vld [vmem:[%s1059] ss:$2 sm:$0xff]
      %1061 = vst.sshfl [vmem:[#allocation1 + $0x10] sm:$0xff pattern:$0x75316420] %v401
      %s1062 = scalar_lea.vmem [#allocation1], 17
      %v1063 = vld [vmem:[%s1062] ss:$2 sm:$0xff]
      %1064 = vst.sshfl [vmem:[#allocation1 + $0x20] sm:$0xff pattern:$0x75316420] %v403
      %s1065 = scalar_lea.vmem [#allocation1], 33
      %v1066 = vld [vmem:[%s1065] ss:$2 sm:$0xff]
      %1067 = vst.sshfl [vmem:[#allocation1 + $0x30] sm:$0xff pattern:$0x75316420] %v405
      %s1068 = scalar_lea.vmem [#allocation1], 49
      %v1069 = vld [vmem:[%s1068] ss:$2 sm:$0xff]
      %v1070 = vrot.slane %v1063, 7
      %v1071 = vsel %vm470, %v1070, %v1060
      %v1072 = vsel %vm472, %v1070, %v1071
      %v1073 = vrot.slane %v1066, 6
      %v1074 = vsel %vm475, %v1073, %v1072
      %v1075 = vsel %vm477, %v1073, %v1074
      %v1076 = vrot.slane %v1069, 5
      %v1077 = vsel %vm480, %v1076, %v1075
      %v1078 = vsel %vm482, %v1076, %v1077
      %1080 = vst.msk [vmem:[%s437 + $0x34] sm:$0xf] %vm896, %v1078
      %1081 = vst [vmem:[#allocation1] sm:$0xff] %v420
      %s1082 = scalar_lea.vmem [#allocation1], 4
      %v1083 = vld [vmem:[%s1082] ss:$9 sm:$0xff]
      %1085 = vst.msk [vmem:[%s447 + $0xd] sm:$0x1] %vm899, %v1083
      %1086 = vst.sshfl [vmem:[#allocation1] sm:$0xff pattern:$0x75316420] %v399
      %s1087 = scalar_lea.vmem [#allocation1], 1
      %v1088 = vld [vmem:[%s1087] ss:$2 sm:$0xff]
      %1089 = vst.sshfl [vmem:[#allocation1 + $0x10] sm:$0xff pattern:$0x75316420] %v401
      %s1090 = scalar_lea.vmem [#allocation1], 17
      %v1091 = vld [vmem:[%s1090] ss:$2 sm:$0xff]
      %1092 = vst.sshfl [vmem:[#allocation1 + $0x20] sm:$0xff pattern:$0x75316420] %v403
      %s1093 = scalar_lea.vmem [#allocation1], 33
      %v1094 = vld [vmem:[%s1093] ss:$2 sm:$0xff]
      %1095 = vst.sshfl [vmem:[#allocation1 + $0x30] sm:$0xff pattern:$0x75316420] %v405
      %s1096 = scalar_lea.vmem [#allocation1], 49
      %v1097 = vld [vmem:[%s1096] ss:$2 sm:$0xff]
      %v1098 = vrot.slane %v1088, 1
      %v1099 = vsel %vm470, %v1091, %v1098
      %v1100 = vsel %vm472, %v1091, %v1099
      %v1101 = vrot.slane %v1094, 7
      %v1102 = vsel %vm475, %v1101, %v1100
      %v1103 = vsel %vm477, %v1101, %v1102
      %v1104 = vrot.slane %v1097, 6
      %v1105 = vsel %vm480, %v1104, %v1103
      %v1106 = vsel %vm482, %v1104, %v1105
      %1108 = vst.msk [vmem:[%s437 + $0x38] sm:$0xf] %vm896, %v1106
      %1109 = vst [vmem:[#allocation1] sm:$0xff] %v420
      %s1110 = scalar_lea.vmem [#allocation1], 5
      %v1111 = vld [vmem:[%s1110] ss:$9 sm:$0xff]
      %1113 = vst.msk [vmem:[%s447 + $0xe] sm:$0x1] %vm899, %v1111
      %1114 = vst.sshfl [vmem:[#allocation1] sm:$0xff pattern:$0x75316420] %v399
      %s1115 = scalar_lea.vmem [#allocation1], 1
      %v1116 = vld [vmem:[%s1115] ss:$2 sm:$0xff]
      %1117 = vst.sshfl [vmem:[#allocation1 + $0x10] sm:$0xff pattern:$0x75316420] %v401
      %s1118 = scalar_lea.vmem [#allocation1], 17
      %v1119 = vld [vmem:[%s1118] ss:$2 sm:$0xff]
      %1120 = vst.sshfl [vmem:[#allocation1 + $0x20] sm:$0xff pattern:$0x75316420] %v403
      %s1121 = scalar_lea.vmem [#allocation1], 33
      %v1122 = vld [vmem:[%s1121] ss:$2 sm:$0xff]
      %1123 = vst.sshfl [vmem:[#allocation1 + $0x30] sm:$0xff pattern:$0x75316420] %v405
      %s1124 = scalar_lea.vmem [#allocation1], 49
      %v1125 = vld [vmem:[%s1124] ss:$2 sm:$0xff]
      %v1126 = vrot.slane %v1116, 2
      %v1127 = vrot.slane %v1119, 1
      %v1128 = vsel %vm470, %v1127, %v1126
      %v1129 = vsel %vm472, %v1127, %v1128
      %v1130 = vsel %vm475, %v1122, %v1129
      %v1131 = vsel %vm477, %v1122, %v1130
      %v1132 = vrot.slane %v1125, 7
      %v1133 = vsel %vm480, %v1132, %v1131
      %v1134 = vsel %vm482, %v1132, %v1133
      %1136 = vst.msk [vmem:[%s437 + $0x3c] sm:$0xf] %vm896, %v1134
      %1137 = vst [vmem:[#allocation1] sm:$0xff] %v420
      %s1138 = scalar_lea.vmem [#allocation1], 6
      %v1139 = vld [vmem:[%s1138] ss:$9 sm:$0xff]
      %1141 = vst.msk [vmem:[%s447 + $0xf] sm:$0x1] %vm899, %v1139
      %1142 = vst.sshfl [vmem:[#allocation1] sm:$0xff pattern:$0x75316420] %v399
      %s1143 = scalar_lea.vmem [#allocation1], 1
      %v1144 = vld [vmem:[%s1143] ss:$2 sm:$0xff]
      %1145 = vst.sshfl [vmem:[#allocation1 + $0x10] sm:$0xff pattern:$0x75316420] %v401
      %s1146 = scalar_lea.vmem [#allocation1], 17
      %v1147 = vld [vmem:[%s1146] ss:$2 sm:$0xff]
      %1148 = vst.sshfl [vmem:[#allocation1 + $0x20] sm:$0xff pattern:$0x75316420] %v403
      %s1149 = scalar_lea.vmem [#allocation1], 33
      %v1150 = vld [vmem:[%s1149] ss:$2 sm:$0xff]
      %1151 = vst.sshfl [vmem:[#allocation1 + $0x30] sm:$0xff pattern:$0x75316420] %v405
      %s1152 = scalar_lea.vmem [#allocation1], 49
      %v1153 = vld [vmem:[%s1152] ss:$2 sm:$0xff]
      %v1154 = vrot.slane %v1144, 3
      %v1155 = vrot.slane %v1147, 2
      %v1156 = vsel %vm470, %v1155, %v1154
      %v1157 = vsel %vm472, %v1155, %v1156
      %v1158 = vrot.slane %v1150, 1
      %v1159 = vsel %vm475, %v1158, %v1157
      %v1160 = vsel %vm477, %v1158, %v1159
      %v1161 = vsel %vm480, %v1153, %v1160
      %v1162 = vsel %vm482, %v1153, %v1161
      %1164 = vst.msk [vmem:[%s437 + $0x40] sm:$0xf] %vm896, %v1162
      %1165 = vst [vmem:[#allocation1] sm:$0xff] %v420
      %s1166 = scalar_lea.vmem [#allocation1], 7
      %v1167 = vld [vmem:[%s1166] ss:$9 sm:$0xff]
      %1169 = vst.msk [vmem:[%s447 + $0x10] sm:$0x1] %vm899, %v1167
      %1170 = vrot.lane.b32.xlu0 %v483, 127
      %v1171 = vpop.permute.xlu0 %1170
      %vm1173 = vcmask 117760
      %1174 = vst.msk [vmem:[%s451 + $0x4] sm:$0xf] %vm1173, %v1171
      %1175 = vrot.lane.b32.xlu0 %v413, 127
      %v1176 = vpop.permute.xlu0 %1175
      %vm1178 = vcmp.lt.s32.totalorder %v432, 15
      %vm1179 = vmand %vm433, %vm1178
      %1180 = vst.msk [vmem:[%s461 + $0x1] sm:$0x1] %vm1179, %v1176
      %1181 = vrot.lane.b32.xlu0 %v505, 127
      %v1182 = vpop.permute.xlu0 %1181
      %1184 = vst.msk [vmem:[%s451 + $0x8] sm:$0xf] %vm1173, %v1182
      %1185 = vst [vmem:[#allocation1] sm:$0xff] %v413
      %s1186 = scalar_lea.vmem [#allocation1], 1
      %v1187 = vld [vmem:[%s1186] ss:$9 sm:$0xff]
      %1188 = vrot.lane.b32.xlu0 %v1187, 127
      %v1189 = vpop.permute.xlu0 %1188
      %1191 = vst.msk [vmem:[%s461 + $0x2] sm:$0x1] %vm1179, %v1189
      %1192 = vrot.lane.b32.xlu0 %v525, 127
      %v1193 = vpop.permute.xlu0 %1192
      %1195 = vst.msk [vmem:[%s451 + $0xc] sm:$0xf] %vm1173, %v1193
      %1196 = vst [vmem:[#allocation1] sm:$0xff] %v413
      %s1197 = scalar_lea.vmem [#allocation1], 2
      %v1198 = vld [vmem:[%s1197] ss:$9 sm:$0xff]
      %1199 = vrot.lane.b32.xlu0 %v1198, 127
      %v1200 = vpop.permute.xlu0 %1199
      %1202 = vst.msk [vmem:[%s461 + $0x3] sm:$0x1] %vm1179, %v1200
      %1203 = vrot.lane.b32.xlu0 %v545, 127
      %v1204 = vpop.permute.xlu0 %1203
      %1206 = vst.msk [vmem:[%s451 + $0x10] sm:$0xf] %vm1173, %v1204
      %1207 = vst [vmem:[#allocation1] sm:$0xff] %v413
      %s1208 = scalar_lea.vmem [#allocation1], 3
      %v1209 = vld [vmem:[%s1208] ss:$9 sm:$0xff]
      %1210 = vrot.lane.b32.xlu0 %v1209, 127
      %v1211 = vpop.permute.xlu0 %1210
      %1213 = vst.msk [vmem:[%s461 + $0x4] sm:$0x1] %vm1179, %v1211
      %1214 = vst.sshfl [vmem:[#allocation1] sm:$0xff pattern:$0x75316420] %v398
      %s1215 = scalar_lea.vmem [#allocation1], 1
      %v1216 = vld [vmem:[%s1215] ss:$2 sm:$0xff]
      %1217 = vst.sshfl [vmem:[#allocation1 + $0x10] sm:$0xff pattern:$0x75316420] %v400
      %s1218 = scalar_lea.vmem [#allocation1], 17
      %v1219 = vld [vmem:[%s1218] ss:$2 sm:$0xff]
      %1220 = vst.sshfl [vmem:[#allocation1 + $0x20] sm:$0xff pattern:$0x75316420] %v402
      %s1221 = scalar_lea.vmem [#allocation1], 33
      %v1222 = vld [vmem:[%s1221] ss:$2 sm:$0xff]
      %1223 = vst.sshfl [vmem:[#allocation1 + $0x30] sm:$0xff pattern:$0x75316420] %v404
      %s1224 = scalar_lea.vmem [#allocation1], 49
      %v1225 = vld [vmem:[%s1224] ss:$2 sm:$0xff]
      %v1226 = vrot.slane %v1219, 7
      %v1227 = vsel %vm470, %v1226, %v1216
      %v1228 = vsel %vm472, %v1226, %v1227
      %v1229 = vrot.slane %v1222, 6
      %v1230 = vsel %vm475, %v1229, %v1228
      %v1231 = vsel %vm477, %v1229, %v1230
      %v1232 = vrot.slane %v1225, 5
      %v1233 = vsel %vm480, %v1232, %v1231
      %v1234 = vsel %vm482, %v1232, %v1233
      %1235 = vrot.lane.b32.xlu0 %v1234, 127
      %v1236 = vpop.permute.xlu0 %1235
      %1238 = vst.msk [vmem:[%s451 + $0x14] sm:$0xf] %vm1173, %v1236
      %1239 = vst [vmem:[#allocation1] sm:$0xff] %v413
      %s1240 = scalar_lea.vmem [#allocation1], 4
      %v1241 = vld [vmem:[%s1240] ss:$9 sm:$0xff]
      %1242 = vrot.lane.b32.xlu0 %v1241, 127
      %v1243 = vpop.permute.xlu0 %1242
      %1245 = vst.msk [vmem:[%s461 + $0x5] sm:$0x1] %vm1179, %v1243
      %1246 = vst.sshfl [vmem:[#allocation1] sm:$0xff pattern:$0x75316420] %v398
      %s1247 = scalar_lea.vmem [#allocation1], 1
      %v1248 = vld [vmem:[%s1247] ss:$2 sm:$0xff]
      %1249 = vst.sshfl [vmem:[#allocation1 + $0x10] sm:$0xff pattern:$0x75316420] %v400
      %s1250 = scalar_lea.vmem [#allocation1], 17
      %v1251 = vld [vmem:[%s1250] ss:$2 sm:$0xff]
      %1252 = vst.sshfl [vmem:[#allocation1 + $0x20] sm:$0xff pattern:$0x75316420] %v402
      %s1253 = scalar_lea.vmem [#allocation1], 33
      %v1254 = vld [vmem:[%s1253] ss:$2 sm:$0xff]
      %1255 = vst.sshfl [vmem:[#allocation1 + $0x30] sm:$0xff pattern:$0x75316420] %v404
      %s1256 = scalar_lea.vmem [#allocation1], 49
      %v1257 = vld [vmem:[%s1256] ss:$2 sm:$0xff]
      %v1258 = vrot.slane %v1248, 1
      %v1259 = vsel %vm470, %v1251, %v1258
      %v1260 = vsel %vm472, %v1251, %v1259
      %v1261 = vrot.slane %v1254, 7
      %v1262 = vsel %vm475, %v1261, %v1260
      %v1263 = vsel %vm477, %v1261, %v1262
      %v1264 = vrot.slane %v1257, 6
      %v1265 = vsel %vm480, %v1264, %v1263
      %v1266 = vsel %vm482, %v1264, %v1265
      %1267 = vrot.lane.b32.xlu0 %v1266, 127
      %v1268 = vpop.permute.xlu0 %1267
      %1270 = vst.msk [vmem:[%s451 + $0x18] sm:$0xf] %vm1173, %v1268
      %1271 = vst [vmem:[#allocation1] sm:$0xff] %v413
      %s1272 = scalar_lea.vmem [#allocation1], 5
      %v1273 = vld [vmem:[%s1272] ss:$9 sm:$0xff]
      %1274 = vrot.lane.b32.xlu0 %v1273, 127
      %v1275 = vpop.permute.xlu0 %1274
      %1277 = vst.msk [vmem:[%s461 + $0x6] sm:$0x1] %vm1179, %v1275
      %1278 = vst.sshfl [vmem:[#allocation1] sm:$0xff pattern:$0x75316420] %v398
      %s1279 = scalar_lea.vmem [#allocation1], 1
      %v1280 = vld [vmem:[%s1279] ss:$2 sm:$0xff]
      %1281 = vst.sshfl [vmem:[#allocation1 + $0x10] sm:$0xff pattern:$0x75316420] %v400
      %s1282 = scalar_lea.vmem [#allocation1], 17
      %v1283 = vld [vmem:[%s1282] ss:$2 sm:$0xff]
      %1284 = vst.sshfl [vmem:[#allocation1 + $0x20] sm:$0xff pattern:$0x75316420] %v402
      %s1285 = scalar_lea.vmem [#allocation1], 33
      %v1286 = vld [vmem:[%s1285] ss:$2 sm:$0xff]
      %1287 = vst.sshfl [vmem:[#allocation1 + $0x30] sm:$0xff pattern:$0x75316420] %v404
      %s1288 = scalar_lea.vmem [#allocation1], 49
      %v1289 = vld [vmem:[%s1288] ss:$2 sm:$0xff]
      %v1290 = vrot.slane %v1280, 2
      %v1291 = vrot.slane %v1283, 1
      %v1292 = vsel %vm470, %v1291, %v1290
      %v1293 = vsel %vm472, %v1291, %v1292
      %v1294 = vsel %vm475, %v1286, %v1293
      %v1295 = vsel %vm477, %v1286, %v1294
      %v1296 = vrot.slane %v1289, 7
      %v1297 = vsel %vm480, %v1296, %v1295
      %v1298 = vsel %vm482, %v1296, %v1297
      %1299 = vrot.lane.b32.xlu0 %v1298, 127
      %v1300 = vpop.permute.xlu0 %1299
      %1302 = vst.msk [vmem:[%s451 + $0x1c] sm:$0xf] %vm1173, %v1300
      %1303 = vst [vmem:[#allocation1] sm:$0xff] %v413
      %s1304 = scalar_lea.vmem [#allocation1], 6
      %v1305 = vld [vmem:[%s1304] ss:$9 sm:$0xff]
      %1306 = vrot.lane.b32.xlu0 %v1305, 127
      %v1307 = vpop.permute.xlu0 %1306
      %1309 = vst.msk [vmem:[%s461 + $0x7] sm:$0x1] %vm1179, %v1307
      %1310 = vst.sshfl [vmem:[#allocation1] sm:$0xff pattern:$0x75316420] %v398
      %s1311 = scalar_lea.vmem [#allocation1], 1
      %v1312 = vld [vmem:[%s1311] ss:$2 sm:$0xff]
      %1313 = vst.sshfl [vmem:[#allocation1 + $0x10] sm:$0xff pattern:$0x75316420] %v400
      %s1314 = scalar_lea.vmem [#allocation1], 17
      %v1315 = vld [vmem:[%s1314] ss:$2 sm:$0xff]
      %1316 = vst.sshfl [vmem:[#allocation1 + $0x20] sm:$0xff pattern:$0x75316420] %v402
      %s1317 = scalar_lea.vmem [#allocation1], 33
      %v1318 = vld [vmem:[%s1317] ss:$2 sm:$0xff]
      %1319 = vst.sshfl [vmem:[#allocation1 + $0x30] sm:$0xff pattern:$0x75316420] %v404
      %s1320 = scalar_lea.vmem [#allocation1], 49
      %v1321 = vld [vmem:[%s1320] ss:$2 sm:$0xff]
      %v1322 = vrot.slane %v1312, 3
      %v1323 = vrot.slane %v1315, 2
      %v1324 = vsel %vm470, %v1323, %v1322
      %v1325 = vsel %vm472, %v1323, %v1324
      %v1326 = vrot.slane %v1318, 1
      %v1327 = vsel %vm475, %v1326, %v1325
      %v1328 = vsel %vm477, %v1326, %v1327
      %v1329 = vsel %vm480, %v1321, %v1328
      %v1330 = vsel %vm482, %v1321, %v1329
      %1331 = vrot.lane.b32.xlu0 %v1330, 127
      %v1332 = vpop.permute.xlu0 %1331
      %1334 = vst.msk [vmem:[%s451 + $0x20] sm:$0xf] %vm1173, %v1332
      %1335 = vst [vmem:[#allocation1] sm:$0xff] %v413
      %s1336 = scalar_lea.vmem [#allocation1], 7
      %v1337 = vld [vmem:[%s1336] ss:$9 sm:$0xff]
      %1338 = vrot.lane.b32.xlu0 %v1337, 127
      %v1339 = vpop.permute.xlu0 %1338
      %1341 = vst.msk [vmem:[%s461 + $0x8] sm:$0x1] %vm1179, %v1339
      %1342 = vrot.lane.b32.xlu0 %v697, 127
      %v1343 = vpop.permute.xlu0 %1342
      %1345 = vst.msk [vmem:[%s451 + $0x24] sm:$0xf] %vm1173, %v1343
      %1346 = vrot.lane.b32.xlu0 %v420, 127
      %v1347 = vpop.permute.xlu0 %1346
      %1349 = vst.msk [vmem:[%s461 + $0x9] sm:$0x1] %vm1179, %v1347
      %1350 = vrot.lane.b32.xlu0 %v715, 127
      %v1351 = vpop.permute.xlu0 %1350
      %1353 = vst.msk [vmem:[%s451 + $0x28] sm:$0xf] %vm1173, %v1351
      %1354 = vst [vmem:[#allocation1] sm:$0xff] %v420
      %s1355 = scalar_lea.vmem [#allocation1], 1
      %v1356 = vld [vmem:[%s1355] ss:$9 sm:$0xff]
      %1357 = vrot.lane.b32.xlu0 %v1356, 127
      %v1358 = vpop.permute.xlu0 %1357
      %1360 = vst.msk [vmem:[%s461 + $0xa] sm:$0x1] %vm1179, %v1358
      %1361 = vrot.lane.b32.xlu0 %v735, 127
      %v1362 = vpop.permute.xlu0 %1361
      %1364 = vst.msk [vmem:[%s451 + $0x2c] sm:$0xf] %vm1173, %v1362
      %1365 = vst [vmem:[#allocation1] sm:$0xff] %v420
      %s1366 = scalar_lea.vmem [#allocation1], 2
      %v1367 = vld [vmem:[%s1366] ss:$9 sm:$0xff]
      %1368 = vrot.lane.b32.xlu0 %v1367, 127
      %v1369 = vpop.permute.xlu0 %1368
      %1371 = vst.msk [vmem:[%s461 + $0xb] sm:$0x1] %vm1179, %v1369
      %1372 = vrot.lane.b32.xlu0 %v755, 127
      %v1373 = vpop.permute.xlu0 %1372
      %1375 = vst.msk [vmem:[%s451 + $0x30] sm:$0xf] %vm1173, %v1373
      %1376 = vst [vmem:[#allocation1] sm:$0xff] %v420
      %s1377 = scalar_lea.vmem [#allocation1], 3
      %v1378 = vld [vmem:[%s1377] ss:$9 sm:$0xff]
      %1379 = vrot.lane.b32.xlu0 %v1378, 127
      %v1380 = vpop.permute.xlu0 %1379
      %1382 = vst.msk [vmem:[%s461 + $0xc] sm:$0x1] %vm1179, %v1380
      %1383 = vst.sshfl [vmem:[#allocation1] sm:$0xff pattern:$0x75316420] %v399
      %s1384 = scalar_lea.vmem [#allocation1], 1
      %v1385 = vld [vmem:[%s1384] ss:$2 sm:$0xff]
      %1386 = vst.sshfl [vmem:[#allocation1 + $0x10] sm:$0xff pattern:$0x75316420] %v401
      %s1387 = scalar_lea.vmem [#allocation1], 17
      %v1388 = vld [vmem:[%s1387] ss:$2 sm:$0xff]
      %1389 = vst.sshfl [vmem:[#allocation1 + $0x20] sm:$0xff pattern:$0x75316420] %v403
      %s1390 = scalar_lea.vmem [#allocation1], 33
      %v1391 = vld [vmem:[%s1390] ss:$2 sm:$0xff]
      %1392 = vst.sshfl [vmem:[#allocation1 + $0x30] sm:$0xff pattern:$0x75316420] %v405
      %s1393 = scalar_lea.vmem [#allocation1], 49
      %v1394 = vld [vmem:[%s1393] ss:$2 sm:$0xff]
      %v1395 = vrot.slane %v1388, 7
      %v1396 = vsel %vm470, %v1395, %v1385
      %v1397 = vsel %vm472, %v1395, %v1396
      %v1398 = vrot.slane %v1391, 6
      %v1399 = vsel %vm475, %v1398, %v1397
      %v1400 = vsel %vm477, %v1398, %v1399
      %v1401 = vrot.slane %v1394, 5
      %v1402 = vsel %vm480, %v1401, %v1400
      %v1403 = vsel %vm482, %v1401, %v1402
      %1404 = vrot.lane.b32.xlu0 %v1403, 127
      %v1405 = vpop.permute.xlu0 %1404
      %1407 = vst.msk [vmem:[%s451 + $0x34] sm:$0xf] %vm1173, %v1405
      %1408 = vst [vmem:[#allocation1] sm:$0xff] %v420
      %s1409 = scalar_lea.vmem [#allocation1], 4
      %v1410 = vld [vmem:[%s1409] ss:$9 sm:$0xff]
      %1411 = vrot.lane.b32.xlu0 %v1410, 127
      %v1412 = vpop.permute.xlu0 %1411
      %1414 = vst.msk [vmem:[%s461 + $0xd] sm:$0x1] %vm1179, %v1412
      %1415 = vst.sshfl [vmem:[#allocation1] sm:$0xff pattern:$0x75316420] %v399
      %s1416 = scalar_lea.vmem [#allocation1], 1
      %v1417 = vld [vmem:[%s1416] ss:$2 sm:$0xff]
      %1418 = vst.sshfl [vmem:[#allocation1 + $0x10] sm:$0xff pattern:$0x75316420] %v401
      %s1419 = scalar_lea.vmem [#allocation1], 17
      %v1420 = vld [vmem:[%s1419] ss:$2 sm:$0xff]
      %1421 = vst.sshfl [vmem:[#allocation1 + $0x20] sm:$0xff pattern:$0x75316420] %v403
      %s1422 = scalar_lea.vmem [#allocation1], 33
      %v1423 = vld [vmem:[%s1422] ss:$2 sm:$0xff]
      %1424 = vst.sshfl [vmem:[#allocation1 + $0x30] sm:$0xff pattern:$0x75316420] %v405
      %s1425 = scalar_lea.vmem [#allocation1], 49
      %v1426 = vld [vmem:[%s1425] ss:$2 sm:$0xff]
      %v1427 = vrot.slane %v1417, 1
      %v1428 = vsel %vm470, %v1420, %v1427
      %v1429 = vsel %vm472, %v1420, %v1428
      %v1430 = vrot.slane %v1423, 7
      %v1431 = vsel %vm475, %v1430, %v1429
      %v1432 = vsel %vm477, %v1430, %v1431
      %v1433 = vrot.slane %v1426, 6
      %v1434 = vsel %vm480, %v1433, %v1432
      %v1435 = vsel %vm482, %v1433, %v1434
      %1436 = vrot.lane.b32.xlu0 %v1435, 127
      %v1437 = vpop.permute.xlu0 %1436
      %1439 = vst.msk [vmem:[%s451 + $0x38] sm:$0xf] %vm1173, %v1437
      %1440 = vst [vmem:[#allocation1] sm:$0xff] %v420
      %s1441 = scalar_lea.vmem [#allocation1], 5
      %v1442 = vld [vmem:[%s1441] ss:$9 sm:$0xff]
      %1443 = vrot.lane.b32.xlu0 %v1442, 127
      %v1444 = vpop.permute.xlu0 %1443
      %1446 = vst.msk [vmem:[%s461 + $0xe] sm:$0x1] %vm1179, %v1444
      %1447 = vst.sshfl [vmem:[#allocation1] sm:$0xff pattern:$0x75316420] %v399
      %s1448 = scalar_lea.vmem [#allocation1], 1
      %v1449 = vld [vmem:[%s1448] ss:$2 sm:$0xff]
      %1450 = vst.sshfl [vmem:[#allocation1 + $0x10] sm:$0xff pattern:$0x75316420] %v401
      %s1451 = scalar_lea.vmem [#allocation1], 17
      %v1452 = vld [vmem:[%s1451] ss:$2 sm:$0xff]
      %1453 = vst.sshfl [vmem:[#allocation1 + $0x20] sm:$0xff pattern:$0x75316420] %v403
      %s1454 = scalar_lea.vmem [#allocation1], 33
      %v1455 = vld [vmem:[%s1454] ss:$2 sm:$0xff]
      %1456 = vst.sshfl [vmem:[#allocation1 + $0x30] sm:$0xff pattern:$0x75316420] %v405
      %s1457 = scalar_lea.vmem [#allocation1], 49
      %v1458 = vld [vmem:[%s1457] ss:$2 sm:$0xff]
      %v1459 = vrot.slane %v1449, 2
      %v1460 = vrot.slane %v1452, 1
      %v1461 = vsel %vm470, %v1460, %v1459
      %v1462 = vsel %vm472, %v1460, %v1461
      %v1463 = vsel %vm475, %v1455, %v1462
      %v1464 = vsel %vm477, %v1455, %v1463
      %v1465 = vrot.slane %v1458, 7
      %v1466 = vsel %vm480, %v1465, %v1464
      %v1467 = vsel %vm482, %v1465, %v1466
      %1468 = vrot.lane.b32.xlu0 %v1467, 127
      %v1469 = vpop.permute.xlu0 %1468
      %1471 = vst.msk [vmem:[%s451 + $0x3c] sm:$0xf] %vm1173, %v1469
      %1472 = vst [vmem:[#allocation1] sm:$0xff] %v420
      %s1473 = scalar_lea.vmem [#allocation1], 6
      %v1474 = vld [vmem:[%s1473] ss:$9 sm:$0xff]
      %1475 = vrot.lane.b32.xlu0 %v1474, 127
      %v1476 = vpop.permute.xlu0 %1475
      %1478 = vst.msk [vmem:[%s461 + $0xf] sm:$0x1] %vm1179, %v1476
      %1479 = vst.sshfl [vmem:[#allocation1] sm:$0xff pattern:$0x75316420] %v399
      %s1480 = scalar_lea.vmem [#allocation1], 1
      %v1481 = vld [vmem:[%s1480] ss:$2 sm:$0xff]
      %1482 = vst.sshfl [vmem:[#allocation1 + $0x10] sm:$0xff pattern:$0x75316420] %v401
      %s1483 = scalar_lea.vmem [#allocation1], 17
      %v1484 = vld [vmem:[%s1483] ss:$2 sm:$0xff]
      %1485 = vst.sshfl [vmem:[#allocation1 + $0x20] sm:$0xff pattern:$0x75316420] %v403
      %s1486 = scalar_lea.vmem [#allocation1], 33
      %v1487 = vld [vmem:[%s1486] ss:$2 sm:$0xff]
      %1488 = vst.sshfl [vmem:[#allocation1 + $0x30] sm:$0xff pattern:$0x75316420] %v405
      %s1489 = scalar_lea.vmem [#allocation1], 49
      %v1490 = vld [vmem:[%s1489] ss:$2 sm:$0xff]
      %v1491 = vrot.slane %v1481, 3
      %v1492 = vrot.slane %v1484, 2
      %v1493 = vsel %vm470, %v1492, %v1491
      %v1494 = vsel %vm472, %v1492, %v1493
      %v1495 = vrot.slane %v1487, 1
      %v1496 = vsel %vm475, %v1495, %v1494
      %v1497 = vsel %vm477, %v1495, %v1496
      %v1498 = vsel %vm480, %v1490, %v1497
      %v1499 = vsel %vm482, %v1490, %v1498
      %1500 = vrot.lane.b32.xlu0 %v1499, 127
      %v1501 = vpop.permute.xlu0 %1500
      %1503 = vst.msk [vmem:[%s451 + $0x40] sm:$0xf] %vm1173, %v1501
      %1504 = vst [vmem:[#allocation1] sm:$0xff] %v420
      %s1505 = scalar_lea.vmem [#allocation1], 7
      %v1506 = vld [vmem:[%s1505] ss:$9 sm:$0xff]
      %1507 = vrot.lane.b32.xlu0 %v1506, 127
      %v1508 = vpop.permute.xlu0 %1507
      %1510 = vst.msk [vmem:[%s461 + $0x10] sm:$0x1] %vm1179, %v1508
      %v1511 = vld [vmem:[%s2] sm:$0xff]
      %v1512 = vld [vmem:[%s3] sm:$0xff]
      %v1513 = vld [vmem:[#allocation2] sm:$0xff]
      %v1514 = vld [vmem:[#allocation2 + $0x8] sm:$0xff]
      %1517 = vst [vmem:[#allocation1] ss:$2 sm:$0xff] %v1513
      %s1518 = scalar_lea.vmem [#allocation1], 16
      %1519 = vst [vmem:[%s1518] ss:$2 sm:$0xff] %v1514
      %v1520 = vld.sshfl [vmem:[#allocation1] sm:$0xff pattern:$0x75316420]
      %v1521 = vld.sshfl [vmem:[#allocation1 + $0x8] sm:$0xff pattern:$0x75316420]
      %v1522 = vld.sshfl [vmem:[#allocation1 + $0x10] sm:$0xff pattern:$0x75316420]
      %v1523 = vld.sshfl [vmem:[#allocation1 + $0x18] sm:$0xff pattern:$0x75316420]
      %1528 = vst [vmem:[#allocation4] sm:$0xf] %v1520
      %1529 = vst [vmem:[#allocation4 + $0x8] sm:$0xf] %v1521
      %1530 = vst [vmem:[#allocation4 + $0x10] sm:$0xf] %v1522
      %1531 = vst [vmem:[#allocation4 + $0x18] sm:$0xf] %v1523
      %v1532 = vld [vmem:[#allocation3] sm:$0xf]
      %v1533 = vadd.f32 %v1532, 0.0
      %s1534 = sadd.s32 0, 18
      %s1535 = smul.addr %s1534, 4
      %s1536 = scalar_lea.vmem [#allocation2], %s1535
      %v1537 = vld [vmem:[%s1536] sm:$0xff]
      %v1538 = vld [vmem:[%s1536 + $0x8] sm:$0xff]
      %s1541 = scalar_lea.vmem [#allocation1], 1
      %1542 = vst [vmem:[%s1541] ss:$2 sm:$0xff] %v1537
      %s1543 = scalar_lea.vmem [#allocation1], 17
      %1544 = vst [vmem:[%s1543] ss:$2 sm:$0xff] %v1538
      %v1545 = vld.sshfl [vmem:[#allocation1] sm:$0xff pattern:$0x75316420]
      %v1546 = vld.sshfl [vmem:[#allocation1 + $0x8] sm:$0xff pattern:$0x75316420]
      %v1547 = vld.sshfl [vmem:[#allocation1 + $0x10] sm:$0xff pattern:$0x75316420]
      %v1548 = vld.sshfl [vmem:[#allocation1 + $0x18] sm:$0xff pattern:$0x75316420]
      %1553 = vst [vmem:[#allocation4] sm:$0xf0] %v1545
      %1554 = vst [vmem:[#allocation4 + $0x8] sm:$0xf0] %v1546
      %1555 = vst [vmem:[#allocation4 + $0x10] sm:$0xf0] %v1547
      %1556 = vst [vmem:[#allocation4 + $0x18] sm:$0xf0] %v1548
      %s1557 = scalar_lea.vmem [#allocation3], %s1534
      %v1558 = vld [vmem:[%s1557] sm:$0xf]
      %v1559 = vadd.f32 %v1533, %v1558
      %s1560 = sadd.s32 0, 36
      %s1561 = smul.addr %s1560, 4
      %s1562 = scalar_lea.vmem [#allocation2], %s1561
      %v1563 = vld [vmem:[%s1562] sm:$0xff]
      %v1564 = vld [vmem:[%s1562 + $0x8] sm:$0xff]
      %1567 = vst [vmem:[#allocation1] ss:$2 sm:$0xff] %v1563
      %s1568 = scalar_lea.vmem [#allocation1], 16
      %1569 = vst [vmem:[%s1568] ss:$2 sm:$0xff] %v1564
      %v1570 = vld.sshfl [vmem:[#allocation1] sm:$0xff pattern:$0x75316420]
      %v1571 = vld.sshfl [vmem:[#allocation1 + $0x8] sm:$0xff pattern:$0x75316420]
      %v1572 = vld.sshfl [vmem:[#allocation1 + $0x10] sm:$0xff pattern:$0x75316420]
      %v1573 = vld.sshfl [vmem:[#allocation1 + $0x18] sm:$0xff pattern:$0x75316420]
      %1578 = vst [vmem:[#allocation4 + $0x20] sm:$0xf] %v1570
      %1579 = vst [vmem:[#allocation4 + $0x28] sm:$0xf] %v1571
      %1580 = vst [vmem:[#allocation4 + $0x30] sm:$0xf] %v1572
      %1581 = vst [vmem:[#allocation4 + $0x38] sm:$0xf] %v1573
      %s1582 = scalar_lea.vmem [#allocation3], %s1560
      %v1583 = vld [vmem:[%s1582] sm:$0xf]
      %v1584 = vadd.f32 %v1559, %v1583
      %s1585 = sadd.s32 0, 128
      %s1586 = sshra.s32 %s1585, 7
      %s1587 = sand.u32 %s1585, 127
      %s1588 = smul.addr %s1586, 4
      %s1589 = scalar_lea.vmem [#allocation2], %s1588
      %v1590 = vld [vmem:[%s1589] sm:$0xff]
      %v1591 = vld [vmem:[%s1589 + $0x8] sm:$0xff]
      %s1594 = scalar_lea.vmem [#allocation1], 1
      %1595 = vst [vmem:[%s1594] ss:$2 sm:$0xff] %v1590
      %s1596 = scalar_lea.vmem [#allocation1], 17
      %1597 = vst [vmem:[%s1596] ss:$2 sm:$0xff] %v1591
      %v1598 = vld.sshfl [vmem:[#allocation1] sm:$0xff pattern:$0x75316420]
      %v1599 = vld.sshfl [vmem:[#allocation1 + $0x8] sm:$0xff pattern:$0x75316420]
      %v1600 = vld.sshfl [vmem:[#allocation1 + $0x10] sm:$0xff pattern:$0x75316420]
      %v1601 = vld.sshfl [vmem:[#allocation1 + $0x18] sm:$0xff pattern:$0x75316420]
      %1606 = vst [vmem:[#allocation4 + $0x20] sm:$0xf0] %v1598
      %1607 = vst [vmem:[#allocation4 + $0x28] sm:$0xf0] %v1599
      %1608 = vst [vmem:[#allocation4 + $0x30] sm:$0xf0] %v1600
      %1609 = vst [vmem:[#allocation4 + $0x38] sm:$0xf0] %v1601
      %s1610 = scalar_lea.vmem [#allocation3], %s1586
      %v1611 = vld [vmem:[%s1610] sm:$0xf]
      %v1612 = vadd.f32 %v1584, %v1611
      %s1613 = sadd.s32 %s1586, 18
      %s1614 = smul.addr %s1613, 4
      %s1615 = scalar_lea.vmem [#allocation2], %s1614
      %v1616 = vld [vmem:[%s1615] sm:$0xff]
      %v1617 = vld [vmem:[%s1615 + $0x8] sm:$0xff]
      %1620 = vst [vmem:[#allocation1] ss:$2 sm:$0xff] %v1616
      %s1621 = scalar_lea.vmem [#allocation1], 16
      %1622 = vst [vmem:[%s1621] ss:$2 sm:$0xff] %v1617
      %v1623 = vld.sshfl [vmem:[#allocation1] sm:$0xff pattern:$0x75316420]
      %v1624 = vld.sshfl [vmem:[#allocation1 + $0x8] sm:$0xff pattern:$0x75316420]
      %v1625 = vld.sshfl [vmem:[#allocation1 + $0x10] sm:$0xff pattern:$0x75316420]
      %v1626 = vld.sshfl [vmem:[#allocation1 + $0x18] sm:$0xff pattern:$0x75316420]
      %1631 = vst [vmem:[#allocation4 + $0x40] sm:$0xf] %v1623
      %1632 = vst [vmem:[#allocation4 + $0x48] sm:$0xf] %v1624
      %1633 = vst [vmem:[#allocation4 + $0x50] sm:$0xf] %v1625
      %1634 = vst [vmem:[#allocation4 + $0x58] sm:$0xf] %v1626
      %s1635 = scalar_lea.vmem [#allocation3], %s1613
      %v1636 = vld [vmem:[%s1635] sm:$0xf]
      %v1637 = vadd.f32 %v1612, %v1636
      %s1638 = sadd.s32 %s1586, 36
      %s1639 = smul.addr %s1638, 4
      %s1640 = scalar_lea.vmem [#allocation2], %s1639
      %v1641 = vld [vmem:[%s1640] sm:$0xff]
      %v1642 = vld [vmem:[%s1640 + $0x8] sm:$0xff]
      %s1645 = scalar_lea.vmem [#allocation1], 1
      %1646 = vst [vmem:[%s1645] ss:$2 sm:$0xff] %v1641
      %s1647 = scalar_lea.vmem [#allocation1], 17
      %1648 = vst [vmem:[%s1647] ss:$2 sm:$0xff] %v1642
      %v1649 = vld.sshfl [vmem:[#allocation1] sm:$0xff pattern:$0x75316420]
      %v1650 = vld.sshfl [vmem:[#allocation1 + $0x8] sm:$0xff pattern:$0x75316420]
      %v1651 = vld.sshfl [vmem:[#allocation1 + $0x10] sm:$0xff pattern:$0x75316420]
      %v1652 = vld.sshfl [vmem:[#allocation1 + $0x18] sm:$0xff pattern:$0x75316420]
      %1657 = vst [vmem:[#allocation4 + $0x40] sm:$0xf0] %v1649
      %1658 = vst [vmem:[#allocation4 + $0x48] sm:$0xf0] %v1650
      %1659 = vst [vmem:[#allocation4 + $0x50] sm:$0xf0] %v1651
      %1660 = vst [vmem:[#allocation4 + $0x58] sm:$0xf0] %v1652
      %s1661 = scalar_lea.vmem [#allocation3], %s1638
      %v1662 = vld [vmem:[%s1661] sm:$0xf]
      %v1663 = vadd.f32 %v1637, %v1662
      %s1664 = sadd.s32 0, 256
      %s1665 = sshra.s32 %s1664, 7
      %s1666 = sand.u32 %s1664, 127
      %s1667 = smul.addr %s1665, 4
      %s1668 = scalar_lea.vmem [#allocation2], %s1667
      %v1669 = vld [vmem:[%s1668] sm:$0xff]
      %v1670 = vld [vmem:[%s1668 + $0x8] sm:$0xff]
      %1673 = vst [vmem:[#allocation1] ss:$2 sm:$0xff] %v1669
      %s1674 = scalar_lea.vmem [#allocation1], 16
      %1675 = vst [vmem:[%s1674] ss:$2 sm:$0xff] %v1670
      %v1676 = vld.sshfl [vmem:[#allocation1] sm:$0xff pattern:$0x75316420]
      %v1677 = vld.sshfl [vmem:[#allocation1 + $0x8] sm:$0xff pattern:$0x75316420]
      %v1678 = vld.sshfl [vmem:[#allocation1 + $0x10] sm:$0xff pattern:$0x75316420]
      %v1679 = vld.sshfl [vmem:[#allocation1 + $0x18] sm:$0xff pattern:$0x75316420]
      %1684 = vst [vmem:[#allocation4 + $0x60] sm:$0xf] %v1676
      %1685 = vst [vmem:[#allocation4 + $0x68] sm:$0xf] %v1677
      %1686 = vst [vmem:[#allocation4 + $0x70] sm:$0xf] %v1678
      %1687 = vst [vmem:[#allocation4 + $0x78] sm:$0xf] %v1679
      %s1688 = scalar_lea.vmem [#allocation3], %s1665
      %v1689 = vld [vmem:[%s1688] sm:$0xf]
      %v1690 = vadd.f32 %v1663, %v1689
      %s1691 = sadd.s32 %s1665, 18
      %s1692 = smul.addr %s1691, 4
      %s1693 = scalar_lea.vmem [#allocation2], %s1692
      %v1694 = vld [vmem:[%s1693] sm:$0xff]
      %v1695 = vld [vmem:[%s1693 + $0x8] sm:$0xff]
      %s1698 = scalar_lea.vmem [#allocation1], 1
      %1699 = vst [vmem:[%s1698] ss:$2 sm:$0xff] %v1694
      %s1700 = scalar_lea.vmem [#allocation1], 17
      %1701 = vst [vmem:[%s1700] ss:$2 sm:$0xff] %v1695
      %v1702 = vld.sshfl [vmem:[#allocation1] sm:$0xff pattern:$0x75316420]
      %v1703 = vld.sshfl [vmem:[#allocation1 + $0x8] sm:$0xff pattern:$0x75316420]
      %v1704 = vld.sshfl [vmem:[#allocation1 + $0x10] sm:$0xff pattern:$0x75316420]
      %v1705 = vld.sshfl [vmem:[#allocation1 + $0x18] sm:$0xff pattern:$0x75316420]
      %1710 = vst [vmem:[#allocation4 + $0x60] sm:$0xf0] %v1702
      %1711 = vst [vmem:[#allocation4 + $0x68] sm:$0xf0] %v1703
      %1712 = vst [vmem:[#allocation4 + $0x70] sm:$0xf0] %v1704
      %1713 = vst [vmem:[#allocation4 + $0x78] sm:$0xf0] %v1705
      %s1714 = scalar_lea.vmem [#allocation3], %s1691
      %v1715 = vld [vmem:[%s1714] sm:$0xf]
      %v1716 = vadd.f32 %v1690, %v1715
      %s1717 = sadd.s32 %s1665, 36
      %s1718 = smul.addr %s1717, 4
      %s1719 = scalar_lea.vmem [#allocation2], %s1718
      %v1720 = vld [vmem:[%s1719] sm:$0xff]
      %v1721 = vld [vmem:[%s1719 + $0x8] sm:$0xff]
      %1724 = vst [vmem:[#allocation1] ss:$2 sm:$0xff] %v1720
      %s1725 = scalar_lea.vmem [#allocation1], 16
      %1726 = vst [vmem:[%s1725] ss:$2 sm:$0xff] %v1721
      %v1727 = vld.sshfl [vmem:[#allocation1] sm:$0xff pattern:$0x75316420]
      %v1728 = vld.sshfl [vmem:[#allocation1 + $0x8] sm:$0xff pattern:$0x75316420]
      %v1729 = vld.sshfl [vmem:[#allocation1 + $0x10] sm:$0xff pattern:$0x75316420]
      %v1730 = vld.sshfl [vmem:[#allocation1 + $0x18] sm:$0xff pattern:$0x75316420]
      %1735 = vst [vmem:[#allocation4 + $0x80] sm:$0xf] %v1727
      %1736 = vst [vmem:[#allocation4 + $0x88] sm:$0xf] %v1728
      %1737 = vst [vmem:[#allocation4 + $0x90] sm:$0xf] %v1729
      %1738 = vst [vmem:[#allocation4 + $0x98] sm:$0xf] %v1730
      %s1739 = scalar_lea.vmem [#allocation3], %s1717
      %v1740 = vld [vmem:[%s1739] sm:$0xf]
      %v1741 = vadd.f32 %v1716, %v1740
      %v1742 = vld [vmem:[#allocation4] sm:$0xff]
      %v1743 = vld [vmem:[#allocation4 + $0x8] sm:$0xff]
      %v1744 = vld [vmem:[#allocation4 + $0x10] sm:$0xff]
      %v1745 = vld [vmem:[#allocation4 + $0x18] sm:$0xff]
      %v1746 = vld [vmem:[#allocation4 + $0x20] sm:$0xff]
      %v1747 = vld [vmem:[#allocation4 + $0x28] sm:$0xff]
      %v1748 = vld [vmem:[#allocation4 + $0x30] sm:$0xff]
      %v1749 = vld [vmem:[#allocation4 + $0x38] sm:$0xff]
      %v1750 = vld [vmem:[#allocation4 + $0x40] sm:$0xff]
      %v1751 = vld [vmem:[#allocation4 + $0x48] sm:$0xff]
      %v1752 = vld [vmem:[#allocation4 + $0x50] sm:$0xff]
      %v1753 = vld [vmem:[#allocation4 + $0x58] sm:$0xff]
      %v1754 = vld [vmem:[#allocation4 + $0x60] sm:$0xff]
      %v1755 = vld [vmem:[#allocation4 + $0x68] sm:$0xff]
      %v1756 = vld [vmem:[#allocation4 + $0x70] sm:$0xff]
      %v1757 = vld [vmem:[#allocation4 + $0x78] sm:$0xff]
      %v1758 = vld [vmem:[#allocation4 + $0x80] sm:$0xf]
      %v1759 = vld [vmem:[#allocation4 + $0x88] sm:$0xf]
      %v1760 = vld [vmem:[#allocation4 + $0x90] sm:$0xf]
      %v1761 = vld [vmem:[#allocation4 + $0x98] sm:$0xf]
      %vm1762 = vcmask 293888
      %v1764 = vsel %vm1762, %v1511, 0
      %vm1766 = vcmask 1043456
      %v1768 = vsel %vm1766, %v1758, 0
      %v1771 = vsel %vm1766, %v1759, 0
      %v1774 = vsel %vm1766, %v1760, 0
      %v1777 = vsel %vm1766, %v1761, 0
      %1779 = vmatpush.msra.mxu0 0.0
      %1780 = vmatpush.msra.mxu0 0.0
      %1781 = vmatpush.msra.mxu0 0.0
      %1782 = vmatpush.msra.mxu0 0.0
      %1783 = vmatpush.msra.mxu0 0.0
      %1784 = vmatpush.msra.mxu0 0.0
      %1785 = vmatpush.msra.mxu0 0.0
      %1786 = vmatpush.msra.mxu0 0.0
      %1787 = vmatpush.msra.mxu0 0.0
      %1788 = vmatpush.msra.mxu0 0.0
      %1789 = vmatpush.msra.mxu0 0.0
      %1790 = vmatpush.msra.mxu0 %v1768
      %1791 = vmatpush.msra.mxu0 %v1754
      %1792 = vmatpush.msra.mxu0 %v1750
      %1793 = vmatpush.msra.mxu0 %v1746
      %1794 = vmatpush.msra.mxu0 %v1742
      %1795 = vmatmul.f32.gmra.mxu0 %v1764
      %v1796 = vpop.f32.mrf.mxu0
      %v1797 = vadd.f32 0.0, %v1796
      %1798 = vdwg.mxu0
      %1799 = vmatpush.msra.mxu0 0.0
      %1800 = vmatpush.msra.mxu0 0.0
      %1801 = vmatpush.msra.mxu0 0.0
      %1802 = vmatpush.msra.mxu0 0.0
      %1803 = vmatpush.msra.mxu0 0.0
      %1804 = vmatpush.msra.mxu0 0.0
      %1805 = vmatpush.msra.mxu0 0.0
      %1806 = vmatpush.msra.mxu0 0.0
      %1807 = vmatpush.msra.mxu0 0.0
      %1808 = vmatpush.msra.mxu0 0.0
      %1809 = vmatpush.msra.mxu0 0.0
      %1810 = vmatpush.msra.mxu0 %v1771
      %1811 = vmatpush.msra.mxu0 %v1755
      %1812 = vmatpush.msra.mxu0 %v1751
      %1813 = vmatpush.msra.mxu0 %v1747
      %1814 = vmatpush.msra.mxu0 %v1743
      %1815 = vmatmul.f32.gmra.mxu0 %v1764
      %v1816 = vpop.f32.mrf.mxu0
      %v1817 = vadd.f32 0.0, %v1816
      %1818 = vdwg.mxu0
      %1819 = vmatpush.msra.mxu0 0.0
      %1820 = vmatpush.msra.mxu0 0.0
      %1821 = vmatpush.msra.mxu0 0.0
      %1822 = vmatpush.msra.mxu0 0.0
      %1823 = vmatpush.msra.mxu0 0.0
      %1824 = vmatpush.msra.mxu0 0.0
      %1825 = vmatpush.msra.mxu0 0.0
      %1826 = vmatpush.msra.mxu0 0.0
      %1827 = vmatpush.msra.mxu0 0.0
      %1828 = vmatpush.msra.mxu0 0.0
      %1829 = vmatpush.msra.mxu0 0.0
      %1830 = vmatpush.msra.mxu0 %v1774
      %1831 = vmatpush.msra.mxu0 %v1756
      %1832 = vmatpush.msra.mxu0 %v1752
      %1833 = vmatpush.msra.mxu0 %v1748
      %1834 = vmatpush.msra.mxu0 %v1744
      %1835 = vmatmul.f32.gmra.mxu0 %v1764
      %v1836 = vpop.f32.mrf.mxu0
      %v1837 = vadd.f32 0.0, %v1836
      %1838 = vdwg.mxu0
      %1839 = vmatpush.msra.mxu0 0.0
      %1840 = vmatpush.msra.mxu0 0.0
      %1841 = vmatpush.msra.mxu0 0.0
      %1842 = vmatpush.msra.mxu0 0.0
      %1843 = vmatpush.msra.mxu0 0.0
      %1844 = vmatpush.msra.mxu0 0.0
      %1845 = vmatpush.msra.mxu0 0.0
      %1846 = vmatpush.msra.mxu0 0.0
      %1847 = vmatpush.msra.mxu0 0.0
      %1848 = vmatpush.msra.mxu0 0.0
      %1849 = vmatpush.msra.mxu0 0.0
      %1850 = vmatpush.msra.mxu0 %v1777
      %1851 = vmatpush.msra.mxu0 %v1757
      %1852 = vmatpush.msra.mxu0 %v1753
      %1853 = vmatpush.msra.mxu0 %v1749
      %1854 = vmatpush.msra.mxu0 %v1745
      %1855 = vmatmul.f32.gmra.mxu0 %v1764
      %v1856 = vpop.f32.mrf.mxu0
      %v1857 = vadd.f32 0.0, %v1856
      %1858 = vdwg.mxu0
      %v1859 = vadd.f32 %v1741, 1e-08
      %v1860 = vrcp.pop %v1859
      %v1861 = vmul.f32 %v1859, %v1860
      %v1862 = vsub.f32 2.0, %v1861
      %v1863 = vmul.f32 %v1860, %v1862
      %v1864 = vmax.f32 %v1741, 0.0
      %v1865 = vmin.f32 %v1864, 1.0
      %v1866 = vmul.f32 %v1863, 36.0
      %v1867 = vmul.f32 %v1866, %v1865
      %1869 = vset.pattern.permute.xlu0 0
      %1870 = vperm.xlu0 %1869, %v1512
      %v1871 = vpop.permute.xlu0 %1870
      %v1873 = vsub.f32 %v1797, %v1871
      %v1874 = vsub.f32 %v1817, %v1871
      %v1875 = vsub.f32 %v1837, %v1871
      %v1876 = vsub.f32 %v1857, %v1871
      %v1878 = vperm.slane %v1867, 0
      %v1879 = vperm.slane %v1867, 1
      %v1880 = vperm.slane %v1867, 2
      %v1881 = vperm.slane %v1867, 3
      %v1886 = vmul.f32 %v1873, %v1878
      %v1887 = vmul.f32 %v1874, %v1879
      %v1888 = vmul.f32 %v1875, %v1880
      %v1889 = vmul.f32 %v1876, %v1881
      %v1890 = vadd.f32 %v1886, %v1871
      %v1891 = vadd.f32 %v1887, %v1871
      %v1892 = vadd.f32 %v1888, %v1871
      %v1893 = vadd.f32 %v1889, %v1871
      %v1895 = vperm.slane %v1865, 0
      %v1896 = vperm.slane %v1865, 1
      %v1897 = vperm.slane %v1865, 2
      %v1898 = vperm.slane %v1865, 3
      %v1903 = vmul.f32 %v1890, %v1895
      %v1904 = vmul.f32 %v1891, %v1896
      %v1905 = vmul.f32 %v1892, %v1897
      %v1906 = vmul.f32 %v1893, %v1898
      %v1907 = vmax.f32 %v1903, 0.0
      %v1908 = vmax.f32 %v1904, 0.0
      %v1909 = vmax.f32 %v1905, 0.0
      %v1910 = vmax.f32 %v1906, 0.0
      %1911 = vst [vmem:[%s305] sm:$0xff] %v1907
      %1912 = vst [vmem:[%s305 + $0x8] sm:$0xff] %v1908
      %1913 = vst [vmem:[%s305 + $0x10] sm:$0xff] %v1909
      %1914 = vst [vmem:[%s305 + $0x18] sm:$0xff] %v1910
      %vm1915 = vcmp.lt.s32.totalorder %v432, 512
      %vm1916 = vmand %vm433, %vm1915
      %1917 = vst.msk [vmem:[%s309] sm:$0xf] %vm1916, %v1865
      %s1918 = scalar_lea.vmem [#allocation2], 16
      %v1919 = vld [vmem:[%s1918] sm:$0xff]
      %v1920 = vld [vmem:[%s1918 + $0x8] sm:$0xff]
      %1923 = vst [vmem:[#allocation1] ss:$2 sm:$0xff] %v1919
      %s1924 = scalar_lea.vmem [#allocation1], 16
      %1925 = vst [vmem:[%s1924] ss:$2 sm:$0xff] %v1920
      %v1926 = vld.sshfl [vmem:[#allocation1] sm:$0xff pattern:$0x75316420]
      %v1927 = vld.sshfl [vmem:[#allocation1 + $0x8] sm:$0xff pattern:$0x75316420]
      %v1928 = vld.sshfl [vmem:[#allocation1 + $0x10] sm:$0xff pattern:$0x75316420]
      %v1929 = vld.sshfl [vmem:[#allocation1 + $0x18] sm:$0xff pattern:$0x75316420]
      %1934 = vst [vmem:[#allocation4] sm:$0xf] %v1926
      %1935 = vst [vmem:[#allocation4 + $0x8] sm:$0xf] %v1927
      %1936 = vst [vmem:[#allocation4 + $0x10] sm:$0xf] %v1928
      %1937 = vst [vmem:[#allocation4 + $0x18] sm:$0xf] %v1929
      %s1938 = scalar_lea.vmem [#allocation3], 4
      %v1939 = vld [vmem:[%s1938] sm:$0xf]
      %v1940 = vadd.f32 %v1939, 0.0
      %s1941 = sadd.s32 4, 18
      %s1942 = smul.addr %s1941, 4
      %s1943 = scalar_lea.vmem [#allocation2], %s1942
      %v1944 = vld [vmem:[%s1943] sm:$0xff]
      %v1945 = vld [vmem:[%s1943 + $0x8] sm:$0xff]
      %s1948 = scalar_lea.vmem [#allocation1], 1
      %1949 = vst [vmem:[%s1948] ss:$2 sm:$0xff] %v1944
      %s1950 = scalar_lea.vmem [#allocation1], 17
      %1951 = vst [vmem:[%s1950] ss:$2 sm:$0xff] %v1945
      %v1952 = vld.sshfl [vmem:[#allocation1] sm:$0xff pattern:$0x75316420]
      %v1953 = vld.sshfl [vmem:[#allocation1 + $0x8] sm:$0xff pattern:$0x75316420]
      %v1954 = vld.sshfl [vmem:[#allocation1 + $0x10] sm:$0xff pattern:$0x75316420]
      %v1955 = vld.sshfl [vmem:[#allocation1 + $0x18] sm:$0xff pattern:$0x75316420]
      %1960 = vst [vmem:[#allocation4] sm:$0xf0] %v1952
      %1961 = vst [vmem:[#allocation4 + $0x8] sm:$0xf0] %v1953
      %1962 = vst [vmem:[#allocation4 + $0x10] sm:$0xf0] %v1954
      %1963 = vst [vmem:[#allocation4 + $0x18] sm:$0xf0] %v1955
      %s1964 = scalar_lea.vmem [#allocation3], %s1941
      %v1965 = vld [vmem:[%s1964] sm:$0xf]
      %v1966 = vadd.f32 %v1940, %v1965
      %s1967 = sadd.s32 4, 36
      %s1968 = smul.addr %s1967, 4
      %s1969 = scalar_lea.vmem [#allocation2], %s1968
      %v1970 = vld [vmem:[%s1969] sm:$0xff]
      %v1971 = vld [vmem:[%s1969 + $0x8] sm:$0xff]
      %1974 = vst [vmem:[#allocation1] ss:$2 sm:$0xff] %v1970
      %s1975 = scalar_lea.vmem [#allocation1], 16
      %1976 = vst [vmem:[%s1975] ss:$2 sm:$0xff] %v1971
      %v1977 = vld.sshfl [vmem:[#allocation1] sm:$0xff pattern:$0x75316420]
      %v1978 = vld.sshfl [vmem:[#allocation1 + $0x8] sm:$0xff pattern:$0x75316420]
      %v1979 = vld.sshfl [vmem:[#allocation1 + $0x10] sm:$0xff pattern:$0x75316420]
      %v1980 = vld.sshfl [vmem:[#allocation1 + $0x18] sm:$0xff pattern:$0x75316420]
      %1985 = vst [vmem:[#allocation4 + $0x20] sm:$0xf] %v1977
      %1986 = vst [vmem:[#allocation4 + $0x28] sm:$0xf] %v1978
      %1987 = vst [vmem:[#allocation4 + $0x30] sm:$0xf] %v1979
      %1988 = vst [vmem:[#allocation4 + $0x38] sm:$0xf] %v1980
      %s1989 = scalar_lea.vmem [#allocation3], %s1967
      %v1990 = vld [vmem:[%s1989] sm:$0xf]
      %v1991 = vadd.f32 %v1966, %v1990
      %s1992 = sadd.s32 512, 128
      %s1993 = sshra.s32 %s1992, 7
      %s1994 = sand.u32 %s1992, 127
      %s1995 = smul.addr %s1993, 4
      %s1996 = scalar_lea.vmem [#allocation2], %s1995
      %v1997 = vld [vmem:[%s1996] sm:$0xff]
      %v1998 = vld [vmem:[%s1996 + $0x8] sm:$0xff]
      %s2001 = scalar_lea.vmem [#allocation1], 1
      %2002 = vst [vmem:[%s2001] ss:$2 sm:$0xff] %v1997
      %s2003 = scalar_lea.vmem [#allocation1], 17
      %2004 = vst [vmem:[%s2003] ss:$2 sm:$0xff] %v1998
      %v2005 = vld.sshfl [vmem:[#allocation1] sm:$0xff pattern:$0x75316420]
      %v2006 = vld.sshfl [vmem:[#allocation1 + $0x8] sm:$0xff pattern:$0x75316420]
      %v2007 = vld.sshfl [vmem:[#allocation1 + $0x10] sm:$0xff pattern:$0x75316420]
      %v2008 = vld.sshfl [vmem:[#allocation1 + $0x18] sm:$0xff pattern:$0x75316420]
      %2013 = vst [vmem:[#allocation4 + $0x20] sm:$0xf0] %v2005
      %2014 = vst [vmem:[#allocation4 + $0x28] sm:$0xf0] %v2006
      %2015 = vst [vmem:[#allocation4 + $0x30] sm:$0xf0] %v2007
      %2016 = vst [vmem:[#allocation4 + $0x38] sm:$0xf0] %v2008
      %s2017 = scalar_lea.vmem [#allocation3], %s1993
      %v2018 = vld [vmem:[%s2017] sm:$0xf]
      %v2019 = vadd.f32 %v1991, %v2018
      %s2020 = sadd.s32 %s1993, 18
      %s2021 = smul.addr %s2020, 4
      %s2022 = scalar_lea.vmem [#allocation2], %s2021
      %v2023 = vld [vmem:[%s2022] sm:$0xff]
      %v2024 = vld [vmem:[%s2022 + $0x8] sm:$0xff]
      %2027 = vst [vmem:[#allocation1] ss:$2 sm:$0xff] %v2023
      %s2028 = scalar_lea.vmem [#allocation1], 16
      %2029 = vst [vmem:[%s2028] ss:$2 sm:$0xff] %v2024
      %v2030 = vld.sshfl [vmem:[#allocation1] sm:$0xff pattern:$0x75316420]
      %v2031 = vld.sshfl [vmem:[#allocation1 + $0x8] sm:$0xff pattern:$0x75316420]
      %v2032 = vld.sshfl [vmem:[#allocation1 + $0x10] sm:$0xff pattern:$0x75316420]
      %v2033 = vld.sshfl [vmem:[#allocation1 + $0x18] sm:$0xff pattern:$0x75316420]
      %2038 = vst [vmem:[#allocation4 + $0x40] sm:$0xf] %v2030
      %2039 = vst [vmem:[#allocation4 + $0x48] sm:$0xf] %v2031
      %2040 = vst [vmem:[#allocation4 + $0x50] sm:$0xf] %v2032
      %2041 = vst [vmem:[#allocation4 + $0x58] sm:$0xf] %v2033
      %s2042 = scalar_lea.vmem [#allocation3], %s2020
      %v2043 = vld [vmem:[%s2042] sm:$0xf]
      %v2044 = vadd.f32 %v2019, %v2043
      %s2045 = sadd.s32 %s1993, 36
      %s2046 = smul.addr %s2045, 4
      %s2047 = scalar_lea.vmem [#allocation2], %s2046
      %v2048 = vld [vmem:[%s2047] sm:$0xff]
      %v2049 = vld [vmem:[%s2047 + $0x8] sm:$0xff]
      %s2052 = scalar_lea.vmem [#allocation1], 1
      %2053 = vst [vmem:[%s2052] ss:$2 sm:$0xff] %v2048
      %s2054 = scalar_lea.vmem [#allocation1], 17
      %2055 = vst [vmem:[%s2054] ss:$2 sm:$0xff] %v2049
      %v2056 = vld.sshfl [vmem:[#allocation1] sm:$0xff pattern:$0x75316420]
      %v2057 = vld.sshfl [vmem:[#allocation1 + $0x8] sm:$0xff pattern:$0x75316420]
      %v2058 = vld.sshfl [vmem:[#allocation1 + $0x10] sm:$0xff pattern:$0x75316420]
      %v2059 = vld.sshfl [vmem:[#allocation1 + $0x18] sm:$0xff pattern:$0x75316420]
      %2064 = vst [vmem:[#allocation4 + $0x40] sm:$0xf0] %v2056
      %2065 = vst [vmem:[#allocation4 + $0x48] sm:$0xf0] %v2057
      %2066 = vst [vmem:[#allocation4 + $0x50] sm:$0xf0] %v2058
      %2067 = vst [vmem:[#allocation4 + $0x58] sm:$0xf0] %v2059
      %s2068 = scalar_lea.vmem [#allocation3], %s2045
      %v2069 = vld [vmem:[%s2068] sm:$0xf]
      %v2070 = vadd.f32 %v2044, %v2069
      %s2071 = sadd.s32 512, 256
      %s2072 = sshra.s32 %s2071, 7
      %s2073 = sand.u32 %s2071, 127
      %s2074 = smul.addr %s2072, 4
      %s2075 = scalar_lea.vmem [#allocation2], %s2074
      %v2076 = vld [vmem:[%s2075] sm:$0xff]
      %v2077 = vld [vmem:[%s2075 + $0x8] sm:$0xff]
      %2080 = vst [vmem:[#allocation1] ss:$2 sm:$0xff] %v2076
      %s2081 = scalar_lea.vmem [#allocation1], 16
      %2082 = vst [vmem:[%s2081] ss:$2 sm:$0xff] %v2077
      %v2083 = vld.sshfl [vmem:[#allocation1] sm:$0xff pattern:$0x75316420]
      %v2084 = vld.sshfl [vmem:[#allocation1 + $0x8] sm:$0xff pattern:$0x75316420]
      %v2085 = vld.sshfl [vmem:[#allocation1 + $0x10] sm:$0xff pattern:$0x75316420]
      %v2086 = vld.sshfl [vmem:[#allocation1 + $0x18] sm:$0xff pattern:$0x75316420]
      %2091 = vst [vmem:[#allocation4 + $0x60] sm:$0xf] %v2083
      %2092 = vst [vmem:[#allocation4 + $0x68] sm:$0xf] %v2084
      %2093 = vst [vmem:[#allocation4 + $0x70] sm:$0xf] %v2085
      %2094 = vst [vmem:[#allocation4 + $0x78] sm:$0xf] %v2086
      %s2095 = scalar_lea.vmem [#allocation3], %s2072
      %v2096 = vld [vmem:[%s2095] sm:$0xf]
      %v2097 = vadd.f32 %v2070, %v2096
      %s2098 = sadd.s32 %s2072, 18
      %s2099 = smul.addr %s2098, 4
      %s2100 = scalar_lea.vmem [#allocation2], %s2099
      %v2101 = vld [vmem:[%s2100] sm:$0xff]
      %v2102 = vld [vmem:[%s2100 + $0x8] sm:$0xff]
      %s2105 = scalar_lea.vmem [#allocation1], 1
      %2106 = vst [vmem:[%s2105] ss:$2 sm:$0xff] %v2101
      %s2107 = scalar_lea.vmem [#allocation1], 17
      %2108 = vst [vmem:[%s2107] ss:$2 sm:$0xff] %v2102
      %v2109 = vld.sshfl [vmem:[#allocation1] sm:$0xff pattern:$0x75316420]
      %v2110 = vld.sshfl [vmem:[#allocation1 + $0x8] sm:$0xff pattern:$0x75316420]
      %v2111 = vld.sshfl [vmem:[#allocation1 + $0x10] sm:$0xff pattern:$0x75316420]
      %v2112 = vld.sshfl [vmem:[#allocation1 + $0x18] sm:$0xff pattern:$0x75316420]
      %2117 = vst [vmem:[#allocation4 + $0x60] sm:$0xf0] %v2109
      %2118 = vst [vmem:[#allocation4 + $0x68] sm:$0xf0] %v2110
      %2119 = vst [vmem:[#allocation4 + $0x70] sm:$0xf0] %v2111
      %2120 = vst [vmem:[#allocation4 + $0x78] sm:$0xf0] %v2112
      %s2121 = scalar_lea.vmem [#allocation3], %s2098
      %v2122 = vld [vmem:[%s2121] sm:$0xf]
      %v2123 = vadd.f32 %v2097, %v2122
      %s2124 = sadd.s32 %s2072, 36
      %s2125 = smul.addr %s2124, 4
      %s2126 = scalar_lea.vmem [#allocation2], %s2125
      %v2127 = vld [vmem:[%s2126] sm:$0xff]
      %v2128 = vld [vmem:[%s2126 + $0x8] sm:$0xff]
      %2131 = vst [vmem:[#allocation1] ss:$2 sm:$0xff] %v2127
      %s2132 = scalar_lea.vmem [#allocation1], 16
      %2133 = vst [vmem:[%s2132] ss:$2 sm:$0xff] %v2128
      %v2134 = vld.sshfl [vmem:[#allocation1] sm:$0xff pattern:$0x75316420]
      %v2135 = vld.sshfl [vmem:[#allocation1 + $0x8] sm:$0xff pattern:$0x75316420]
      %v2136 = vld.sshfl [vmem:[#allocation1 + $0x10] sm:$0xff pattern:$0x75316420]
      %v2137 = vld.sshfl [vmem:[#allocation1 + $0x18] sm:$0xff pattern:$0x75316420]
      %2142 = vst [vmem:[#allocation4 + $0x80] sm:$0xf] %v2134
      %2143 = vst [vmem:[#allocation4 + $0x88] sm:$0xf] %v2135
      %2144 = vst [vmem:[#allocation4 + $0x90] sm:$0xf] %v2136
      %2145 = vst [vmem:[#allocation4 + $0x98] sm:$0xf] %v2137
      %s2146 = scalar_lea.vmem [#allocation3], %s2124
      %v2147 = vld [vmem:[%s2146] sm:$0xf]
      %v2148 = vadd.f32 %v2123, %v2147
      %v2149 = vld [vmem:[#allocation4] sm:$0xff]
      %v2150 = vld [vmem:[#allocation4 + $0x8] sm:$0xff]
      %v2151 = vld [vmem:[#allocation4 + $0x10] sm:$0xff]
      %v2152 = vld [vmem:[#allocation4 + $0x18] sm:$0xff]
      %v2153 = vld [vmem:[#allocation4 + $0x20] sm:$0xff]
      %v2154 = vld [vmem:[#allocation4 + $0x28] sm:$0xff]
      %v2155 = vld [vmem:[#allocation4 + $0x30] sm:$0xff]
      %v2156 = vld [vmem:[#allocation4 + $0x38] sm:$0xff]
      %v2157 = vld [vmem:[#allocation4 + $0x40] sm:$0xff]
      %v2158 = vld [vmem:[#allocation4 + $0x48] sm:$0xff]
      %v2159 = vld [vmem:[#allocation4 + $0x50] sm:$0xff]
      %v2160 = vld [vmem:[#allocation4 + $0x58] sm:$0xff]
      %v2161 = vld [vmem:[#allocation4 + $0x60] sm:$0xff]
      %v2162 = vld [vmem:[#allocation4 + $0x68] sm:$0xff]
      %v2163 = vld [vmem:[#allocation4 + $0x70] sm:$0xff]
      %v2164 = vld [vmem:[#allocation4 + $0x78] sm:$0xff]
      %v2165 = vld [vmem:[#allocation4 + $0x80] sm:$0xf]
      %v2166 = vld [vmem:[#allocation4 + $0x88] sm:$0xf]
      %v2167 = vld [vmem:[#allocation4 + $0x90] sm:$0xf]
      %v2168 = vld [vmem:[#allocation4 + $0x98] sm:$0xf]
      %v2170 = vsel %vm1766, %v2165, 0
      %v2173 = vsel %vm1766, %v2166, 0
      %v2176 = vsel %vm1766, %v2167, 0
      %v2179 = vsel %vm1766, %v2168, 0
      %2181 = vmatpush.msra.mxu0 0.0
      %2182 = vmatpush.msra.mxu0 0.0
      %2183 = vmatpush.msra.mxu0 0.0
      %2184 = vmatpush.msra.mxu0 0.0
      %2185 = vmatpush.msra.mxu0 0.0
      %2186 = vmatpush.msra.mxu0 0.0
      %2187 = vmatpush.msra.mxu0 0.0
      %2188 = vmatpush.msra.mxu0 0.0
      %2189 = vmatpush.msra.mxu0 0.0
      %2190 = vmatpush.msra.mxu0 0.0
      %2191 = vmatpush.msra.mxu0 0.0
      %2192 = vmatpush.msra.mxu0 %v2170
      %2193 = vmatpush.msra.mxu0 %v2161
      %2194 = vmatpush.msra.mxu0 %v2157
      %2195 = vmatpush.msra.mxu0 %v2153
      %2196 = vmatpush.msra.mxu0 %v2149
      %2197 = vmatmul.f32.gmra.mxu0 %v1764
      %v2198 = vpop.f32.mrf.mxu0
      %v2199 = vadd.f32 0.0, %v2198
      %2200 = vdwg.mxu0
      %2201 = vmatpush.msra.mxu0 0.0
      %2202 = vmatpush.msra.mxu0 0.0
      %2203 = vmatpush.msra.mxu0 0.0
      %2204 = vmatpush.msra.mxu0 0.0
      %2205 = vmatpush.msra.mxu0 0.0
      %2206 = vmatpush.msra.mxu0 0.0
      %2207 = vmatpush.msra.mxu0 0.0
      %2208 = vmatpush.msra.mxu0 0.0
      %2209 = vmatpush.msra.mxu0 0.0
      %2210 = vmatpush.msra.mxu0 0.0
      %2211 = vmatpush.msra.mxu0 0.0
      %2212 = vmatpush.msra.mxu0 %v2173
      %2213 = vmatpush.msra.mxu0 %v2162
      %2214 = vmatpush.msra.mxu0 %v2158
      %2215 = vmatpush.msra.mxu0 %v2154
      %2216 = vmatpush.msra.mxu0 %v2150
      %2217 = vmatmul.f32.gmra.mxu0 %v1764
      %v2218 = vpop.f32.mrf.mxu0
      %v2219 = vadd.f32 0.0, %v2218
      %2220 = vdwg.mxu0
      %2221 = vmatpush.msra.mxu0 0.0
      %2222 = vmatpush.msra.mxu0 0.0
      %2223 = vmatpush.msra.mxu0 0.0
      %2224 = vmatpush.msra.mxu0 0.0
      %2225 = vmatpush.msra.mxu0 0.0
      %2226 = vmatpush.msra.mxu0 0.0
      %2227 = vmatpush.msra.mxu0 0.0
      %2228 = vmatpush.msra.mxu0 0.0
      %2229 = vmatpush.msra.mxu0 0.0
      %2230 = vmatpush.msra.mxu0 0.0
      %2231 = vmatpush.msra.mxu0 0.0
      %2232 = vmatpush.msra.mxu0 %v2176
      %2233 = vmatpush.msra.mxu0 %v2163
      %2234 = vmatpush.msra.mxu0 %v2159
      %2235 = vmatpush.msra.mxu0 %v2155
      %2236 = vmatpush.msra.mxu0 %v2151
      %2237 = vmatmul.f32.gmra.mxu0 %v1764
      %v2238 = vpop.f32.mrf.mxu0
      %v2239 = vadd.f32 0.0, %v2238
      %2240 = vdwg.mxu0
      %2241 = vmatpush.msra.mxu0 0.0
      %2242 = vmatpush.msra.mxu0 0.0
      %2243 = vmatpush.msra.mxu0 0.0
      %2244 = vmatpush.msra.mxu0 0.0
      %2245 = vmatpush.msra.mxu0 0.0
      %2246 = vmatpush.msra.mxu0 0.0
      %2247 = vmatpush.msra.mxu0 0.0
      %2248 = vmatpush.msra.mxu0 0.0
      %2249 = vmatpush.msra.mxu0 0.0
      %2250 = vmatpush.msra.mxu0 0.0
      %2251 = vmatpush.msra.mxu0 0.0
      %2252 = vmatpush.msra.mxu0 %v2179
      %2253 = vmatpush.msra.mxu0 %v2164
      %2254 = vmatpush.msra.mxu0 %v2160
      %2255 = vmatpush.msra.mxu0 %v2156
      %2256 = vmatpush.msra.mxu0 %v2152
      %2257 = vmatmul.f32.gmra.mxu0 %v1764
      %v2258 = vpop.f32.mrf.mxu0
      %v2259 = vadd.f32 0.0, %v2258
      %2260 = vdwg.mxu0
      %v2261 = vadd.f32 %v2148, 1e-08
      %v2262 = vrcp.pop %v2261
      %v2263 = vmul.f32 %v2261, %v2262
      %v2264 = vsub.f32 2.0, %v2263
      %v2265 = vmul.f32 %v2262, %v2264
      %v2266 = vmax.f32 %v2148, 0.0
      %v2267 = vmin.f32 %v2266, 1.0
      %v2268 = vmul.f32 %v2265, 36.0
      %v2269 = vmul.f32 %v2268, %v2267
      %v2270 = vsub.f32 %v2199, %v1871
      %v2271 = vsub.f32 %v2219, %v1871
      %v2272 = vsub.f32 %v2239, %v1871
      %v2273 = vsub.f32 %v2259, %v1871
      %v2275 = vperm.slane %v2269, 0
      %v2276 = vperm.slane %v2269, 1
      %v2277 = vperm.slane %v2269, 2
      %v2278 = vperm.slane %v2269, 3
      %v2283 = vmul.f32 %v2270, %v2275
      %v2284 = vmul.f32 %v2271, %v2276
      %v2285 = vmul.f32 %v2272, %v2277
      %v2286 = vmul.f32 %v2273, %v2278
      %v2287 = vadd.f32 %v2283, %v1871
      %v2288 = vadd.f32 %v2284, %v1871
      %v2289 = vadd.f32 %v2285, %v1871
      %v2290 = vadd.f32 %v2286, %v1871
      %v2292 = vperm.slane %v2267, 0
      %v2293 = vperm.slane %v2267, 1
      %v2294 = vperm.slane %v2267, 2
      %v2295 = vperm.slane %v2267, 3
      %v2300 = vmul.f32 %v2287, %v2292
      %v2301 = vmul.f32 %v2288, %v2293
      %v2302 = vmul.f32 %v2289, %v2294
      %v2303 = vmul.f32 %v2290, %v2295
      %v2304 = vmax.f32 %v2300, 0.0
      %v2305 = vmax.f32 %v2301, 0.0
      %v2306 = vmax.f32 %v2302, 0.0
      %v2307 = vmax.f32 %v2303, 0.0
      %s2308 = scalar_lea.vmem %s305, 32
      %2309 = vst [vmem:[%s2308] sm:$0xff] %v2304
      %2310 = vst [vmem:[%s2308 + $0x8] sm:$0xff] %v2305
      %2311 = vst [vmem:[%s2308 + $0x10] sm:$0xff] %v2306
      %2312 = vst [vmem:[%s2308 + $0x18] sm:$0xff] %v2307
      %s2313 = scalar_lea.vmem %s309, 4
      %2314 = vst.msk [vmem:[%s2313] sm:$0xf] %vm1916, %v2267
      %s2315 = scalar_lea.vmem [#allocation2], 32
      %v2316 = vld [vmem:[%s2315] sm:$0xff]
      %v2317 = vld [vmem:[%s2315 + $0x8] sm:$0xff]
      %2320 = vst [vmem:[#allocation1] ss:$2 sm:$0xff] %v2316
      %s2321 = scalar_lea.vmem [#allocation1], 16
      %2322 = vst [vmem:[%s2321] ss:$2 sm:$0xff] %v2317
      %v2323 = vld.sshfl [vmem:[#allocation1] sm:$0xff pattern:$0x75316420]
      %v2324 = vld.sshfl [vmem:[#allocation1 + $0x8] sm:$0xff pattern:$0x75316420]
      %v2325 = vld.sshfl [vmem:[#allocation1 + $0x10] sm:$0xff pattern:$0x75316420]
      %v2326 = vld.sshfl [vmem:[#allocation1 + $0x18] sm:$0xff pattern:$0x75316420]
      %2331 = vst [vmem:[#allocation4] sm:$0xf] %v2323
      %2332 = vst [vmem:[#allocation4 + $0x8] sm:$0xf] %v2324
      %2333 = vst [vmem:[#allocation4 + $0x10] sm:$0xf] %v2325
      %2334 = vst [vmem:[#allocation4 + $0x18] sm:$0xf] %v2326
      %s2335 = scalar_lea.vmem [#allocation3], 8
      %v2336 = vld [vmem:[%s2335] sm:$0xf]
      %v2337 = vadd.f32 %v2336, 0.0
      %s2338 = sadd.s32 8, 18
      %s2339 = smul.addr %s2338, 4
      %s2340 = scalar_lea.vmem [#allocation2], %s2339
      %v2341 = vld [vmem:[%s2340] sm:$0xff]
      %v2342 = vld [vmem:[%s2340 + $0x8] sm:$0xff]
      %s2345 = scalar_lea.vmem [#allocation1], 1
      %2346 = vst [vmem:[%s2345] ss:$2 sm:$0xff] %v2341
      %s2347 = scalar_lea.vmem [#allocation1], 17
      %2348 = vst [vmem:[%s2347] ss:$2 sm:$0xff] %v2342
      %v2349 = vld.sshfl [vmem:[#allocation1] sm:$0xff pattern:$0x75316420]
      %v2350 = vld.sshfl [vmem:[#allocation1 + $0x8] sm:$0xff pattern:$0x75316420]
      %v2351 = vld.sshfl [vmem:[#allocation1 + $0x10] sm:$0xff pattern:$0x75316420]
      %v2352 = vld.sshfl [vmem:[#allocation1 + $0x18] sm:$0xff pattern:$0x75316420]
      %2357 = vst [vmem:[#allocation4] sm:$0xf0] %v2349
      %2358 = vst [vmem:[#allocation4 + $0x8] sm:$0xf0] %v2350
      %2359 = vst [vmem:[#allocation4 + $0x10] sm:$0xf0] %v2351
      %2360 = vst [vmem:[#allocation4 + $0x18] sm:$0xf0] %v2352
      %s2361 = scalar_lea.vmem [#allocation3], %s2338
      %v2362 = vld [vmem:[%s2361] sm:$0xf]
      %v2363 = vadd.f32 %v2337, %v2362
      %s2364 = sadd.s32 8, 36
      %s2365 = smul.addr %s2364, 4
      %s2366 = scalar_lea.vmem [#allocation2], %s2365
      %v2367 = vld [vmem:[%s2366] sm:$0xff]
      %v2368 = vld [vmem:[%s2366 + $0x8] sm:$0xff]
      %2371 = vst [vmem:[#allocation1] ss:$2 sm:$0xff] %v2367
      %s2372 = scalar_lea.vmem [#allocation1], 16
      %2373 = vst [vmem:[%s2372] ss:$2 sm:$0xff] %v2368
      %v2374 = vld.sshfl [vmem:[#allocation1] sm:$0xff pattern:$0x75316420]
      %v2375 = vld.sshfl [vmem:[#allocation1 + $0x8] sm:$0xff pattern:$0x75316420]
      %v2376 = vld.sshfl [vmem:[#allocation1 + $0x10] sm:$0xff pattern:$0x75316420]
      %v2377 = vld.sshfl [vmem:[#allocation1 + $0x18] sm:$0xff pattern:$0x75316420]
      %2382 = vst [vmem:[#allocation4 + $0x20] sm:$0xf] %v2374
      %2383 = vst [vmem:[#allocation4 + $0x28] sm:$0xf] %v2375
      %2384 = vst [vmem:[#allocation4 + $0x30] sm:$0xf] %v2376
      %2385 = vst [vmem:[#allocation4 + $0x38] sm:$0xf] %v2377
      %s2386 = scalar_lea.vmem [#allocation3], %s2364
      %v2387 = vld [vmem:[%s2386] sm:$0xf]
      %v2388 = vadd.f32 %v2363, %v2387
      %s2389 = sadd.s32 1024, 128
      %s2390 = sshra.s32 %s2389, 7
      %s2391 = sand.u32 %s2389, 127
      %s2392 = smul.addr %s2390, 4
      %s2393 = scalar_lea.vmem [#allocation2], %s2392
      %v2394 = vld [vmem:[%s2393] sm:$0xff]
      %v2395 = vld [vmem:[%s2393 + $0x8] sm:$0xff]
      %s2398 = scalar_lea.vmem [#allocation1], 1
      %2399 = vst [vmem:[%s2398] ss:$2 sm:$0xff] %v2394
      %s2400 = scalar_lea.vmem [#allocation1], 17
      %2401 = vst [vmem:[%s2400] ss:$2 sm:$0xff] %v2395
      %v2402 = vld.sshfl [vmem:[#allocation1] sm:$0xff pattern:$0x75316420]
      %v2403 = vld.sshfl [vmem:[#allocation1 + $0x8] sm:$0xff pattern:$0x75316420]
      %v2404 = vld.sshfl [vmem:[#allocation1 + $0x10] sm:$0xff pattern:$0x75316420]
      %v2405 = vld.sshfl [vmem:[#allocation1 + $0x18] sm:$0xff pattern:$0x75316420]
      %2410 = vst [vmem:[#allocation4 + $0x20] sm:$0xf0] %v2402
      %2411 = vst [vmem:[#allocation4 + $0x28] sm:$0xf0] %v2403
      %2412 = vst [vmem:[#allocation4 + $0x30] sm:$0xf0] %v2404
      %2413 = vst [vmem:[#allocation4 + $0x38] sm:$0xf0] %v2405
      %s2414 = scalar_lea.vmem [#allocation3], %s2390
      %v2415 = vld [vmem:[%s2414] sm:$0xf]
      %v2416 = vadd.f32 %v2388, %v2415
      %s2417 = sadd.s32 %s2390, 18
      %s2418 = smul.addr %s2417, 4
      %s2419 = scalar_lea.vmem [#allocation2], %s2418
      %v2420 = vld [vmem:[%s2419] sm:$0xff]
      %v2421 = vld [vmem:[%s2419 + $0x8] sm:$0xff]
      %2424 = vst [vmem:[#allocation1] ss:$2 sm:$0xff] %v2420
      %s2425 = scalar_lea.vmem [#allocation1], 16
      %2426 = vst [vmem:[%s2425] ss:$2 sm:$0xff] %v2421
      %v2427 = vld.sshfl [vmem:[#allocation1] sm:$0xff pattern:$0x75316420]
      %v2428 = vld.sshfl [vmem:[#allocation1 + $0x8] sm:$0xff pattern:$0x75316420]
      %v2429 = vld.sshfl [vmem:[#allocation1 + $0x10] sm:$0xff pattern:$0x75316420]
      %v2430 = vld.sshfl [vmem:[#allocation1 + $0x18] sm:$0xff pattern:$0x75316420]
      %2435 = vst [vmem:[#allocation4 + $0x40] sm:$0xf] %v2427
      %2436 = vst [vmem:[#allocation4 + $0x48] sm:$0xf] %v2428
      %2437 = vst [vmem:[#allocation4 + $0x50] sm:$0xf] %v2429
      %2438 = vst [vmem:[#allocation4 + $0x58] sm:$0xf] %v2430
      %s2439 = scalar_lea.vmem [#allocation3], %s2417
      %v2440 = vld [vmem:[%s2439] sm:$0xf]
      %v2441 = vadd.f32 %v2416, %v2440
      %s2442 = sadd.s32 %s2390, 36
      %s2443 = smul.addr %s2442, 4
      %s2444 = scalar_lea.vmem [#allocation2], %s2443
      %v2445 = vld [vmem:[%s2444] sm:$0xff]
      %v2446 = vld [vmem:[%s2444 + $0x8] sm:$0xff]
      %s2449 = scalar_lea.vmem [#allocation1], 1
      %2450 = vst [vmem:[%s2449] ss:$2 sm:$0xff] %v2445
      %s2451 = scalar_lea.vmem [#allocation1], 17
      %2452 = vst [vmem:[%s2451] ss:$2 sm:$0xff] %v2446
      %v2453 = vld.sshfl [vmem:[#allocation1] sm:$0xff pattern:$0x75316420]
      %v2454 = vld.sshfl [vmem:[#allocation1 + $0x8] sm:$0xff pattern:$0x75316420]
      %v2455 = vld.sshfl [vmem:[#allocation1 + $0x10] sm:$0xff pattern:$0x75316420]
      %v2456 = vld.sshfl [vmem:[#allocation1 + $0x18] sm:$0xff pattern:$0x75316420]
      %2461 = vst [vmem:[#allocation4 + $0x40] sm:$0xf0] %v2453
      %2462 = vst [vmem:[#allocation4 + $0x48] sm:$0xf0] %v2454
      %2463 = vst [vmem:[#allocation4 + $0x50] sm:$0xf0] %v2455
      %2464 = vst [vmem:[#allocation4 + $0x58] sm:$0xf0] %v2456
      %s2465 = scalar_lea.vmem [#allocation3], %s2442
      %v2466 = vld [vmem:[%s2465] sm:$0xf]
      %v2467 = vadd.f32 %v2441, %v2466
      %s2468 = sadd.s32 1024, 256
      %s2469 = sshra.s32 %s2468, 7
      %s2470 = sand.u32 %s2468, 127
      %s2471 = smul.addr %s2469, 4
      %s2472 = scalar_lea.vmem [#allocation2], %s2471
      %v2473 = vld [vmem:[%s2472] sm:$0xff]
      %v2474 = vld [vmem:[%s2472 + $0x8] sm:$0xff]
      %2477 = vst [vmem:[#allocation1] ss:$2 sm:$0xff] %v2473
      %s2478 = scalar_lea.vmem [#allocation1], 16
      %2479 = vst [vmem:[%s2478] ss:$2 sm:$0xff] %v2474
      %v2480 = vld.sshfl [vmem:[#allocation1] sm:$0xff pattern:$0x75316420]
      %v2481 = vld.sshfl [vmem:[#allocation1 + $0x8] sm:$0xff pattern:$0x75316420]
      %v2482 = vld.sshfl [vmem:[#allocation1 + $0x10] sm:$0xff pattern:$0x75316420]
      %v2483 = vld.sshfl [vmem:[#allocation1 + $0x18] sm:$0xff pattern:$0x75316420]
      %2488 = vst [vmem:[#allocation4 + $0x60] sm:$0xf] %v2480
      %2489 = vst [vmem:[#allocation4 + $0x68] sm:$0xf] %v2481
      %2490 = vst [vmem:[#allocation4 + $0x70] sm:$0xf] %v2482
      %2491 = vst [vmem:[#allocation4 + $0x78] sm:$0xf] %v2483
      %s2492 = scalar_lea.vmem [#allocation3], %s2469
      %v2493 = vld [vmem:[%s2492] sm:$0xf]
      %v2494 = vadd.f32 %v2467, %v2493
      %s2495 = sadd.s32 %s2469, 18
      %s2496 = smul.addr %s2495, 4
      %s2497 = scalar_lea.vmem [#allocation2], %s2496
      %v2498 = vld [vmem:[%s2497] sm:$0xff]
      %v2499 = vld [vmem:[%s2497 + $0x8] sm:$0xff]
      %s2502 = scalar_lea.vmem [#allocation1], 1
      %2503 = vst [vmem:[%s2502] ss:$2 sm:$0xff] %v2498
      %s2504 = scalar_lea.vmem [#allocation1], 17
      %2505 = vst [vmem:[%s2504] ss:$2 sm:$0xff] %v2499
      %v2506 = vld.sshfl [vmem:[#allocation1] sm:$0xff pattern:$0x75316420]
      %v2507 = vld.sshfl [vmem:[#allocation1 + $0x8] sm:$0xff pattern:$0x75316420]
      %v2508 = vld.sshfl [vmem:[#allocation1 + $0x10] sm:$0xff pattern:$0x75316420]
      %v2509 = vld.sshfl [vmem:[#allocation1 + $0x18] sm:$0xff pattern:$0x75316420]
      %2514 = vst [vmem:[#allocation4 + $0x60] sm:$0xf0] %v2506
      %2515 = vst [vmem:[#allocation4 + $0x68] sm:$0xf0] %v2507
      %2516 = vst [vmem:[#allocation4 + $0x70] sm:$0xf0] %v2508
      %2517 = vst [vmem:[#allocation4 + $0x78] sm:$0xf0] %v2509
      %s2518 = scalar_lea.vmem [#allocation3], %s2495
      %v2519 = vld [vmem:[%s2518] sm:$0xf]
      %v2520 = vadd.f32 %v2494, %v2519
      %s2521 = sadd.s32 %s2469, 36
      %s2522 = smul.addr %s2521, 4
      %s2523 = scalar_lea.vmem [#allocation2], %s2522
      %v2524 = vld [vmem:[%s2523] sm:$0xff]
      %v2525 = vld [vmem:[%s2523 + $0x8] sm:$0xff]
      %2528 = vst [vmem:[#allocation1] ss:$2 sm:$0xff] %v2524
      %s2529 = scalar_lea.vmem [#allocation1], 16
      %2530 = vst [vmem:[%s2529] ss:$2 sm:$0xff] %v2525
      %v2531 = vld.sshfl [vmem:[#allocation1] sm:$0xff pattern:$0x75316420]
      %v2532 = vld.sshfl [vmem:[#allocation1 + $0x8] sm:$0xff pattern:$0x75316420]
      %v2533 = vld.sshfl [vmem:[#allocation1 + $0x10] sm:$0xff pattern:$0x75316420]
      %v2534 = vld.sshfl [vmem:[#allocation1 + $0x18] sm:$0xff pattern:$0x75316420]
      %2539 = vst [vmem:[#allocation4 + $0x80] sm:$0xf] %v2531
      %2540 = vst [vmem:[#allocation4 + $0x88] sm:$0xf] %v2532
      %2541 = vst [vmem:[#allocation4 + $0x90] sm:$0xf] %v2533
      %2542 = vst [vmem:[#allocation4 + $0x98] sm:$0xf] %v2534
      %s2543 = scalar_lea.vmem [#allocation3], %s2521
      %v2544 = vld [vmem:[%s2543] sm:$0xf]
      %v2545 = vadd.f32 %v2520, %v2544
      %v2546 = vld [vmem:[#allocation4] sm:$0xff]
      %v2547 = vld [vmem:[#allocation4 + $0x8] sm:$0xff]
      %v2548 = vld [vmem:[#allocation4 + $0x10] sm:$0xff]
      %v2549 = vld [vmem:[#allocation4 + $0x18] sm:$0xff]
      %v2550 = vld [vmem:[#allocation4 + $0x20] sm:$0xff]
      %v2551 = vld [vmem:[#allocation4 + $0x28] sm:$0xff]
      %v2552 = vld [vmem:[#allocation4 + $0x30] sm:$0xff]
      %v2553 = vld [vmem:[#allocation4 + $0x38] sm:$0xff]
      %v2554 = vld [vmem:[#allocation4 + $0x40] sm:$0xff]
      %v2555 = vld [vmem:[#allocation4 + $0x48] sm:$0xff]
      %v2556 = vld [vmem:[#allocation4 + $0x50] sm:$0xff]
      %v2557 = vld [vmem:[#allocation4 + $0x58] sm:$0xff]
      %v2558 = vld [vmem:[#allocation4 + $0x60] sm:$0xff]
      %v2559 = vld [vmem:[#allocation4 + $0x68] sm:$0xff]
      %v2560 = vld [vmem:[#allocation4 + $0x70] sm:$0xff]
      %v2561 = vld [vmem:[#allocation4 + $0x78] sm:$0xff]
      %v2562 = vld [vmem:[#allocation4 + $0x80] sm:$0xf]
      %v2563 = vld [vmem:[#allocation4 + $0x88] sm:$0xf]
      %v2564 = vld [vmem:[#allocation4 + $0x90] sm:$0xf]
      %v2565 = vld [vmem:[#allocation4 + $0x98] sm:$0xf]
      %v2567 = vsel %vm1766, %v2562, 0
      %v2570 = vsel %vm1766, %v2563, 0
      %v2573 = vsel %vm1766, %v2564, 0
      %v2576 = vsel %vm1766, %v2565, 0
      %2578 = vmatpush.msra.mxu0 0.0
      %2579 = vmatpush.msra.mxu0 0.0
      %2580 = vmatpush.msra.mxu0 0.0
      %2581 = vmatpush.msra.mxu0 0.0
      %2582 = vmatpush.msra.mxu0 0.0
      %2583 = vmatpush.msra.mxu0 0.0
      %2584 = vmatpush.msra.mxu0 0.0
      %2585 = vmatpush.msra.mxu0 0.0
      %2586 = vmatpush.msra.mxu0 0.0
      %2587 = vmatpush.msra.mxu0 0.0
      %2588 = vmatpush.msra.mxu0 0.0
      %2589 = vmatpush.msra.mxu0 %v2567
      %2590 = vmatpush.msra.mxu0 %v2558
      %2591 = vmatpush.msra.mxu0 %v2554
      %2592 = vmatpush.msra.mxu0 %v2550
      %2593 = vmatpush.msra.mxu0 %v2546
      %2594 = vmatmul.f32.gmra.mxu0 %v1764
      %v2595 = vpop.f32.mrf.mxu0
      %v2596 = vadd.f32 0.0, %v2595
      %2597 = vdwg.mxu0
      %2598 = vmatpush.msra.mxu0 0.0
      %2599 = vmatpush.msra.mxu0 0.0
      %2600 = vmatpush.msra.mxu0 0.0
      %2601 = vmatpush.msra.mxu0 0.0
      %2602 = vmatpush.msra.mxu0 0.0
      %2603 = vmatpush.msra.mxu0 0.0
      %2604 = vmatpush.msra.mxu0 0.0
      %2605 = vmatpush.msra.mxu0 0.0
      %2606 = vmatpush.msra.mxu0 0.0
      %2607 = vmatpush.msra.mxu0 0.0
      %2608 = vmatpush.msra.mxu0 0.0
      %2609 = vmatpush.msra.mxu0 %v2570
      %2610 = vmatpush.msra.mxu0 %v2559
      %2611 = vmatpush.msra.mxu0 %v2555
      %2612 = vmatpush.msra.mxu0 %v2551
      %2613 = vmatpush.msra.mxu0 %v2547
      %2614 = vmatmul.f32.gmra.mxu0 %v1764
      %v2615 = vpop.f32.mrf.mxu0
      %v2616 = vadd.f32 0.0, %v2615
      %2617 = vdwg.mxu0
      %2618 = vmatpush.msra.mxu0 0.0
      %2619 = vmatpush.msra.mxu0 0.0
      %2620 = vmatpush.msra.mxu0 0.0
      %2621 = vmatpush.msra.mxu0 0.0
      %2622 = vmatpush.msra.mxu0 0.0
      %2623 = vmatpush.msra.mxu0 0.0
      %2624 = vmatpush.msra.mxu0 0.0
      %2625 = vmatpush.msra.mxu0 0.0
      %2626 = vmatpush.msra.mxu0 0.0
      %2627 = vmatpush.msra.mxu0 0.0
      %2628 = vmatpush.msra.mxu0 0.0
      %2629 = vmatpush.msra.mxu0 %v2573
      %2630 = vmatpush.msra.mxu0 %v2560
      %2631 = vmatpush.msra.mxu0 %v2556
      %2632 = vmatpush.msra.mxu0 %v2552
      %2633 = vmatpush.msra.mxu0 %v2548
      %2634 = vmatmul.f32.gmra.mxu0 %v1764
      %v2635 = vpop.f32.mrf.mxu0
      %v2636 = vadd.f32 0.0, %v2635
      %2637 = vdwg.mxu0
      %2638 = vmatpush.msra.mxu0 0.0
      %2639 = vmatpush.msra.mxu0 0.0
      %2640 = vmatpush.msra.mxu0 0.0
      %2641 = vmatpush.msra.mxu0 0.0
      %2642 = vmatpush.msra.mxu0 0.0
      %2643 = vmatpush.msra.mxu0 0.0
      %2644 = vmatpush.msra.mxu0 0.0
      %2645 = vmatpush.msra.mxu0 0.0
      %2646 = vmatpush.msra.mxu0 0.0
      %2647 = vmatpush.msra.mxu0 0.0
      %2648 = vmatpush.msra.mxu0 0.0
      %2649 = vmatpush.msra.mxu0 %v2576
      %2650 = vmatpush.msra.mxu0 %v2561
      %2651 = vmatpush.msra.mxu0 %v2557
      %2652 = vmatpush.msra.mxu0 %v2553
      %2653 = vmatpush.msra.mxu0 %v2549
      %2654 = vmatmul.f32.gmra.mxu0 %v1764
      %v2655 = vpop.f32.mrf.mxu0
      %v2656 = vadd.f32 0.0, %v2655
      %2657 = vdwg.mxu0
      %v2658 = vadd.f32 %v2545, 1e-08
      %v2659 = vrcp.pop %v2658
      %v2660 = vmul.f32 %v2658, %v2659
      %v2661 = vsub.f32 2.0, %v2660
      %v2662 = vmul.f32 %v2659, %v2661
      %v2663 = vmax.f32 %v2545, 0.0
      %v2664 = vmin.f32 %v2663, 1.0
      %v2665 = vmul.f32 %v2662, 36.0
      %v2666 = vmul.f32 %v2665, %v2664
      %v2667 = vsub.f32 %v2596, %v1871
      %v2668 = vsub.f32 %v2616, %v1871
      %v2669 = vsub.f32 %v2636, %v1871
      %v2670 = vsub.f32 %v2656, %v1871
      %v2672 = vperm.slane %v2666, 0
      %v2673 = vperm.slane %v2666, 1
      %v2674 = vperm.slane %v2666, 2
      %v2675 = vperm.slane %v2666, 3
      %v2680 = vmul.f32 %v2667, %v2672
      %v2681 = vmul.f32 %v2668, %v2673
      %v2682 = vmul.f32 %v2669, %v2674
      %v2683 = vmul.f32 %v2670, %v2675
      %v2684 = vadd.f32 %v2680, %v1871
      %v2685 = vadd.f32 %v2681, %v1871
      %v2686 = vadd.f32 %v2682, %v1871
      %v2687 = vadd.f32 %v2683, %v1871
      %v2689 = vperm.slane %v2664, 0
      %v2690 = vperm.slane %v2664, 1
      %v2691 = vperm.slane %v2664, 2
      %v2692 = vperm.slane %v2664, 3
      %v2697 = vmul.f32 %v2684, %v2689
      %v2698 = vmul.f32 %v2685, %v2690
      %v2699 = vmul.f32 %v2686, %v2691
      %v2700 = vmul.f32 %v2687, %v2692
      %v2701 = vmax.f32 %v2697, 0.0
      %v2702 = vmax.f32 %v2698, 0.0
      %v2703 = vmax.f32 %v2699, 0.0
      %v2704 = vmax.f32 %v2700, 0.0
      %s2705 = scalar_lea.vmem %s305, 64
      %2706 = vst [vmem:[%s2705] sm:$0xff] %v2701
      %2707 = vst [vmem:[%s2705 + $0x8] sm:$0xff] %v2702
      %2708 = vst [vmem:[%s2705 + $0x10] sm:$0xff] %v2703
      %2709 = vst [vmem:[%s2705 + $0x18] sm:$0xff] %v2704
      %s2710 = scalar_lea.vmem %s309, 8
      %2711 = vst.msk [vmem:[%s2710] sm:$0xf] %vm1916, %v2664
      %s2712 = scalar_lea.vmem [#allocation2], 48
      %v2713 = vld [vmem:[%s2712] sm:$0xff]
      %v2714 = vld [vmem:[%s2712 + $0x8] sm:$0xff]
      %2717 = vst [vmem:[#allocation1] ss:$2 sm:$0xff] %v2713
      %s2718 = scalar_lea.vmem [#allocation1], 16
      %2719 = vst [vmem:[%s2718] ss:$2 sm:$0xff] %v2714
      %v2720 = vld.sshfl [vmem:[#allocation1] sm:$0xff pattern:$0x75316420]
      %v2721 = vld.sshfl [vmem:[#allocation1 + $0x8] sm:$0xff pattern:$0x75316420]
      %v2722 = vld.sshfl [vmem:[#allocation1 + $0x10] sm:$0xff pattern:$0x75316420]
      %v2723 = vld.sshfl [vmem:[#allocation1 + $0x18] sm:$0xff pattern:$0x75316420]
      %2728 = vst [vmem:[#allocation4] sm:$0xf] %v2720
      %2729 = vst [vmem:[#allocation4 + $0x8] sm:$0xf] %v2721
      %2730 = vst [vmem:[#allocation4 + $0x10] sm:$0xf] %v2722
      %2731 = vst [vmem:[#allocation4 + $0x18] sm:$0xf] %v2723
      %s2732 = scalar_lea.vmem [#allocation3], 12
      %v2733 = vld [vmem:[%s2732] sm:$0xf]
      %v2734 = vadd.f32 %v2733, 0.0
      %s2735 = sadd.s32 12, 18
      %s2736 = smul.addr %s2735, 4
      %s2737 = scalar_lea.vmem [#allocation2], %s2736
      %v2738 = vld [vmem:[%s2737] sm:$0xff]
      %v2739 = vld [vmem:[%s2737 + $0x8] sm:$0xff]
      %s2742 = scalar_lea.vmem [#allocation1], 1
      %2743 = vst [vmem:[%s2742] ss:$2 sm:$0xff] %v2738
      %s2744 = scalar_lea.vmem [#allocation1], 17
      %2745 = vst [vmem:[%s2744] ss:$2 sm:$0xff] %v2739
      %v2746 = vld.sshfl [vmem:[#allocation1] sm:$0xff pattern:$0x75316420]
      %v2747 = vld.sshfl [vmem:[#allocation1 + $0x8] sm:$0xff pattern:$0x75316420]
      %v2748 = vld.sshfl [vmem:[#allocation1 + $0x10] sm:$0xff pattern:$0x75316420]
      %v2749 = vld.sshfl [vmem:[#allocation1 + $0x18] sm:$0xff pattern:$0x75316420]
      %2754 = vst [vmem:[#allocation4] sm:$0xf0] %v2746
      %2755 = vst [vmem:[#allocation4 + $0x8] sm:$0xf0] %v2747
      %2756 = vst [vmem:[#allocation4 + $0x10] sm:$0xf0] %v2748
      %2757 = vst [vmem:[#allocation4 + $0x18] sm:$0xf0] %v2749
      %s2758 = scalar_lea.vmem [#allocation3], %s2735
      %v2759 = vld [vmem:[%s2758] sm:$0xf]
      %v2760 = vadd.f32 %v2734, %v2759
      %s2761 = sadd.s32 12, 36
      %s2762 = smul.addr %s2761, 4
      %s2763 = scalar_lea.vmem [#allocation2], %s2762
      %v2764 = vld [vmem:[%s2763] sm:$0xff]
      %v2765 = vld [vmem:[%s2763 + $0x8] sm:$0xff]
      %2768 = vst [vmem:[#allocation1] ss:$2 sm:$0xff] %v2764
      %s2769 = scalar_lea.vmem [#allocation1], 16
      %2770 = vst [vmem:[%s2769] ss:$2 sm:$0xff] %v2765
      %v2771 = vld.sshfl [vmem:[#allocation1] sm:$0xff pattern:$0x75316420]
      %v2772 = vld.sshfl [vmem:[#allocation1 + $0x8] sm:$0xff pattern:$0x75316420]
      %v2773 = vld.sshfl [vmem:[#allocation1 + $0x10] sm:$0xff pattern:$0x75316420]
      %v2774 = vld.sshfl [vmem:[#allocation1 + $0x18] sm:$0xff pattern:$0x75316420]
      %2779 = vst [vmem:[#allocation4 + $0x20] sm:$0xf] %v2771
      %2780 = vst [vmem:[#allocation4 + $0x28] sm:$0xf] %v2772
      %2781 = vst [vmem:[#allocation4 + $0x30] sm:$0xf] %v2773
      %2782 = vst [vmem:[#allocation4 + $0x38] sm:$0xf] %v2774
      %s2783 = scalar_lea.vmem [#allocation3], %s2761
      %v2784 = vld [vmem:[%s2783] sm:$0xf]
      %v2785 = vadd.f32 %v2760, %v2784
      %s2786 = sadd.s32 1536, 128
      %s2787 = sshra.s32 %s2786, 7
      %s2788 = sand.u32 %s2786, 127
      %s2789 = smul.addr %s2787, 4
      %s2790 = scalar_lea.vmem [#allocation2], %s2789
      %v2791 = vld [vmem:[%s2790] sm:$0xff]
      %v2792 = vld [vmem:[%s2790 + $0x8] sm:$0xff]
      %s2795 = scalar_lea.vmem [#allocation1], 1
      %2796 = vst [vmem:[%s2795] ss:$2 sm:$0xff] %v2791
      %s2797 = scalar_lea.vmem [#allocation1], 17
      %2798 = vst [vmem:[%s2797] ss:$2 sm:$0xff] %v2792
      %v2799 = vld.sshfl [vmem:[#allocation1] sm:$0xff pattern:$0x75316420]
      %v2800 = vld.sshfl [vmem:[#allocation1 + $0x8] sm:$0xff pattern:$0x75316420]
      %v2801 = vld.sshfl [vmem:[#allocation1 + $0x10] sm:$0xff pattern:$0x75316420]
      %v2802 = vld.sshfl [vmem:[#allocation1 + $0x18] sm:$0xff pattern:$0x75316420]
      %2807 = vst [vmem:[#allocation4 + $0x20] sm:$0xf0] %v2799
      %2808 = vst [vmem:[#allocation4 + $0x28] sm:$0xf0] %v2800
      %2809 = vst [vmem:[#allocation4 + $0x30] sm:$0xf0] %v2801
      %2810 = vst [vmem:[#allocation4 + $0x38] sm:$0xf0] %v2802
      %s2811 = scalar_lea.vmem [#allocation3], %s2787
      %v2812 = vld [vmem:[%s2811] sm:$0xf]
      %v2813 = vadd.f32 %v2785, %v2812
      %s2814 = sadd.s32 %s2787, 18
      %s2815 = smul.addr %s2814, 4
      %s2816 = scalar_lea.vmem [#allocation2], %s2815
      %v2817 = vld [vmem:[%s2816] sm:$0xff]
      %v2818 = vld [vmem:[%s2816 + $0x8] sm:$0xff]
      %2821 = vst [vmem:[#allocation1] ss:$2 sm:$0xff] %v2817
      %s2822 = scalar_lea.vmem [#allocation1], 16
      %2823 = vst [vmem:[%s2822] ss:$2 sm:$0xff] %v2818
      %v2824 = vld.sshfl [vmem:[#allocation1] sm:$0xff pattern:$0x75316420]
      %v2825 = vld.sshfl [vmem:[#allocation1 + $0x8] sm:$0xff pattern:$0x75316420]
      %v2826 = vld.sshfl [vmem:[#allocation1 + $0x10] sm:$0xff pattern:$0x75316420]
      %v2827 = vld.sshfl [vmem:[#allocation1 + $0x18] sm:$0xff pattern:$0x75316420]
      %2832 = vst [vmem:[#allocation4 + $0x40] sm:$0xf] %v2824
      %2833 = vst [vmem:[#allocation4 + $0x48] sm:$0xf] %v2825
      %2834 = vst [vmem:[#allocation4 + $0x50] sm:$0xf] %v2826
      %2835 = vst [vmem:[#allocation4 + $0x58] sm:$0xf] %v2827
      %s2836 = scalar_lea.vmem [#allocation3], %s2814
      %v2837 = vld [vmem:[%s2836] sm:$0xf]
      %v2838 = vadd.f32 %v2813, %v2837
      %s2839 = sadd.s32 %s2787, 36
      %s2840 = smul.addr %s2839, 4
      %s2841 = scalar_lea.vmem [#allocation2], %s2840
      %v2842 = vld [vmem:[%s2841] sm:$0xff]
      %v2843 = vld [vmem:[%s2841 + $0x8] sm:$0xff]
      %s2846 = scalar_lea.vmem [#allocation1], 1
      %2847 = vst [vmem:[%s2846] ss:$2 sm:$0xff] %v2842
      %s2848 = scalar_lea.vmem [#allocation1], 17
      %2849 = vst [vmem:[%s2848] ss:$2 sm:$0xff] %v2843
      %v2850 = vld.sshfl [vmem:[#allocation1] sm:$0xff pattern:$0x75316420]
      %v2851 = vld.sshfl [vmem:[#allocation1 + $0x8] sm:$0xff pattern:$0x75316420]
      %v2852 = vld.sshfl [vmem:[#allocation1 + $0x10] sm:$0xff pattern:$0x75316420]
      %v2853 = vld.sshfl [vmem:[#allocation1 + $0x18] sm:$0xff pattern:$0x75316420]
      %2858 = vst [vmem:[#allocation4 + $0x40] sm:$0xf0] %v2850
      %2859 = vst [vmem:[#allocation4 + $0x48] sm:$0xf0] %v2851
      %2860 = vst [vmem:[#allocation4 + $0x50] sm:$0xf0] %v2852
      %2861 = vst [vmem:[#allocation4 + $0x58] sm:$0xf0] %v2853
      %s2862 = scalar_lea.vmem [#allocation3], %s2839
      %v2863 = vld [vmem:[%s2862] sm:$0xf]
      %v2864 = vadd.f32 %v2838, %v2863
      %s2865 = sadd.s32 1536, 256
      %s2866 = sshra.s32 %s2865, 7
      %s2867 = sand.u32 %s2865, 127
      %s2868 = smul.addr %s2866, 4
      %s2869 = scalar_lea.vmem [#allocation2], %s2868
      %v2870 = vld [vmem:[%s2869] sm:$0xff]
      %v2871 = vld [vmem:[%s2869 + $0x8] sm:$0xff]
      %2874 = vst [vmem:[#allocation1] ss:$2 sm:$0xff] %v2870
      %s2875 = scalar_lea.vmem [#allocation1], 16
      %2876 = vst [vmem:[%s2875] ss:$2 sm:$0xff] %v2871
      %v2877 = vld.sshfl [vmem:[#allocation1] sm:$0xff pattern:$0x75316420]
      %v2878 = vld.sshfl [vmem:[#allocation1 + $0x8] sm:$0xff pattern:$0x75316420]
      %v2879 = vld.sshfl [vmem:[#allocation1 + $0x10] sm:$0xff pattern:$0x75316420]
      %v2880 = vld.sshfl [vmem:[#allocation1 + $0x18] sm:$0xff pattern:$0x75316420]
      %2885 = vst [vmem:[#allocation4 + $0x60] sm:$0xf] %v2877
      %2886 = vst [vmem:[#allocation4 + $0x68] sm:$0xf] %v2878
      %2887 = vst [vmem:[#allocation4 + $0x70] sm:$0xf] %v2879
      %2888 = vst [vmem:[#allocation4 + $0x78] sm:$0xf] %v2880
      %s2889 = scalar_lea.vmem [#allocation3], %s2866
      %v2890 = vld [vmem:[%s2889] sm:$0xf]
      %v2891 = vadd.f32 %v2864, %v2890
      %s2892 = sadd.s32 %s2866, 18
      %s2893 = smul.addr %s2892, 4
      %s2894 = scalar_lea.vmem [#allocation2], %s2893
      %v2895 = vld [vmem:[%s2894] sm:$0xff]
      %v2896 = vld [vmem:[%s2894 + $0x8] sm:$0xff]
      %s2899 = scalar_lea.vmem [#allocation1], 1
      %2900 = vst [vmem:[%s2899] ss:$2 sm:$0xff] %v2895
      %s2901 = scalar_lea.vmem [#allocation1], 17
      %2902 = vst [vmem:[%s2901] ss:$2 sm:$0xff] %v2896
      %v2903 = vld.sshfl [vmem:[#allocation1] sm:$0xff pattern:$0x75316420]
      %v2904 = vld.sshfl [vmem:[#allocation1 + $0x8] sm:$0xff pattern:$0x75316420]
      %v2905 = vld.sshfl [vmem:[#allocation1 + $0x10] sm:$0xff pattern:$0x75316420]
      %v2906 = vld.sshfl [vmem:[#allocation1 + $0x18] sm:$0xff pattern:$0x75316420]
      %2911 = vst [vmem:[#allocation4 + $0x60] sm:$0xf0] %v2903
      %2912 = vst [vmem:[#allocation4 + $0x68] sm:$0xf0] %v2904
      %2913 = vst [vmem:[#allocation4 + $0x70] sm:$0xf0] %v2905
      %2914 = vst [vmem:[#allocation4 + $0x78] sm:$0xf0] %v2906
      %s2915 = scalar_lea.vmem [#allocation3], %s2892
      %v2916 = vld [vmem:[%s2915] sm:$0xf]
      %v2917 = vadd.f32 %v2891, %v2916
      %s2918 = sadd.s32 %s2866, 36
      %s2919 = smul.addr %s2918, 4
      %s2920 = scalar_lea.vmem [#allocation2], %s2919
      %v2921 = vld [vmem:[%s2920] sm:$0xff]
      %v2922 = vld [vmem:[%s2920 + $0x8] sm:$0xff]
      %2925 = vst [vmem:[#allocation1] ss:$2 sm:$0xff] %v2921
      %s2926 = scalar_lea.vmem [#allocation1], 16
      %2927 = vst [vmem:[%s2926] ss:$2 sm:$0xff] %v2922
      %v2928 = vld.sshfl [vmem:[#allocation1] sm:$0xff pattern:$0x75316420]
      %v2929 = vld.sshfl [vmem:[#allocation1 + $0x8] sm:$0xff pattern:$0x75316420]
      %v2930 = vld.sshfl [vmem:[#allocation1 + $0x10] sm:$0xff pattern:$0x75316420]
      %v2931 = vld.sshfl [vmem:[#allocation1 + $0x18] sm:$0xff pattern:$0x75316420]
      %2936 = vst [vmem:[#allocation4 + $0x80] sm:$0xf] %v2928
      %2937 = vst [vmem:[#allocation4 + $0x88] sm:$0xf] %v2929
      %2938 = vst [vmem:[#allocation4 + $0x90] sm:$0xf] %v2930
      %2939 = vst [vmem:[#allocation4 + $0x98] sm:$0xf] %v2931
      %s2940 = scalar_lea.vmem [#allocation3], %s2918
      %v2941 = vld [vmem:[%s2940] sm:$0xf]
      %v2942 = vadd.f32 %v2917, %v2941
      %v2943 = vld [vmem:[#allocation4] sm:$0xff]
      %v2944 = vld [vmem:[#allocation4 + $0x8] sm:$0xff]
      %v2945 = vld [vmem:[#allocation4 + $0x10] sm:$0xff]
      %v2946 = vld [vmem:[#allocation4 + $0x18] sm:$0xff]
      %v2947 = vld [vmem:[#allocation4 + $0x20] sm:$0xff]
      %v2948 = vld [vmem:[#allocation4 + $0x28] sm:$0xff]
      %v2949 = vld [vmem:[#allocation4 + $0x30] sm:$0xff]
      %v2950 = vld [vmem:[#allocation4 + $0x38] sm:$0xff]
      %v2951 = vld [vmem:[#allocation4 + $0x40] sm:$0xff]
      %v2952 = vld [vmem:[#allocation4 + $0x48] sm:$0xff]
      %v2953 = vld [vmem:[#allocation4 + $0x50] sm:$0xff]
      %v2954 = vld [vmem:[#allocation4 + $0x58] sm:$0xff]
      %v2955 = vld [vmem:[#allocation4 + $0x60] sm:$0xff]
      %v2956 = vld [vmem:[#allocation4 + $0x68] sm:$0xff]
      %v2957 = vld [vmem:[#allocation4 + $0x70] sm:$0xff]
      %v2958 = vld [vmem:[#allocation4 + $0x78] sm:$0xff]
      %v2959 = vld [vmem:[#allocation4 + $0x80] sm:$0xf]
      %v2960 = vld [vmem:[#allocation4 + $0x88] sm:$0xf]
      %v2961 = vld [vmem:[#allocation4 + $0x90] sm:$0xf]
      %v2962 = vld [vmem:[#allocation4 + $0x98] sm:$0xf]
      %v2964 = vsel %vm1766, %v2959, 0
      %v2967 = vsel %vm1766, %v2960, 0
      %v2970 = vsel %vm1766, %v2961, 0
      %v2973 = vsel %vm1766, %v2962, 0
      %2975 = vmatpush.msra.mxu0 0.0
      %2976 = vmatpush.msra.mxu0 0.0
      %2977 = vmatpush.msra.mxu0 0.0
      %2978 = vmatpush.msra.mxu0 0.0
      %2979 = vmatpush.msra.mxu0 0.0
      %2980 = vmatpush.msra.mxu0 0.0
      %2981 = vmatpush.msra.mxu0 0.0
      %2982 = vmatpush.msra.mxu0 0.0
      %2983 = vmatpush.msra.mxu0 0.0
      %2984 = vmatpush.msra.mxu0 0.0
      %2985 = vmatpush.msra.mxu0 0.0
      %2986 = vmatpush.msra.mxu0 %v2964
      %2987 = vmatpush.msra.mxu0 %v2955
      %2988 = vmatpush.msra.mxu0 %v2951
      %2989 = vmatpush.msra.mxu0 %v2947
      %2990 = vmatpush.msra.mxu0 %v2943
      %2991 = vmatmul.f32.gmra.mxu0 %v1764
      %v2992 = vpop.f32.mrf.mxu0
      %v2993 = vadd.f32 0.0, %v2992
      %2994 = vdwg.mxu0
      %2995 = vmatpush.msra.mxu0 0.0
      %2996 = vmatpush.msra.mxu0 0.0
      %2997 = vmatpush.msra.mxu0 0.0
      %2998 = vmatpush.msra.mxu0 0.0
      %2999 = vmatpush.msra.mxu0 0.0
      %3000 = vmatpush.msra.mxu0 0.0
      %3001 = vmatpush.msra.mxu0 0.0
      %3002 = vmatpush.msra.mxu0 0.0
      %3003 = vmatpush.msra.mxu0 0.0
      %3004 = vmatpush.msra.mxu0 0.0
      %3005 = vmatpush.msra.mxu0 0.0
      %3006 = vmatpush.msra.mxu0 %v2967
      %3007 = vmatpush.msra.mxu0 %v2956
      %3008 = vmatpush.msra.mxu0 %v2952
      %3009 = vmatpush.msra.mxu0 %v2948
      %3010 = vmatpush.msra.mxu0 %v2944
      %3011 = vmatmul.f32.gmra.mxu0 %v1764
      %v3012 = vpop.f32.mrf.mxu0
      %v3013 = vadd.f32 0.0, %v3012
      %3014 = vdwg.mxu0
      %3015 = vmatpush.msra.mxu0 0.0
      %3016 = vmatpush.msra.mxu0 0.0
      %3017 = vmatpush.msra.mxu0 0.0
      %3018 = vmatpush.msra.mxu0 0.0
      %3019 = vmatpush.msra.mxu0 0.0
      %3020 = vmatpush.msra.mxu0 0.0
      %3021 = vmatpush.msra.mxu0 0.0
      %3022 = vmatpush.msra.mxu0 0.0
      %3023 = vmatpush.msra.mxu0 0.0
      %3024 = vmatpush.msra.mxu0 0.0
      %3025 = vmatpush.msra.mxu0 0.0
      %3026 = vmatpush.msra.mxu0 %v2970
      %3027 = vmatpush.msra.mxu0 %v2957
      %3028 = vmatpush.msra.mxu0 %v2953
      %3029 = vmatpush.msra.mxu0 %v2949
      %3030 = vmatpush.msra.mxu0 %v2945
      %3031 = vmatmul.f32.gmra.mxu0 %v1764
      %v3032 = vpop.f32.mrf.mxu0
      %v3033 = vadd.f32 0.0, %v3032
      %3034 = vdwg.mxu0
      %3035 = vmatpush.msra.mxu0 0.0
      %3036 = vmatpush.msra.mxu0 0.0
      %3037 = vmatpush.msra.mxu0 0.0
      %3038 = vmatpush.msra.mxu0 0.0
      %3039 = vmatpush.msra.mxu0 0.0
      %3040 = vmatpush.msra.mxu0 0.0
      %3041 = vmatpush.msra.mxu0 0.0
      %3042 = vmatpush.msra.mxu0 0.0
      %3043 = vmatpush.msra.mxu0 0.0
      %3044 = vmatpush.msra.mxu0 0.0
      %3045 = vmatpush.msra.mxu0 0.0
      %3046 = vmatpush.msra.mxu0 %v2973
      %3047 = vmatpush.msra.mxu0 %v2958
      %3048 = vmatpush.msra.mxu0 %v2954
      %3049 = vmatpush.msra.mxu0 %v2950
      %3050 = vmatpush.msra.mxu0 %v2946
      %3051 = vmatmul.f32.gmra.mxu0 %v1764
      %v3052 = vpop.f32.mrf.mxu0
      %v3053 = vadd.f32 0.0, %v3052
      %3054 = vdwg.mxu0
      %v3055 = vadd.f32 %v2942, 1e-08
      %v3056 = vrcp.pop %v3055
      %v3057 = vmul.f32 %v3055, %v3056
      %v3058 = vsub.f32 2.0, %v3057
      %v3059 = vmul.f32 %v3056, %v3058
      %v3060 = vmax.f32 %v2942, 0.0
      %v3061 = vmin.f32 %v3060, 1.0
      %v3062 = vmul.f32 %v3059, 36.0
      %v3063 = vmul.f32 %v3062, %v3061
      %v3064 = vsub.f32 %v2993, %v1871
      %v3065 = vsub.f32 %v3013, %v1871
      %v3066 = vsub.f32 %v3033, %v1871
      %v3067 = vsub.f32 %v3053, %v1871
      %v3069 = vperm.slane %v3063, 0
      %v3070 = vperm.slane %v3063, 1
      %v3071 = vperm.slane %v3063, 2
      %v3072 = vperm.slane %v3063, 3
      %v3077 = vmul.f32 %v3064, %v3069
      %v3078 = vmul.f32 %v3065, %v3070
      %v3079 = vmul.f32 %v3066, %v3071
      %v3080 = vmul.f32 %v3067, %v3072
      %v3081 = vadd.f32 %v3077, %v1871
      %v3082 = vadd.f32 %v3078, %v1871
      %v3083 = vadd.f32 %v3079, %v1871
      %v3084 = vadd.f32 %v3080, %v1871
      %v3086 = vperm.slane %v3061, 0
      %v3087 = vperm.slane %v3061, 1
      %v3088 = vperm.slane %v3061, 2
      %v3089 = vperm.slane %v3061, 3
      %v3094 = vmul.f32 %v3081, %v3086
      %v3095 = vmul.f32 %v3082, %v3087
      %v3096 = vmul.f32 %v3083, %v3088
      %v3097 = vmul.f32 %v3084, %v3089
      %v3098 = vmax.f32 %v3094, 0.0
      %v3099 = vmax.f32 %v3095, 0.0
      %v3100 = vmax.f32 %v3096, 0.0
      %v3101 = vmax.f32 %v3097, 0.0
      %s3102 = scalar_lea.vmem %s305, 96
      %3103 = vst [vmem:[%s3102] sm:$0xff] %v3098
      %3104 = vst [vmem:[%s3102 + $0x8] sm:$0xff] %v3099
      %3105 = vst [vmem:[%s3102 + $0x10] sm:$0xff] %v3100
      %3106 = vst [vmem:[%s3102 + $0x18] sm:$0xff] %v3101
      %s3107 = scalar_lea.vmem %s309, 12
      %3108 = vst.msk [vmem:[%s3107] sm:$0xf] %vm1916, %v3061
      %p3109 = scmp.lt.s32.totalorder %s19, 1
      %s3110 = scalar_select %p3109, %s19, 1
      %s3111 = smul.addr %s3110, 16
      %s3112 = smul.addr %s3111, 8
      %s3113 = scalar_lea.vmem %s6, %s3112
      %p3114 = scmp.lt.s32.totalorder %s19, 1
      %s3115 = scalar_select %p3114, %s19, 1
      %s3116 = smul.addr %s3115, 16
      %s3117 = scalar_lea.vmem %s7, %s3116
      // Predicated region
      $region45: #{partial_conv_layer.1} parent=43 // pred_check
        %p3118 = pneg %p173
      $region46: #{partial_conv_layer.1} parent=43 // pred_check_branch
        %3120 = sbr.rel (%p3118) target = $region48
      $region47: #{partial_conv_layer.1} parent=43 // pred_region
        _
      $region48: #{partial_conv_layer.1} parent=43 // pred_fallthru
        _
      // Predicated region
      $region49: #{partial_conv_layer.1} parent=43 // pred_check
        %p3121 = pneg %p199
      $region50: #{partial_conv_layer.1} parent=43 // pred_check_branch
        %3123 = sbr.rel (%p3121) target = $region52
      $region51: #{partial_conv_layer.1} parent=43 // pred_region
        _
      $region52: #{partial_conv_layer.1} parent=43 // pred_fallthru
        _
    $region44: #{partial_conv_layer.1} parent=5 // pred_fallthru
      _
    %p3124 = scmp.le.s32.totalorder 2, %s14
    // Predicated region
    $region53: #{partial_conv_layer.1} parent=5 // pred_check
      %p3125 = pneg %p3124
    $region54: #{partial_conv_layer.1} parent=5 // pred_check_branch
      %3127 = sbr.rel (%p3125) target = $region56
    $region55: #{partial_conv_layer.1} parent=5 // pred_region
      %s3128 = ssub.s32 %s14, 2
      // Predicated region
      $region57: #{partial_conv_layer.1} parent=55 // pred_check
        %p3129 = pneg %p179
      $region58: #{partial_conv_layer.1} parent=55 // pred_check_branch
        %3131 = sbr.rel (%p3129) target = $region60
      $region59: #{partial_conv_layer.1} parent=55 // pred_region
        %p3132 = scmp.lt.s32.totalorder %s20, 1
        %s3133 = scalar_select %p3132, %s20, 1
        %s3134 = smul.addr %s3133, 16
        %s3135 = smul.addr %s3134, 8
        %s3136 = scalar_lea.vmem %s6, %s3135
      $region60: #{partial_conv_layer.1} parent=55 // pred_fallthru
        _
      // Predicated region
      $region61: #{partial_conv_layer.1} parent=55 // pred_check
        %p3137 = pneg %p205
      $region62: #{partial_conv_layer.1} parent=55 // pred_check_branch
        %3139 = sbr.rel (%p3137) target = $region64
      $region63: #{partial_conv_layer.1} parent=55 // pred_region
        %p3140 = scmp.lt.s32.totalorder %s20, 1
        %s3141 = scalar_select %p3140, %s20, 1
        %s3142 = smul.addr %s3141, 16
        %s3143 = scalar_lea.vmem %s7, %s3142
      $region64: #{partial_conv_layer.1} parent=55 // pred_fallthru
        _
    $region56: #{partial_conv_layer.1} parent=5 // pred_fallthru
      _
  $region6: #{partial_conv_layer.1} parent=0 // loop_footer
    %s18 = sadd.s32 1, %s14
  $region7: #{partial_conv_layer.1} parent=0 // loop_footer_branch
    %13 = sbr.rel target = $region3
  $region8: #{partial_conv_layer.1} parent=0 // loop_exit
    _

</llo_original>
